<compile_context>
chip_gen: v5e
topology: v5e:2x2
jax: 0.10.0
libtpu: 0.0.40
codegen_flags: <defaults>
</compile_context>

<pallas_src>
import functools
import numpy as np
import jax
import jax.numpy as jnp
from jax import lax
from jax.experimental import pallas as pl
from jax.experimental.pallas import tpu as pltpu

ATTENTION_HEADS = 8
EMBEDDING_DIM = 256
ATTENTION_EMBEDDING_DIM = EMBEDDING_DIM // ATTENTION_HEADS  # 32

DIGITS = 5
SENTENCE_LENGTH = DIGITS + 1 + DIGITS + 1 + DIGITS + 1  # 18


def _mha_kernel(x_ref, w_ref, o_ref, *, batch, seq, heads, head_dim):
    """Single grid step: all batch elements, all heads.

    x_ref : (B*S, E)        bf16 input rows (batch flattened)
    w_ref : (E, 3*H*D)      bf16 fused [Wq.T * 1/sqrt(D) | Wk.T | Wv.T]
    o_ref : (B*S, H*D = E)  f32 lane-dense output rows
    """
    HD = heads * head_dim

    x = x_ref[...]      # (B*S, E)     bf16
    w = w_ref[...]      # (E, 3*H*D)   bf16

    # One lane-dense fused projection on the MXU (f32 accumulate), then a single
    # bf16 cast of the whole slab for the downstream score / PV matmuls.
    qkv = jnp.dot(x, w, preferred_element_type=jnp.float32).astype(jnp.bfloat16)

    # Additive causal mask, built once (diagonal always unmasked -> no NaN risk).
    row = lax.broadcasted_iota(jnp.int32, (seq, seq), 0)
    col = lax.broadcasted_iota(jnp.int32, (seq, seq), 1)
    mask_add = jnp.where(col > row, -jnp.inf, 0.0).astype(jnp.float32)

    for b in range(batch):        # static unroll over batch elements
        rows = slice(b * seq, (b + 1) * seq)
        for h in range(heads):    # static unroll over heads
            qh = qkv[rows, h * head_dim:(h + 1) * head_dim]                    # (S, D)
            kh = qkv[rows, HD + h * head_dim:HD + (h + 1) * head_dim]          # (S, D)
            vh = qkv[rows, 2 * HD + h * head_dim:2 * HD + (h + 1) * head_dim]  # (S, D)

            # q @ k.T — contract last dims directly (no explicit transpose through the
            # XLU); the 1/sqrt(D) scale is already folded into the Wq columns.
            s = lax.dot_general(qh, kh, (((1,), (1,)), ((), ())),
                                preferred_element_type=jnp.float32)            # (S, S) f32
            s = s + mask_add

            m = jnp.max(s, axis=-1, keepdims=True)
            e = jnp.exp(s - m)
            denom = jnp.sum(e, axis=-1, keepdims=True)
            p = e * pl.reciprocal(denom, approx=True)      # denom >= 1, approx is benign

            out_h = jnp.dot(p.astype(jnp.bfloat16), vh,
                            preferred_element_type=jnp.float32)                # (S, D) f32
            # Direct per-head store into the lane slice of the output (no concatenate).
            o_ref[rows, h * head_dim:(h + 1) * head_dim] = out_h.astype(o_ref.dtype)


def prepare_fused_weight(wq, wk, wv):
    """One-time parameter setup.

    torch Linear computes y = x @ W.T; fuse the three projections into a single
    (E, 3*H*D) matrix, fold the 1/sqrt(D) attention scale into the Q columns, and
    store as bf16 so the resident weight DMA is halved and the MXU runs at bf16 rate.
    """
    scale = 1.0 / np.sqrt(float(ATTENTION_EMBEDDING_DIM))
    fused = jnp.concatenate([wq.T * scale, wk.T, wv.T], axis=1)   # (E, 3*H*D) f32
    return fused.astype(jnp.bfloat16)


def multi_head_attention(x, w_fused):
    """x: (B, S, E); w_fused: (E, 3*H*D) bf16. Returns (B, S, E) matching PyTorch forward."""
    B, S, E = x.shape
    H, D = ATTENTION_HEADS, ATTENTION_EMBEDDING_DIM

    # Free (contiguous) reshape + bf16 cast: halves the activation DMA into the kernel.
    x_flat = x.reshape(B * S, E).astype(jnp.bfloat16)

    kernel = functools.partial(_mha_kernel, batch=B, seq=S, heads=H, head_dim=D)

    out = pl.pallas_call(
        kernel,
        out_shape=jax.ShapeDtypeStruct((B * S, E), jnp.float32),
        grid_spec=pltpu.PrefetchScalarGridSpec(
            num_scalar_prefetch=0,
            grid=(1,),   # single step: launch cost + weight DMA paid exactly once
            in_specs=[
                pl.BlockSpec((B * S, E), lambda i: (0, 0)),
                pl.BlockSpec((E, 3 * H * D), lambda i: (0, 0)),
            ],
            out_specs=pl.BlockSpec((B * S, E), lambda i: (0, 0)),
        ),
        compiler_params=pltpu.CompilerParams(
            dimension_semantics=("arbitrary",)),
    )(x_flat, w_fused)

    return out.reshape(B, S, E).astype(x.dtype)


def _reference(x, wq, wk, wv):
    """Pure-JAX f32 reference mirroring the PyTorch forward."""
    B, S, E = x.shape
    H, D = ATTENTION_HEADS, ATTENTION_EMBEDDING_DIM
    q = x @ wq.T
    k = x @ wk.T
    v = x @ wv.T
    q = q.reshape(B, S, H, D).transpose(0, 2, 1, 3)
    k = k.reshape(B, S, H, D).transpose(0, 2, 1, 3)
    v = v.reshape(B, S, H, D).transpose(0, 2, 1, 3)
    scores = jnp.einsum("bhqd,bhkd->bhqk", q, k) / np.sqrt(float(D))
    mask = jnp.triu(jnp.ones((S, S), dtype=bool), 1)
    scores = jnp.where(mask[None, None], -jnp.inf, scores)
    w = jax.nn.softmax(scores, axis=-1)
    out = jnp.einsum("bhqk,bhkd->bhqd", w, v)
    return out.transpose(0, 2, 1, 3).reshape(B, S, H * D)


if __name__ == "__main__":
    key = jax.random.PRNGKey(0)
    kx, kq, kk, kv = jax.random.split(key, 4)

    B = 2
    x = jax.random.normal(kx, (B, SENTENCE_LENGTH, EMBEDDING_DIM), dtype=jnp.float32)

    # Deterministic "Linear" weights (torch layout: (out_features, in_features), no bias).
    init_scale = 1.0 / np.sqrt(EMBEDDING_DIM)
    wq = jax.random.uniform(kq, (EMBEDDING_DIM, EMBEDDING_DIM),
                            minval=-init_scale, maxval=init_scale, dtype=jnp.float32)
    wk = jax.random.uniform(kk, (EMBEDDING_DIM, EMBEDDING_DIM),
                            minval=-init_scale, maxval=init_scale, dtype=jnp.float32)
    wv = jax.random.uniform(kv, (EMBEDDING_DIM, EMBEDDING_DIM),
                            minval=-init_scale, maxval=init_scale, dtype=jnp.float32)

    # One-time setup (hoisted out of the per-call path): fuse, fold scale, cast bf16.
    w_fused = jax.block_until_ready(prepare_fused_weight(wq, wk, wv))

    out = multi_head_attention(x, w_fused)
    out = jax.block_until_ready(out)

    ref = jax.block_until_ready(_reference(x, wq, wk, wv))
    # bf16 MXU operands + approx reciprocal -> loosened tolerance vs the f32 reference.
    np.testing.assert_allclose(np.asarray(out), np.asarray(ref), atol=3e-2, rtol=3e-2)

    print("KERNEL_OK")
</pallas_src>

<mosaic_0001>
module attributes {stable_mosaic.version = 11 : i64} {
  func.func @_mha_kernel(%arg0: i32, %arg1: memref<36x256xbf16, #tpu.memory_space<vmem>>, %arg2: memref<256x768xbf16, #tpu.memory_space<vmem>>, %arg3: memref<36x256xf32, #tpu.memory_space<vmem>>) attributes {dimension_semantics = [#tpu.dimension_semantics<arbitrary>], iteration_bounds = array<i64: 1>, scalar_prefetch = 0 : i64, scratch_operands = 0 : i64, tpu.core_type = #tpu.core_type<tc>, window_params = [{pipeline_mode = #tpu.pipeline_mode<synchronous>, transform_indices = @transform_0, window_bounds = array<i64: 36, 256>}, {pipeline_mode = #tpu.pipeline_mode<synchronous>, transform_indices = @transform_1, window_bounds = array<i64: 256, 768>}, {pipeline_mode = #tpu.pipeline_mode<synchronous>, transform_indices = @transform_2, window_bounds = array<i64: 36, 256>}]} {
    %c0 = arith.constant 0 : index
    %c0_0 = arith.constant 0 : index
    %0 = vector.load %arg1[%c0, %c0_0] : memref<36x256xbf16, #tpu.memory_space<vmem>>, vector<36x256xbf16>
    %c0_1 = arith.constant 0 : index
    %c0_2 = arith.constant 0 : index
    %1 = vector.load %arg2[%c0_1, %c0_2] : memref<256x768xbf16, #tpu.memory_space<vmem>>, vector<256x768xbf16>
    %cst = arith.constant dense<0.000000e+00> : vector<36x768xf32>
    %2 = tpu.matmul %0, %1, %cst {dimension_numbers = #tpu.dot_dimension_numbers<[1], [0], [0], [1], [0, 0, 1, 1], [], []>} : vector<36x256xbf16>, vector<256x768xbf16>, vector<36x768xf32> -> vector<36x768xf32>
    %3 = arith.truncf %2 : vector<36x768xf32> to vector<36x768xbf16>
    %4 = tpu.iota {dimensions = array<i32: 0>} : vector<18x18xi32>
    %5 = tpu.iota {dimensions = array<i32: 1>} : vector<18x18xi32>
    %6 = arith.cmpi sgt, %5, %4 : vector<18x18xi32>
    %cst_3 = arith.constant 0xFF800000 : f32
    %cst_4 = arith.constant 0.000000e+00 : f32
    %7 = vector.broadcast %cst_3 : f32 to vector<18x18xf32>
    %8 = vector.broadcast %cst_4 : f32 to vector<18x18xf32>
    %9 = arith.select %6, %7, %8 : vector<18x18xi1>, vector<18x18xf32>
    %10 = vector.extract_strided_slice %3 {offsets = [0, 0], sizes = [18, 32], strides = [1, 1]} : vector<36x768xbf16> to vector<18x32xbf16>
    %11 = vector.extract_strided_slice %3 {offsets = [0, 256], sizes = [18, 32], strides = [1, 1]} : vector<36x768xbf16> to vector<18x32xbf16>
    %12 = vector.extract_strided_slice %3 {offsets = [0, 512], sizes = [18, 32], strides = [1, 1]} : vector<36x768xbf16> to vector<18x32xbf16>
    %cst_5 = arith.constant dense<0.000000e+00> : vector<18x18xf32>
    %13 = tpu.matmul %10, %11, %cst_5 {dimension_numbers = #tpu.dot_dimension_numbers<[1], [1], [0], [0], [0, 0, 1, 0], [], []>} : vector<18x32xbf16>, vector<18x32xbf16>, vector<18x18xf32> -> vector<18x18xf32>
    %14 = arith.addf %13, %9 : vector<18x18xf32>
    %cst_6 = arith.constant dense<0xFF800000> : vector<18xf32>
    %15 = vector.multi_reduction <maximumf>, %14, %cst_6 [1] : vector<18x18xf32> to vector<18xf32>
    %16 = vector.shape_cast %15 : vector<18xf32> to vector<18x1xf32>
    %17 = vector.broadcast %16 : vector<18x1xf32> to vector<18x18xf32>
    %18 = arith.subf %14, %17 : vector<18x18xf32>
    %19 = math.exp %18 : vector<18x18xf32>
    %cst_7 = arith.constant dense<0.000000e+00> : vector<18xf32>
    %20 = vector.multi_reduction <add>, %19, %cst_7 [1] : vector<18x18xf32> to vector<18xf32>
    %21 = vector.shape_cast %20 : vector<18xf32> to vector<18x1xf32>
    %22 = tpu.reciprocal %21 {approx = true} : vector<18x1xf32> -> vector<18x1xf32>
    %23 = vector.broadcast %22 : vector<18x1xf32> to vector<18x18xf32>
    %24 = arith.mulf %19, %23 : vector<18x18xf32>
    %25 = arith.truncf %24 : vector<18x18xf32> to vector<18x18xbf16>
    %cst_8 = arith.constant dense<0.000000e+00> : vector<18x32xf32>
    %26 = tpu.matmul %25, %12, %cst_8 {dimension_numbers = #tpu.dot_dimension_numbers<[1], [0], [0], [1], [0, 0, 1, 1], [], []>} : vector<18x18xbf16>, vector<18x32xbf16>, vector<18x32xf32> -> vector<18x32xf32>
    %c0_9 = arith.constant 0 : index
    %c0_10 = arith.constant 0 : index
    %27 = vector.load %arg3[%c0_9, %c0_10] : memref<36x256xf32, #tpu.memory_space<vmem>>, vector<18x32xf32>
    tpu.vector_store %arg3[%c0_9, %c0_10], %26 {strides = array<i32>} : memref<36x256xf32, #tpu.memory_space<vmem>>, vector<18x32xf32>,
    %28 = vector.extract_strided_slice %3 {offsets = [0, 32], sizes = [18, 32], strides = [1, 1]} : vector<36x768xbf16> to vector<18x32xbf16>
    %29 = vector.extract_strided_slice %3 {offsets = [0, 288], sizes = [18, 32], strides = [1, 1]} : vector<36x768xbf16> to vector<18x32xbf16>
    %30 = vector.extract_strided_slice %3 {offsets = [0, 544], sizes = [18, 32], strides = [1, 1]} : vector<36x768xbf16> to vector<18x32xbf16>
    %cst_11 = arith.constant dense<0.000000e+00> : vector<18x18xf32>
    %31 = tpu.matmul %28, %29, %cst_11 {dimension_numbers = #tpu.dot_dimension_numbers<[1], [1], [0], [0], [0, 0, 1, 0], [], []>} : vector<18x32xbf16>, vector<18x32xbf16>, vector<18x18xf32> -> vector<18x18xf32>
    %32 = arith.addf %31, %9 : vector<18x18xf32>
    %cst_12 = arith.constant dense<0xFF800000> : vector<18xf32>
    %33 = vector.multi_reduction <maximumf>, %32, %cst_12 [1] : vector<18x18xf32> to vector<18xf32>
    %34 = vector.shape_cast %33 : vector<18xf32> to vector<18x1xf32>
    %35 = vector.broadcast %34 : vector<18x1xf32> to vector<18x18xf32>
    %36 = arith.subf %32, %35 : vector<18x18xf32>
    %37 = math.exp %36 : vector<18x18xf32>
    %cst_13 = arith.constant dense<0.000000e+00> : vector<18xf32>
    %38 = vector.multi_reduction <add>, %37, %cst_13 [1] : vector<18x18xf32> to vector<18xf32>
    %39 = vector.shape_cast %38 : vector<18xf32> to vector<18x1xf32>
    %40 = tpu.reciprocal %39 {approx = true} : vector<18x1xf32> -> vector<18x1xf32>
    %41 = vector.broadcast %40 : vector<18x1xf32> to vector<18x18xf32>
    %42 = arith.mulf %37, %41 : vector<18x18xf32>
    %43 = arith.truncf %42 : vector<18x18xf32> to vector<18x18xbf16>
    %cst_14 = arith.constant dense<0.000000e+00> : vector<18x32xf32>
    %44 = tpu.matmul %43, %30, %cst_14 {dimension_numbers = #tpu.dot_dimension_numbers<[1], [0], [0], [1], [0, 0, 1, 1], [], []>} : vector<18x18xbf16>, vector<18x32xbf16>, vector<18x32xf32> -> vector<18x32xf32>
    %c0_15 = arith.constant 0 : index
    %c32 = arith.constant 32 : index
    %45 = vector.load %arg3[%c0_15, %c32] : memref<36x256xf32, #tpu.memory_space<vmem>>, vector<18x32xf32>
    tpu.vector_store %arg3[%c0_15, %c32], %44 {strides = array<i32>} : memref<36x256xf32, #tpu.memory_space<vmem>>, vector<18x32xf32>,
    %46 = vector.extract_strided_slice %3 {offsets = [0, 64], sizes = [18, 32], strides = [1, 1]} : vector<36x768xbf16> to vector<18x32xbf16>
    %47 = vector.extract_strided_slice %3 {offsets = [0, 320], sizes = [18, 32], strides = [1, 1]} : vector<36x768xbf16> to vector<18x32xbf16>
    %48 = vector.extract_strided_slice %3 {offsets = [0, 576], sizes = [18, 32], strides = [1, 1]} : vector<36x768xbf16> to vector<18x32xbf16>
    %cst_16 = arith.constant dense<0.000000e+00> : vector<18x18xf32>
    %49 = tpu.matmul %46, %47, %cst_16 {dimension_numbers = #tpu.dot_dimension_numbers<[1], [1], [0], [0], [0, 0, 1, 0], [], []>} : vector<18x32xbf16>, vector<18x32xbf16>, vector<18x18xf32> -> vector<18x18xf32>
    %50 = arith.addf %49, %9 : vector<18x18xf32>
    %cst_17 = arith.constant dense<0xFF800000> : vector<18xf32>
    %51 = vector.multi_reduction <maximumf>, %50, %cst_17 [1] : vector<18x18xf32> to vector<18xf32>
    %52 = vector.shape_cast %51 : vector<18xf32> to vector<18x1xf32>
    %53 = vector.broadcast %52 : vector<18x1xf32> to vector<18x18xf32>
    %54 = arith.subf %50, %53 : vector<18x18xf32>
    %55 = math.exp %54 : vector<18x18xf32>
    %cst_18 = arith.constant dense<0.000000e+00> : vector<18xf32>
    %56 = vector.multi_reduction <add>, %55, %cst_18 [1] : vector<18x18xf32> to vector<18xf32>
    %57 = vector.shape_cast %56 : vector<18xf32> to vector<18x1xf32>
    %58 = tpu.reciprocal %57 {approx = true} : vector<18x1xf32> -> vector<18x1xf32>
    %59 = vector.broadcast %58 : vector<18x1xf32> to vector<18x18xf32>
    %60 = arith.mulf %55, %59 : vector<18x18xf32>
    %61 = arith.truncf %60 : vector<18x18xf32> to vector<18x18xbf16>
    %cst_19 = arith.constant dense<0.000000e+00> : vector<18x32xf32>
    %62 = tpu.matmul %61, %48, %cst_19 {dimension_numbers = #tpu.dot_dimension_numbers<[1], [0], [0], [1], [0, 0, 1, 1], [], []>} : vector<18x18xbf16>, vector<18x32xbf16>, vector<18x32xf32> -> vector<18x32xf32>
    %c0_20 = arith.constant 0 : index
    %c64 = arith.constant 64 : index
    %63 = vector.load %arg3[%c0_20, %c64] : memref<36x256xf32, #tpu.memory_space<vmem>>, vector<18x32xf32>
    tpu.vector_store %arg3[%c0_20, %c64], %62 {strides = array<i32>} : memref<36x256xf32, #tpu.memory_space<vmem>>, vector<18x32xf32>,
    %64 = vector.extract_strided_slice %3 {offsets = [0, 96], sizes = [18, 32], strides = [1, 1]} : vector<36x768xbf16> to vector<18x32xbf16>
    %65 = vector.extract_strided_slice %3 {offsets = [0, 352], sizes = [18, 32], strides = [1, 1]} : vector<36x768xbf16> to vector<18x32xbf16>
    %66 = vector.extract_strided_slice %3 {offsets = [0, 608], sizes = [18, 32], strides = [1, 1]} : vector<36x768xbf16> to vector<18x32xbf16>
    %cst_21 = arith.constant dense<0.000000e+00> : vector<18x18xf32>
    %67 = tpu.matmul %64, %65, %cst_21 {dimension_numbers = #tpu.dot_dimension_numbers<[1], [1], [0], [0], [0, 0, 1, 0], [], []>} : vector<18x32xbf16>, vector<18x32xbf16>, vector<18x18xf32> -> vector<18x18xf32>
    %68 = arith.addf %67, %9 : vector<18x18xf32>
    %cst_22 = arith.constant dense<0xFF800000> : vector<18xf32>
    %69 = vector.multi_reduction <maximumf>, %68, %cst_22 [1] : vector<18x18xf32> to vector<18xf32>
    %70 = vector.shape_cast %69 : vector<18xf32> to vector<18x1xf32>
    %71 = vector.broadcast %70 : vector<18x1xf32> to vector<18x18xf32>
    %72 = arith.subf %68, %71 : vector<18x18xf32>
    %73 = math.exp %72 : vector<18x18xf32>
    %cst_23 = arith.constant dense<0.000000e+00> : vector<18xf32>
    %74 = vector.multi_reduction <add>, %73, %cst_23 [1] : vector<18x18xf32> to vector<18xf32>
    %75 = vector.shape_cast %74 : vector<18xf32> to vector<18x1xf32>
    %76 = tpu.reciprocal %75 {approx = true} : vector<18x1xf32> -> vector<18x1xf32>
    %77 = vector.broadcast %76 : vector<18x1xf32> to vector<18x18xf32>
    %78 = arith.mulf %73, %77 : vector<18x18xf32>
    %79 = arith.truncf %78 : vector<18x18xf32> to vector<18x18xbf16>
    %cst_24 = arith.constant dense<0.000000e+00> : vector<18x32xf32>
    %80 = tpu.matmul %79, %66, %cst_24 {dimension_numbers = #tpu.dot_dimension_numbers<[1], [0], [0], [1], [0, 0, 1, 1], [], []>} : vector<18x18xbf16>, vector<18x32xbf16>, vector<18x32xf32> -> vector<18x32xf32>
    %c0_25 = arith.constant 0 : index
    %c96 = arith.constant 96 : index
    %81 = vector.load %arg3[%c0_25, %c96] : memref<36x256xf32, #tpu.memory_space<vmem>>, vector<18x32xf32>
    tpu.vector_store %arg3[%c0_25, %c96], %80 {strides = array<i32>} : memref<36x256xf32, #tpu.memory_space<vmem>>, vector<18x32xf32>,
    %82 = vector.extract_strided_slice %3 {offsets = [0, 128], sizes = [18, 32], strides = [1, 1]} : vector<36x768xbf16> to vector<18x32xbf16>
    %83 = vector.extract_strided_slice %3 {offsets = [0, 384], sizes = [18, 32], strides = [1, 1]} : vector<36x768xbf16> to vector<18x32xbf16>
    %84 = vector.extract_strided_slice %3 {offsets = [0, 640], sizes = [18, 32], strides = [1, 1]} : vector<36x768xbf16> to vector<18x32xbf16>
    %cst_26 = arith.constant dense<0.000000e+00> : vector<18x18xf32>
    %85 = tpu.matmul %82, %83, %cst_26 {dimension_numbers = #tpu.dot_dimension_numbers<[1], [1], [0], [0], [0, 0, 1, 0], [], []>} : vector<18x32xbf16>, vector<18x32xbf16>, vector<18x18xf32> -> vector<18x18xf32>
    %86 = arith.addf %85, %9 : vector<18x18xf32>
    %cst_27 = arith.constant dense<0xFF800000> : vector<18xf32>
    %87 = vector.multi_reduction <maximumf>, %86, %cst_27 [1] : vector<18x18xf32> to vector<18xf32>
    %88 = vector.shape_cast %87 : vector<18xf32> to vector<18x1xf32>
    %89 = vector.broadcast %88 : vector<18x1xf32> to vector<18x18xf32>
    %90 = arith.subf %86, %89 : vector<18x18xf32>
    %91 = math.exp %90 : vector<18x18xf32>
    %cst_28 = arith.constant dense<0.000000e+00> : vector<18xf32>
    %92 = vector.multi_reduction <add>, %91, %cst_28 [1] : vector<18x18xf32> to vector<18xf32>
    %93 = vector.shape_cast %92 : vector<18xf32> to vector<18x1xf32>
    %94 = tpu.reciprocal %93 {approx = true} : vector<18x1xf32> -> vector<18x1xf32>
    %95 = vector.broadcast %94 : vector<18x1xf32> to vector<18x18xf32>
    %96 = arith.mulf %91, %95 : vector<18x18xf32>
    %97 = arith.truncf %96 : vector<18x18xf32> to vector<18x18xbf16>
    %cst_29 = arith.constant dense<0.000000e+00> : vector<18x32xf32>
    %98 = tpu.matmul %97, %84, %cst_29 {dimension_numbers = #tpu.dot_dimension_numbers<[1], [0], [0], [1], [0, 0, 1, 1], [], []>} : vector<18x18xbf16>, vector<18x32xbf16>, vector<18x32xf32> -> vector<18x32xf32>
    %c0_30 = arith.constant 0 : index
    %c128 = arith.constant 128 : index
    %99 = vector.load %arg3[%c0_30, %c128] : memref<36x256xf32, #tpu.memory_space<vmem>>, vector<18x32xf32>
    tpu.vector_store %arg3[%c0_30, %c128], %98 {strides = array<i32>} : memref<36x256xf32, #tpu.memory_space<vmem>>, vector<18x32xf32>,
    %100 = vector.extract_strided_slice %3 {offsets = [0, 160], sizes = [18, 32], strides = [1, 1]} : vector<36x768xbf16> to vector<18x32xbf16>
    %101 = vector.extract_strided_slice %3 {offsets = [0, 416], sizes = [18, 32], strides = [1, 1]} : vector<36x768xbf16> to vector<18x32xbf16>
    %102 = vector.extract_strided_slice %3 {offsets = [0, 672], sizes = [18, 32], strides = [1, 1]} : vector<36x768xbf16> to vector<18x32xbf16>
    %cst_31 = arith.constant dense<0.000000e+00> : vector<18x18xf32>
    %103 = tpu.matmul %100, %101, %cst_31 {dimension_numbers = #tpu.dot_dimension_numbers<[1], [1], [0], [0], [0, 0, 1, 0], [], []>} : vector<18x32xbf16>, vector<18x32xbf16>, vector<18x18xf32> -> vector<18x18xf32>
    %104 = arith.addf %103, %9 : vector<18x18xf32>
    %cst_32 = arith.constant dense<0xFF800000> : vector<18xf32>
    %105 = vector.multi_reduction <maximumf>, %104, %cst_32 [1] : vector<18x18xf32> to vector<18xf32>
    %106 = vector.shape_cast %105 : vector<18xf32> to vector<18x1xf32>
    %107 = vector.broadcast %106 : vector<18x1xf32> to vector<18x18xf32>
    %108 = arith.subf %104, %107 : vector<18x18xf32>
    %109 = math.exp %108 : vector<18x18xf32>
    %cst_33 = arith.constant dense<0.000000e+00> : vector<18xf32>
    %110 = vector.multi_reduction <add>, %109, %cst_33 [1] : vector<18x18xf32> to vector<18xf32>
    %111 = vector.shape_cast %110 : vector<18xf32> to vector<18x1xf32>
    %112 = tpu.reciprocal %111 {approx = true} : vector<18x1xf32> -> vector<18x1xf32>
    %113 = vector.broadcast %112 : vector<18x1xf32> to vector<18x18xf32>
    %114 = arith.mulf %109, %113 : vector<18x18xf32>
    %115 = arith.truncf %114 : vector<18x18xf32> to vector<18x18xbf16>
    %cst_34 = arith.constant dense<0.000000e+00> : vector<18x32xf32>
    %116 = tpu.matmul %115, %102, %cst_34 {dimension_numbers = #tpu.dot_dimension_numbers<[1], [0], [0], [1], [0, 0, 1, 1], [], []>} : vector<18x18xbf16>, vector<18x32xbf16>, vector<18x32xf32> -> vector<18x32xf32>
    %c0_35 = arith.constant 0 : index
    %c160 = arith.constant 160 : index
    %117 = vector.load %arg3[%c0_35, %c160] : memref<36x256xf32, #tpu.memory_space<vmem>>, vector<18x32xf32>
    tpu.vector_store %arg3[%c0_35, %c160], %116 {strides = array<i32>} : memref<36x256xf32, #tpu.memory_space<vmem>>, vector<18x32xf32>,
    %118 = vector.extract_strided_slice %3 {offsets = [0, 192], sizes = [18, 32], strides = [1, 1]} : vector<36x768xbf16> to vector<18x32xbf16>
    %119 = vector.extract_strided_slice %3 {offsets = [0, 448], sizes = [18, 32], strides = [1, 1]} : vector<36x768xbf16> to vector<18x32xbf16>
    %120 = vector.extract_strided_slice %3 {offsets = [0, 704], sizes = [18, 32], strides = [1, 1]} : vector<36x768xbf16> to vector<18x32xbf16>
    %cst_36 = arith.constant dense<0.000000e+00> : vector<18x18xf32>
    %121 = tpu.matmul %118, %119, %cst_36 {dimension_numbers = #tpu.dot_dimension_numbers<[1], [1], [0], [0], [0, 0, 1, 0], [], []>} : vector<18x32xbf16>, vector<18x32xbf16>, vector<18x18xf32> -> vector<18x18xf32>
    %122 = arith.addf %121, %9 : vector<18x18xf32>
    %cst_37 = arith.constant dense<0xFF800000> : vector<18xf32>
    %123 = vector.multi_reduction <maximumf>, %122, %cst_37 [1] : vector<18x18xf32> to vector<18xf32>
    %124 = vector.shape_cast %123 : vector<18xf32> to vector<18x1xf32>
    %125 = vector.broadcast %124 : vector<18x1xf32> to vector<18x18xf32>
    %126 = arith.subf %122, %125 : vector<18x18xf32>
    %127 = math.exp %126 : vector<18x18xf32>
    %cst_38 = arith.constant dense<0.000000e+00> : vector<18xf32>
    %128 = vector.multi_reduction <add>, %127, %cst_38 [1] : vector<18x18xf32> to vector<18xf32>
    %129 = vector.shape_cast %128 : vector<18xf32> to vector<18x1xf32>
    %130 = tpu.reciprocal %129 {approx = true} : vector<18x1xf32> -> vector<18x1xf32>
    %131 = vector.broadcast %130 : vector<18x1xf32> to vector<18x18xf32>
    %132 = arith.mulf %127, %131 : vector<18x18xf32>
    %133 = arith.truncf %132 : vector<18x18xf32> to vector<18x18xbf16>
    %cst_39 = arith.constant dense<0.000000e+00> : vector<18x32xf32>
    %134 = tpu.matmul %133, %120, %cst_39 {dimension_numbers = #tpu.dot_dimension_numbers<[1], [0], [0], [1], [0, 0, 1, 1], [], []>} : vector<18x18xbf16>, vector<18x32xbf16>, vector<18x32xf32> -> vector<18x32xf32>
    %c0_40 = arith.constant 0 : index
    %c192 = arith.constant 192 : index
    %135 = vector.load %arg3[%c0_40, %c192] : memref<36x256xf32, #tpu.memory_space<vmem>>, vector<18x32xf32>
    tpu.vector_store %arg3[%c0_40, %c192], %134 {strides = array<i32>} : memref<36x256xf32, #tpu.memory_space<vmem>>, vector<18x32xf32>,
    %136 = vector.extract_strided_slice %3 {offsets = [0, 224], sizes = [18, 32], strides = [1, 1]} : vector<36x768xbf16> to vector<18x32xbf16>
    %137 = vector.extract_strided_slice %3 {offsets = [0, 480], sizes = [18, 32], strides = [1, 1]} : vector<36x768xbf16> to vector<18x32xbf16>
    %138 = vector.extract_strided_slice %3 {offsets = [0, 736], sizes = [18, 32], strides = [1, 1]} : vector<36x768xbf16> to vector<18x32xbf16>
    %cst_41 = arith.constant dense<0.000000e+00> : vector<18x18xf32>
    %139 = tpu.matmul %136, %137, %cst_41 {dimension_numbers = #tpu.dot_dimension_numbers<[1], [1], [0], [0], [0, 0, 1, 0], [], []>} : vector<18x32xbf16>, vector<18x32xbf16>, vector<18x18xf32> -> vector<18x18xf32>
    %140 = arith.addf %139, %9 : vector<18x18xf32>
    %cst_42 = arith.constant dense<0xFF800000> : vector<18xf32>
    %141 = vector.multi_reduction <maximumf>, %140, %cst_42 [1] : vector<18x18xf32> to vector<18xf32>
    %142 = vector.shape_cast %141 : vector<18xf32> to vector<18x1xf32>
    %143 = vector.broadcast %142 : vector<18x1xf32> to vector<18x18xf32>
    %144 = arith.subf %140, %143 : vector<18x18xf32>
    %145 = math.exp %144 : vector<18x18xf32>
    %cst_43 = arith.constant dense<0.000000e+00> : vector<18xf32>
    %146 = vector.multi_reduction <add>, %145, %cst_43 [1] : vector<18x18xf32> to vector<18xf32>
    %147 = vector.shape_cast %146 : vector<18xf32> to vector<18x1xf32>
    %148 = tpu.reciprocal %147 {approx = true} : vector<18x1xf32> -> vector<18x1xf32>
    %149 = vector.broadcast %148 : vector<18x1xf32> to vector<18x18xf32>
    %150 = arith.mulf %145, %149 : vector<18x18xf32>
    %151 = arith.truncf %150 : vector<18x18xf32> to vector<18x18xbf16>
    %cst_44 = arith.constant dense<0.000000e+00> : vector<18x32xf32>
    %152 = tpu.matmul %151, %138, %cst_44 {dimension_numbers = #tpu.dot_dimension_numbers<[1], [0], [0], [1], [0, 0, 1, 1], [], []>} : vector<18x18xbf16>, vector<18x32xbf16>, vector<18x32xf32> -> vector<18x32xf32>
    %c0_45 = arith.constant 0 : index
    %c224 = arith.constant 224 : index
    %153 = vector.load %arg3[%c0_45, %c224] : memref<36x256xf32, #tpu.memory_space<vmem>>, vector<18x32xf32>
    tpu.vector_store %arg3[%c0_45, %c224], %152 {strides = array<i32>} : memref<36x256xf32, #tpu.memory_space<vmem>>, vector<18x32xf32>,
    %154 = vector.extract_strided_slice %3 {offsets = [18, 0], sizes = [18, 32], strides = [1, 1]} : vector<36x768xbf16> to vector<18x32xbf16>
    %155 = vector.extract_strided_slice %3 {offsets = [18, 256], sizes = [18, 32], strides = [1, 1]} : vector<36x768xbf16> to vector<18x32xbf16>
    %156 = vector.extract_strided_slice %3 {offsets = [18, 512], sizes = [18, 32], strides = [1, 1]} : vector<36x768xbf16> to vector<18x32xbf16>
    %cst_46 = arith.constant dense<0.000000e+00> : vector<18x18xf32>
    %157 = tpu.matmul %154, %155, %cst_46 {dimension_numbers = #tpu.dot_dimension_numbers<[1], [1], [0], [0], [0, 0, 1, 0], [], []>} : vector<18x32xbf16>, vector<18x32xbf16>, vector<18x18xf32> -> vector<18x18xf32>
    %158 = arith.addf %157, %9 : vector<18x18xf32>
    %cst_47 = arith.constant dense<0xFF800000> : vector<18xf32>
    %159 = vector.multi_reduction <maximumf>, %158, %cst_47 [1] : vector<18x18xf32> to vector<18xf32>
    %160 = vector.shape_cast %159 : vector<18xf32> to vector<18x1xf32>
    %161 = vector.broadcast %160 : vector<18x1xf32> to vector<18x18xf32>
    %162 = arith.subf %158, %161 : vector<18x18xf32>
    %163 = math.exp %162 : vector<18x18xf32>
    %cst_48 = arith.constant dense<0.000000e+00> : vector<18xf32>
    %164 = vector.multi_reduction <add>, %163, %cst_48 [1] : vector<18x18xf32> to vector<18xf32>
    %165 = vector.shape_cast %164 : vector<18xf32> to vector<18x1xf32>
    %166 = tpu.reciprocal %165 {approx = true} : vector<18x1xf32> -> vector<18x1xf32>
    %167 = vector.broadcast %166 : vector<18x1xf32> to vector<18x18xf32>
    %168 = arith.mulf %163, %167 : vector<18x18xf32>
    %169 = arith.truncf %168 : vector<18x18xf32> to vector<18x18xbf16>
    %cst_49 = arith.constant dense<0.000000e+00> : vector<18x32xf32>
    %170 = tpu.matmul %169, %156, %cst_49 {dimension_numbers = #tpu.dot_dimension_numbers<[1], [0], [0], [1], [0, 0, 1, 1], [], []>} : vector<18x18xbf16>, vector<18x32xbf16>, vector<18x32xf32> -> vector<18x32xf32>
    %c18 = arith.constant 18 : index
    %c0_50 = arith.constant 0 : index
    %171 = vector.load %arg3[%c18, %c0_50] : memref<36x256xf32, #tpu.memory_space<vmem>>, vector<18x32xf32>
    tpu.vector_store %arg3[%c18, %c0_50], %170 {strides = array<i32>} : memref<36x256xf32, #tpu.memory_space<vmem>>, vector<18x32xf32>,
    %172 = vector.extract_strided_slice %3 {offsets = [18, 32], sizes = [18, 32], strides = [1, 1]} : vector<36x768xbf16> to vector<18x32xbf16>
    %173 = vector.extract_strided_slice %3 {offsets = [18, 288], sizes = [18, 32], strides = [1, 1]} : vector<36x768xbf16> to vector<18x32xbf16>
    %174 = vector.extract_strided_slice %3 {offsets = [18, 544], sizes = [18, 32], strides = [1, 1]} : vector<36x768xbf16> to vector<18x32xbf16>
    %cst_51 = arith.constant dense<0.000000e+00> : vector<18x18xf32>
    %175 = tpu.matmul %172, %173, %cst_51 {dimension_numbers = #tpu.dot_dimension_numbers<[1], [1], [0], [0], [0, 0, 1, 0], [], []>} : vector<18x32xbf16>, vector<18x32xbf16>, vector<18x18xf32> -> vector<18x18xf32>
    %176 = arith.addf %175, %9 : vector<18x18xf32>
    %cst_52 = arith.constant dense<0xFF800000> : vector<18xf32>
    %177 = vector.multi_reduction <maximumf>, %176, %cst_52 [1] : vector<18x18xf32> to vector<18xf32>
    %178 = vector.shape_cast %177 : vector<18xf32> to vector<18x1xf32>
    %179 = vector.broadcast %178 : vector<18x1xf32> to vector<18x18xf32>
    %180 = arith.subf %176, %179 : vector<18x18xf32>
    %181 = math.exp %180 : vector<18x18xf32>
    %cst_53 = arith.constant dense<0.000000e+00> : vector<18xf32>
    %182 = vector.multi_reduction <add>, %181, %cst_53 [1] : vector<18x18xf32> to vector<18xf32>
    %183 = vector.shape_cast %182 : vector<18xf32> to vector<18x1xf32>
    %184 = tpu.reciprocal %183 {approx = true} : vector<18x1xf32> -> vector<18x1xf32>
    %185 = vector.broadcast %184 : vector<18x1xf32> to vector<18x18xf32>
    %186 = arith.mulf %181, %185 : vector<18x18xf32>
    %187 = arith.truncf %186 : vector<18x18xf32> to vector<18x18xbf16>
    %cst_54 = arith.constant dense<0.000000e+00> : vector<18x32xf32>
    %188 = tpu.matmul %187, %174, %cst_54 {dimension_numbers = #tpu.dot_dimension_numbers<[1], [0], [0], [1], [0, 0, 1, 1], [], []>} : vector<18x18xbf16>, vector<18x32xbf16>, vector<18x32xf32> -> vector<18x32xf32>
    %c18_55 = arith.constant 18 : index
    %c32_56 = arith.constant 32 : index
    %189 = vector.load %arg3[%c18_55, %c32_56] : memref<36x256xf32, #tpu.memory_space<vmem>>, vector<18x32xf32>
    tpu.vector_store %arg3[%c18_55, %c32_56], %188 {strides = array<i32>} : memref<36x256xf32, #tpu.memory_space<vmem>>, vector<18x32xf32>,
    %190 = vector.extract_strided_slice %3 {offsets = [18, 64], sizes = [18, 32], strides = [1, 1]} : vector<36x768xbf16> to vector<18x32xbf16>
    %191 = vector.extract_strided_slice %3 {offsets = [18, 320], sizes = [18, 32], strides = [1, 1]} : vector<36x768xbf16> to vector<18x32xbf16>
    %192 = vector.extract_strided_slice %3 {offsets = [18, 576], sizes = [18, 32], strides = [1, 1]} : vector<36x768xbf16> to vector<18x32xbf16>
    %cst_57 = arith.constant dense<0.000000e+00> : vector<18x18xf32>
    %193 = tpu.matmul %190, %191, %cst_57 {dimension_numbers = #tpu.dot_dimension_numbers<[1], [1], [0], [0], [0, 0, 1, 0], [], []>} : vector<18x32xbf16>, vector<18x32xbf16>, vector<18x18xf32> -> vector<18x18xf32>
    %194 = arith.addf %193, %9 : vector<18x18xf32>
    %cst_58 = arith.constant dense<0xFF800000> : vector<18xf32>
    %195 = vector.multi_reduction <maximumf>, %194, %cst_58 [1] : vector<18x18xf32> to vector<18xf32>
    %196 = vector.shape_cast %195 : vector<18xf32> to vector<18x1xf32>
    %197 = vector.broadcast %196 : vector<18x1xf32> to vector<18x18xf32>
    %198 = arith.subf %194, %197 : vector<18x18xf32>
    %199 = math.exp %198 : vector<18x18xf32>
    %cst_59 = arith.constant dense<0.000000e+00> : vector<18xf32>
    %200 = vector.multi_reduction <add>, %199, %cst_59 [1] : vector<18x18xf32> to vector<18xf32>
    %201 = vector.shape_cast %200 : vector<18xf32> to vector<18x1xf32>
    %202 = tpu.reciprocal %201 {approx = true} : vector<18x1xf32> -> vector<18x1xf32>
    %203 = vector.broadcast %202 : vector<18x1xf32> to vector<18x18xf32>
    %204 = arith.mulf %199, %203 : vector<18x18xf32>
    %205 = arith.truncf %204 : vector<18x18xf32> to vector<18x18xbf16>
    %cst_60 = arith.constant dense<0.000000e+00> : vector<18x32xf32>
    %206 = tpu.matmul %205, %192, %cst_60 {dimension_numbers = #tpu.dot_dimension_numbers<[1], [0], [0], [1], [0, 0, 1, 1], [], []>} : vector<18x18xbf16>, vector<18x32xbf16>, vector<18x32xf32> -> vector<18x32xf32>
    %c18_61 = arith.constant 18 : index
    %c64_62 = arith.constant 64 : index
    %207 = vector.load %arg3[%c18_61, %c64_62] : memref<36x256xf32, #tpu.memory_space<vmem>>, vector<18x32xf32>
    tpu.vector_store %arg3[%c18_61, %c64_62], %206 {strides = array<i32>} : memref<36x256xf32, #tpu.memory_space<vmem>>, vector<18x32xf32>,
    %208 = vector.extract_strided_slice %3 {offsets = [18, 96], sizes = [18, 32], strides = [1, 1]} : vector<36x768xbf16> to vector<18x32xbf16>
    %209 = vector.extract_strided_slice %3 {offsets = [18, 352], sizes = [18, 32], strides = [1, 1]} : vector<36x768xbf16> to vector<18x32xbf16>
    %210 = vector.extract_strided_slice %3 {offsets = [18, 608], sizes = [18, 32], strides = [1, 1]} : vector<36x768xbf16> to vector<18x32xbf16>
    %cst_63 = arith.constant dense<0.000000e+00> : vector<18x18xf32>
    %211 = tpu.matmul %208, %209, %cst_63 {dimension_numbers = #tpu.dot_dimension_numbers<[1], [1], [0], [0], [0, 0, 1, 0], [], []>} : vector<18x32xbf16>, vector<18x32xbf16>, vector<18x18xf32> -> vector<18x18xf32>
    %212 = arith.addf %211, %9 : vector<18x18xf32>
    %cst_64 = arith.constant dense<0xFF800000> : vector<18xf32>
    %213 = vector.multi_reduction <maximumf>, %212, %cst_64 [1] : vector<18x18xf32> to vector<18xf32>
    %214 = vector.shape_cast %213 : vector<18xf32> to vector<18x1xf32>
    %215 = vector.broadcast %214 : vector<18x1xf32> to vector<18x18xf32>
    %216 = arith.subf %212, %215 : vector<18x18xf32>
    %217 = math.exp %216 : vector<18x18xf32>
    %cst_65 = arith.constant dense<0.000000e+00> : vector<18xf32>
    %218 = vector.multi_reduction <add>, %217, %cst_65 [1] : vector<18x18xf32> to vector<18xf32>
    %219 = vector.shape_cast %218 : vector<18xf32> to vector<18x1xf32>
    %220 = tpu.reciprocal %219 {approx = true} : vector<18x1xf32> -> vector<18x1xf32>
    %221 = vector.broadcast %220 : vector<18x1xf32> to vector<18x18xf32>
    %222 = arith.mulf %217, %221 : vector<18x18xf32>
    %223 = arith.truncf %222 : vector<18x18xf32> to vector<18x18xbf16>
    %cst_66 = arith.constant dense<0.000000e+00> : vector<18x32xf32>
    %224 = tpu.matmul %223, %210, %cst_66 {dimension_numbers = #tpu.dot_dimension_numbers<[1], [0], [0], [1], [0, 0, 1, 1], [], []>} : vector<18x18xbf16>, vector<18x32xbf16>, vector<18x32xf32> -> vector<18x32xf32>
    %c18_67 = arith.constant 18 : index
    %c96_68 = arith.constant 96 : index
    %225 = vector.load %arg3[%c18_67, %c96_68] : memref<36x256xf32, #tpu.memory_space<vmem>>, vector<18x32xf32>
    tpu.vector_store %arg3[%c18_67, %c96_68], %224 {strides = array<i32>} : memref<36x256xf32, #tpu.memory_space<vmem>>, vector<18x32xf32>,
    %226 = vector.extract_strided_slice %3 {offsets = [18, 128], sizes = [18, 32], strides = [1, 1]} : vector<36x768xbf16> to vector<18x32xbf16>
    %227 = vector.extract_strided_slice %3 {offsets = [18, 384], sizes = [18, 32], strides = [1, 1]} : vector<36x768xbf16> to vector<18x32xbf16>
    %228 = vector.extract_strided_slice %3 {offsets = [18, 640], sizes = [18, 32], strides = [1, 1]} : vector<36x768xbf16> to vector<18x32xbf16>
    %cst_69 = arith.constant dense<0.000000e+00> : vector<18x18xf32>
    %229 = tpu.matmul %226, %227, %cst_69 {dimension_numbers = #tpu.dot_dimension_numbers<[1], [1], [0], [0], [0, 0, 1, 0], [], []>} : vector<18x32xbf16>, vector<18x32xbf16>, vector<18x18xf32> -> vector<18x18xf32>
    %230 = arith.addf %229, %9 : vector<18x18xf32>
    %cst_70 = arith.constant dense<0xFF800000> : vector<18xf32>
    %231 = vector.multi_reduction <maximumf>, %230, %cst_70 [1] : vector<18x18xf32> to vector<18xf32>
    %232 = vector.shape_cast %231 : vector<18xf32> to vector<18x1xf32>
    %233 = vector.broadcast %232 : vector<18x1xf32> to vector<18x18xf32>
    %234 = arith.subf %230, %233 : vector<18x18xf32>
    %235 = math.exp %234 : vector<18x18xf32>
    %cst_71 = arith.constant dense<0.000000e+00> : vector<18xf32>
    %236 = vector.multi_reduction <add>, %235, %cst_71 [1] : vector<18x18xf32> to vector<18xf32>
    %237 = vector.shape_cast %236 : vector<18xf32> to vector<18x1xf32>
    %238 = tpu.reciprocal %237 {approx = true} : vector<18x1xf32> -> vector<18x1xf32>
    %239 = vector.broadcast %238 : vector<18x1xf32> to vector<18x18xf32>
    %240 = arith.mulf %235, %239 : vector<18x18xf32>
    %241 = arith.truncf %240 : vector<18x18xf32> to vector<18x18xbf16>
    %cst_72 = arith.constant dense<0.000000e+00> : vector<18x32xf32>
    %242 = tpu.matmul %241, %228, %cst_72 {dimension_numbers = #tpu.dot_dimension_numbers<[1], [0], [0], [1], [0, 0, 1, 1], [], []>} : vector<18x18xbf16>, vector<18x32xbf16>, vector<18x32xf32> -> vector<18x32xf32>
    %c18_73 = arith.constant 18 : index
    %c128_74 = arith.constant 128 : index
    %243 = vector.load %arg3[%c18_73, %c128_74] : memref<36x256xf32, #tpu.memory_space<vmem>>, vector<18x32xf32>
    tpu.vector_store %arg3[%c18_73, %c128_74], %242 {strides = array<i32>} : memref<36x256xf32, #tpu.memory_space<vmem>>, vector<18x32xf32>,
    %244 = vector.extract_strided_slice %3 {offsets = [18, 160], sizes = [18, 32], strides = [1, 1]} : vector<36x768xbf16> to vector<18x32xbf16>
    %245 = vector.extract_strided_slice %3 {offsets = [18, 416], sizes = [18, 32], strides = [1, 1]} : vector<36x768xbf16> to vector<18x32xbf16>
    %246 = vector.extract_strided_slice %3 {offsets = [18, 672], sizes = [18, 32], strides = [1, 1]} : vector<36x768xbf16> to vector<18x32xbf16>
    %cst_75 = arith.constant dense<0.000000e+00> : vector<18x18xf32>
    %247 = tpu.matmul %244, %245, %cst_75 {dimension_numbers = #tpu.dot_dimension_numbers<[1], [1], [0], [0], [0, 0, 1, 0], [], []>} : vector<18x32xbf16>, vector<18x32xbf16>, vector<18x18xf32> -> vector<18x18xf32>
    %248 = arith.addf %247, %9 : vector<18x18xf32>
    %cst_76 = arith.constant dense<0xFF800000> : vector<18xf32>
    %249 = vector.multi_reduction <maximumf>, %248, %cst_76 [1] : vector<18x18xf32> to vector<18xf32>
    %250 = vector.shape_cast %249 : vector<18xf32> to vector<18x1xf32>
    %251 = vector.broadcast %250 : vector<18x1xf32> to vector<18x18xf32>
    %252 = arith.subf %248, %251 : vector<18x18xf32>
    %253 = math.exp %252 : vector<18x18xf32>
    %cst_77 = arith.constant dense<0.000000e+00> : vector<18xf32>
    %254 = vector.multi_reduction <add>, %253, %cst_77 [1] : vector<18x18xf32> to vector<18xf32>
    %255 = vector.shape_cast %254 : vector<18xf32> to vector<18x1xf32>
    %256 = tpu.reciprocal %255 {approx = true} : vector<18x1xf32> -> vector<18x1xf32>
    %257 = vector.broadcast %256 : vector<18x1xf32> to vector<18x18xf32>
    %258 = arith.mulf %253, %257 : vector<18x18xf32>
    %259 = arith.truncf %258 : vector<18x18xf32> to vector<18x18xbf16>
    %cst_78 = arith.constant dense<0.000000e+00> : vector<18x32xf32>
    %260 = tpu.matmul %259, %246, %cst_78 {dimension_numbers = #tpu.dot_dimension_numbers<[1], [0], [0], [1], [0, 0, 1, 1], [], []>} : vector<18x18xbf16>, vector<18x32xbf16>, vector<18x32xf32> -> vector<18x32xf32>
    %c18_79 = arith.constant 18 : index
    %c160_80 = arith.constant 160 : index
    %261 = vector.load %arg3[%c18_79, %c160_80] : memref<36x256xf32, #tpu.memory_space<vmem>>, vector<18x32xf32>
    tpu.vector_store %arg3[%c18_79, %c160_80], %260 {strides = array<i32>} : memref<36x256xf32, #tpu.memory_space<vmem>>, vector<18x32xf32>,
    %262 = vector.extract_strided_slice %3 {offsets = [18, 192], sizes = [18, 32], strides = [1, 1]} : vector<36x768xbf16> to vector<18x32xbf16>
    %263 = vector.extract_strided_slice %3 {offsets = [18, 448], sizes = [18, 32], strides = [1, 1]} : vector<36x768xbf16> to vector<18x32xbf16>
    %264 = vector.extract_strided_slice %3 {offsets = [18, 704], sizes = [18, 32], strides = [1, 1]} : vector<36x768xbf16> to vector<18x32xbf16>
    %cst_81 = arith.constant dense<0.000000e+00> : vector<18x18xf32>
    %265 = tpu.matmul %262, %263, %cst_81 {dimension_numbers = #tpu.dot_dimension_numbers<[1], [1], [0], [0], [0, 0, 1, 0], [], []>} : vector<18x32xbf16>, vector<18x32xbf16>, vector<18x18xf32> -> vector<18x18xf32>
    %266 = arith.addf %265, %9 : vector<18x18xf32>
    %cst_82 = arith.constant dense<0xFF800000> : vector<18xf32>
    %267 = vector.multi_reduction <maximumf>, %266, %cst_82 [1] : vector<18x18xf32> to vector<18xf32>
    %268 = vector.shape_cast %267 : vector<18xf32> to vector<18x1xf32>
    %269 = vector.broadcast %268 : vector<18x1xf32> to vector<18x18xf32>
    %270 = arith.subf %266, %269 : vector<18x18xf32>
    %271 = math.exp %270 : vector<18x18xf32>
    %cst_83 = arith.constant dense<0.000000e+00> : vector<18xf32>
    %272 = vector.multi_reduction <add>, %271, %cst_83 [1] : vector<18x18xf32> to vector<18xf32>
    %273 = vector.shape_cast %272 : vector<18xf32> to vector<18x1xf32>
    %274 = tpu.reciprocal %273 {approx = true} : vector<18x1xf32> -> vector<18x1xf32>
    %275 = vector.broadcast %274 : vector<18x1xf32> to vector<18x18xf32>
    %276 = arith.mulf %271, %275 : vector<18x18xf32>
    %277 = arith.truncf %276 : vector<18x18xf32> to vector<18x18xbf16>
    %cst_84 = arith.constant dense<0.000000e+00> : vector<18x32xf32>
    %278 = tpu.matmul %277, %264, %cst_84 {dimension_numbers = #tpu.dot_dimension_numbers<[1], [0], [0], [1], [0, 0, 1, 1], [], []>} : vector<18x18xbf16>, vector<18x32xbf16>, vector<18x32xf32> -> vector<18x32xf32>
    %c18_85 = arith.constant 18 : index
    %c192_86 = arith.constant 192 : index
    %279 = vector.load %arg3[%c18_85, %c192_86] : memref<36x256xf32, #tpu.memory_space<vmem>>, vector<18x32xf32>
    tpu.vector_store %arg3[%c18_85, %c192_86], %278 {strides = array<i32>} : memref<36x256xf32, #tpu.memory_space<vmem>>, vector<18x32xf32>,
    %280 = vector.extract_strided_slice %3 {offsets = [18, 224], sizes = [18, 32], strides = [1, 1]} : vector<36x768xbf16> to vector<18x32xbf16>
    %281 = vector.extract_strided_slice %3 {offsets = [18, 480], sizes = [18, 32], strides = [1, 1]} : vector<36x768xbf16> to vector<18x32xbf16>
    %282 = vector.extract_strided_slice %3 {offsets = [18, 736], sizes = [18, 32], strides = [1, 1]} : vector<36x768xbf16> to vector<18x32xbf16>
    %cst_87 = arith.constant dense<0.000000e+00> : vector<18x18xf32>
    %283 = tpu.matmul %280, %281, %cst_87 {dimension_numbers = #tpu.dot_dimension_numbers<[1], [1], [0], [0], [0, 0, 1, 0], [], []>} : vector<18x32xbf16>, vector<18x32xbf16>, vector<18x18xf32> -> vector<18x18xf32>
    %284 = arith.addf %283, %9 : vector<18x18xf32>
    %cst_88 = arith.constant dense<0xFF800000> : vector<18xf32>
    %285 = vector.multi_reduction <maximumf>, %284, %cst_88 [1] : vector<18x18xf32> to vector<18xf32>
    %286 = vector.shape_cast %285 : vector<18xf32> to vector<18x1xf32>
    %287 = vector.broadcast %286 : vector<18x1xf32> to vector<18x18xf32>
    %288 = arith.subf %284, %287 : vector<18x18xf32>
    %289 = math.exp %288 : vector<18x18xf32>
    %cst_89 = arith.constant dense<0.000000e+00> : vector<18xf32>
    %290 = vector.multi_reduction <add>, %289, %cst_89 [1] : vector<18x18xf32> to vector<18xf32>
    %291 = vector.shape_cast %290 : vector<18xf32> to vector<18x1xf32>
    %292 = tpu.reciprocal %291 {approx = true} : vector<18x1xf32> -> vector<18x1xf32>
    %293 = vector.broadcast %292 : vector<18x1xf32> to vector<18x18xf32>
    %294 = arith.mulf %289, %293 : vector<18x18xf32>
    %295 = arith.truncf %294 : vector<18x18xf32> to vector<18x18xbf16>
    %cst_90 = arith.constant dense<0.000000e+00> : vector<18x32xf32>
    %296 = tpu.matmul %295, %282, %cst_90 {dimension_numbers = #tpu.dot_dimension_numbers<[1], [0], [0], [1], [0, 0, 1, 1], [], []>} : vector<18x18xbf16>, vector<18x32xbf16>, vector<18x32xf32> -> vector<18x32xf32>
    %c18_91 = arith.constant 18 : index
    %c224_92 = arith.constant 224 : index
    %297 = vector.load %arg3[%c18_91, %c224_92] : memref<36x256xf32, #tpu.memory_space<vmem>>, vector<18x32xf32>
    tpu.vector_store %arg3[%c18_91, %c224_92], %296 {strides = array<i32>} : memref<36x256xf32, #tpu.memory_space<vmem>>, vector<18x32xf32>,
    return
  }
  func.func @transform_0(%arg0: i32) -> (i32, i32) {
    %c0_i32 = arith.constant 0 : i32
    %c0_i32_0 = arith.constant 0 : i32
    %c0_i32_1 = arith.constant 0 : i32
    return %c0_i32, %c0_i32_0 : i32, i32
  }
  func.func @transform_1(%arg0: i32) -> (i32, i32) {
    %c0_i32 = arith.constant 0 : i32
    %c0_i32_0 = arith.constant 0 : i32
    %c0_i32_1 = arith.constant 0 : i32
    return %c0_i32, %c0_i32_0 : i32, i32
  }
  func.func @transform_2(%arg0: i32) -> (i32, i32) {
    %c0_i32 = arith.constant 0 : i32
    %c0_i32_0 = arith.constant 0 : i32
    %c0_i32_1 = arith.constant 0 : i32
    return %c0_i32, %c0_i32_0 : i32, i32
  }
}

</mosaic_0001>

<llo_original>
// kernel: tpu_custom_call.1
$region0: #{tpu_custom_call.1}
  #allocation0 [shape = 'u32[]', space=smem, size = 0x4, offset = 0x4, fixed_abs, tag = 'smem constant byte address 0x4 - core index']
  #allocation1 [shape = 'u32[72,128]{1,0:T(1,128)}', space=vmem, size = 0x9000, scoped, tag = 'internal scratch']
  %s0 = inlined_call_operand.hbm [shape: bf16[36,256], index: 0, kind: input, shape index: {}]
  %s1 = inlined_call_operand.hbm [shape: bf16[256,768], index: 1, kind: input, shape index: {}]
  %s2 = inlined_call_operand.hbm [shape: f32[36,256], index: 2, kind: output, shape index: {}]
  %s3 = sld [smem:[#allocation0]]
  $region26: #{tpu_custom_call.1} parent=0
    _
  %s5 = ssub.s32 1, %s3
  %s6 = scalar_select 0, %s5, %s3
  $region1: #{tpu_custom_call.1} parent=0
    #allocation2 [shape = 'u8[20480]{0}', space=vmem, size = 0x5000, scoped, tag = 'input window, operand 0, single buffered']
    #allocation3 [shape = 's32[1]{0}', space=sflag, size = 0x4, scoped, tag = 'scoped memory for tpu_custom_call.1']
    #allocation4 [shape = 's32[1]{0}', space=sflag, size = 0x4, scoped, tag = 'scoped memory for tpu_custom_call.1']
    #allocation5 [shape = 'u8[393216]{0}', space=vmem, size = 0x60000, scoped, tag = 'input window, operand 1, single buffered']
    #allocation6 [shape = 's32[1]{0}', space=sflag, size = 0x4, scoped, tag = 'scoped memory for tpu_custom_call.1']
    #allocation7 [shape = 'u8[40960]{0}', space=vmem, size = 0xa000, scoped, tag = 'output window, operand 0, single buffered']
    %7 = vsyncpa [#allocation3], 0
    %8 = vsyncpa [#allocation6], 0
    %9 = vsyncpa [#allocation4], 0
    // Predicated region
    $region2: #{tpu_custom_call.1} parent=1 // pred_check
      _
    $region3: #{tpu_custom_call.1} parent=1 // pred_check_branch
      %11 = sbr.rel (0) target = $region5
    $region4: #{tpu_custom_call.1} parent=1 // pred_region
      %13 = vsyncadd [#allocation3], 0
      %s14 = sshll.u32 %s0, 4
      %s15 = int_to_ptr.hbm [resolvable:$true] %s14
      %s16 = sshll.u32 [#allocation2], 4
      %s17 = int_to_ptr.vmem [resolvable:$true] %s16
      %22 = dma.hbm_to_vmem [thread:$0]  %s15, 640, %s17, [#allocation3], 128, 128, 8
    $region5: #{tpu_custom_call.1} parent=1 // pred_fallthru
      _
    // Predicated region
    $region6: #{tpu_custom_call.1} parent=1 // pred_check
      _
    $region7: #{tpu_custom_call.1} parent=1 // pred_check_branch
      %24 = sbr.rel (0) target = $region9
    $region8: #{tpu_custom_call.1} parent=1 // pred_region
      %26 = vsyncadd [#allocation6], 0
      %s27 = sshll.u32 %s1, 4
      %s28 = int_to_ptr.hbm [resolvable:$true] %s27
      %s29 = sshll.u32 [#allocation5], 4
      %s30 = int_to_ptr.vmem [resolvable:$true] %s29
      %35 = dma.hbm_to_vmem [thread:$0]  %s28, 12288, %s30, [#allocation6], 384, 384, 24
    $region9: #{tpu_custom_call.1} parent=1 // pred_fallthru
      _
    // Predicated region
    $region10: #{tpu_custom_call.1} parent=1 // pred_check
      _
    $region11: #{tpu_custom_call.1} parent=1 // pred_check_branch
      %37 = sbr.rel (0) target = $region13
    $region12: #{tpu_custom_call.1} parent=1 // pred_region
      %39 = dma.done [#allocation3], 640
    $region13: #{tpu_custom_call.1} parent=1 // pred_fallthru
      _
    // Predicated region
    $region14: #{tpu_custom_call.1} parent=1 // pred_check
      _
    $region15: #{tpu_custom_call.1} parent=1 // pred_check_branch
      %41 = sbr.rel (0) target = $region17
    $region16: #{tpu_custom_call.1} parent=1 // pred_region
      %43 = dma.done [#allocation6], 12288
    $region17: #{tpu_custom_call.1} parent=1 // pred_fallthru
      _
    %v45 = vld [vmem:[#allocation2] sm:$0xff]
    %v46 = vld [vmem:[#allocation2 + $0x8] sm:$0xff]
    %v47 = vld [vmem:[#allocation2 + $0x10] sm:$0xff]
    %v48 = vld [vmem:[#allocation2 + $0x18] sm:$0xff]
    %v49 = vld [vmem:[#allocation2 + $0x20] sm:$0x33]
    %v50 = vld [vmem:[#allocation5] sm:$0xff]
    %v51 = vld [vmem:[#allocation5 + $0x8] sm:$0xff]
    %v52 = vld [vmem:[#allocation5 + $0x10] sm:$0xff]
    %v53 = vld [vmem:[#allocation5 + $0x18] sm:$0xff]
    %v54 = vld [vmem:[#allocation5 + $0x20] sm:$0xff]
    %v55 = vld [vmem:[#allocation5 + $0x28] sm:$0xff]
    %v56 = vld [vmem:[#allocation5 + $0x30] sm:$0xff]
    %v57 = vld [vmem:[#allocation5 + $0x38] sm:$0xff]
    %v58 = vld [vmem:[#allocation5 + $0x40] sm:$0xff]
    %v59 = vld [vmem:[#allocation5 + $0x48] sm:$0xff]
    %v60 = vld [vmem:[#allocation5 + $0x50] sm:$0xff]
    %v61 = vld [vmem:[#allocation5 + $0x58] sm:$0xff]
    %v62 = vld [vmem:[#allocation5 + $0x60] sm:$0xff]
    %v63 = vld [vmem:[#allocation5 + $0x68] sm:$0xff]
    %v64 = vld [vmem:[#allocation5 + $0x70] sm:$0xff]
    %v65 = vld [vmem:[#allocation5 + $0x78] sm:$0xff]
    %v66 = vld [vmem:[#allocation5 + $0x80] sm:$0xff]
    %v67 = vld [vmem:[#allocation5 + $0x88] sm:$0xff]
    %v68 = vld [vmem:[#allocation5 + $0x90] sm:$0xff]
    %v69 = vld [vmem:[#allocation5 + $0x98] sm:$0xff]
    %v70 = vld [vmem:[#allocation5 + $0xa0] sm:$0xff]
    %v71 = vld [vmem:[#allocation5 + $0xa8] sm:$0xff]
    %v72 = vld [vmem:[#allocation5 + $0xb0] sm:$0xff]
    %v73 = vld [vmem:[#allocation5 + $0xb8] sm:$0xff]
    %v74 = vld [vmem:[#allocation5 + $0xc0] sm:$0xff]
    %v75 = vld [vmem:[#allocation5 + $0xc8] sm:$0xff]
    %v76 = vld [vmem:[#allocation5 + $0xd0] sm:$0xff]
    %v77 = vld [vmem:[#allocation5 + $0xd8] sm:$0xff]
    %v78 = vld [vmem:[#allocation5 + $0xe0] sm:$0xff]
    %v79 = vld [vmem:[#allocation5 + $0xe8] sm:$0xff]
    %v80 = vld [vmem:[#allocation5 + $0xf0] sm:$0xff]
    %v81 = vld [vmem:[#allocation5 + $0xf8] sm:$0xff]
    %v82 = vld [vmem:[#allocation5 + $0x100] sm:$0xff]
    %v83 = vld [vmem:[#allocation5 + $0x108] sm:$0xff]
    %v84 = vld [vmem:[#allocation5 + $0x110] sm:$0xff]
    %v85 = vld [vmem:[#allocation5 + $0x118] sm:$0xff]
    %v86 = vld [vmem:[#allocation5 + $0x120] sm:$0xff]
    %v87 = vld [vmem:[#allocation5 + $0x128] sm:$0xff]
    %v88 = vld [vmem:[#allocation5 + $0x130] sm:$0xff]
    %v89 = vld [vmem:[#allocation5 + $0x138] sm:$0xff]
    %v90 = vld [vmem:[#allocation5 + $0x140] sm:$0xff]
    %v91 = vld [vmem:[#allocation5 + $0x148] sm:$0xff]
    %v92 = vld [vmem:[#allocation5 + $0x150] sm:$0xff]
    %v93 = vld [vmem:[#allocation5 + $0x158] sm:$0xff]
    %v94 = vld [vmem:[#allocation5 + $0x160] sm:$0xff]
    %v95 = vld [vmem:[#allocation5 + $0x168] sm:$0xff]
    %v96 = vld [vmem:[#allocation5 + $0x170] sm:$0xff]
    %v97 = vld [vmem:[#allocation5 + $0x178] sm:$0xff]
    %v98 = vld [vmem:[#allocation5 + $0x180] sm:$0xff]
    %v99 = vld [vmem:[#allocation5 + $0x188] sm:$0xff]
    %v100 = vld [vmem:[#allocation5 + $0x190] sm:$0xff]
    %v101 = vld [vmem:[#allocation5 + $0x198] sm:$0xff]
    %v102 = vld [vmem:[#allocation5 + $0x1a0] sm:$0xff]
    %v103 = vld [vmem:[#allocation5 + $0x1a8] sm:$0xff]
    %v104 = vld [vmem:[#allocation5 + $0x1b0] sm:$0xff]
    %v105 = vld [vmem:[#allocation5 + $0x1b8] sm:$0xff]
    %v106 = vld [vmem:[#allocation5 + $0x1c0] sm:$0xff]
    %v107 = vld [vmem:[#allocation5 + $0x1c8] sm:$0xff]
    %v108 = vld [vmem:[#allocation5 + $0x1d0] sm:$0xff]
    %v109 = vld [vmem:[#allocation5 + $0x1d8] sm:$0xff]
    %v110 = vld [vmem:[#allocation5 + $0x1e0] sm:$0xff]
    %v111 = vld [vmem:[#allocation5 + $0x1e8] sm:$0xff]
    %v112 = vld [vmem:[#allocation5 + $0x1f0] sm:$0xff]
    %v113 = vld [vmem:[#allocation5 + $0x1f8] sm:$0xff]
    %v114 = vld [vmem:[#allocation5 + $0x200] sm:$0xff]
    %v115 = vld [vmem:[#allocation5 + $0x208] sm:$0xff]
    %v116 = vld [vmem:[#allocation5 + $0x210] sm:$0xff]
    %v117 = vld [vmem:[#allocation5 + $0x218] sm:$0xff]
    %v118 = vld [vmem:[#allocation5 + $0x220] sm:$0xff]
    %v119 = vld [vmem:[#allocation5 + $0x228] sm:$0xff]
    %v120 = vld [vmem:[#allocation5 + $0x230] sm:$0xff]
    %v121 = vld [vmem:[#allocation5 + $0x238] sm:$0xff]
    %v122 = vld [vmem:[#allocation5 + $0x240] sm:$0xff]
    %v123 = vld [vmem:[#allocation5 + $0x248] sm:$0xff]
    %v124 = vld [vmem:[#allocation5 + $0x250] sm:$0xff]
    %v125 = vld [vmem:[#allocation5 + $0x258] sm:$0xff]
    %v126 = vld [vmem:[#allocation5 + $0x260] sm:$0xff]
    %v127 = vld [vmem:[#allocation5 + $0x268] sm:$0xff]
    %v128 = vld [vmem:[#allocation5 + $0x270] sm:$0xff]
    %v129 = vld [vmem:[#allocation5 + $0x278] sm:$0xff]
    %v130 = vld [vmem:[#allocation5 + $0x280] sm:$0xff]
    %v131 = vld [vmem:[#allocation5 + $0x288] sm:$0xff]
    %v132 = vld [vmem:[#allocation5 + $0x290] sm:$0xff]
    %v133 = vld [vmem:[#allocation5 + $0x298] sm:$0xff]
    %v134 = vld [vmem:[#allocation5 + $0x2a0] sm:$0xff]
    %v135 = vld [vmem:[#allocation5 + $0x2a8] sm:$0xff]
    %v136 = vld [vmem:[#allocation5 + $0x2b0] sm:$0xff]
    %v137 = vld [vmem:[#allocation5 + $0x2b8] sm:$0xff]
    %v138 = vld [vmem:[#allocation5 + $0x2c0] sm:$0xff]
    %v139 = vld [vmem:[#allocation5 + $0x2c8] sm:$0xff]
    %v140 = vld [vmem:[#allocation5 + $0x2d0] sm:$0xff]
    %v141 = vld [vmem:[#allocation5 + $0x2d8] sm:$0xff]
    %v142 = vld [vmem:[#allocation5 + $0x2e0] sm:$0xff]
    %v143 = vld [vmem:[#allocation5 + $0x2e8] sm:$0xff]
    %v144 = vld [vmem:[#allocation5 + $0x2f0] sm:$0xff]
    %v145 = vld [vmem:[#allocation5 + $0x2f8] sm:$0xff]
    %v151 = vunpack.c.l.b16 %v45
    %v152 = vunpack.c.h.b16 %v45
    %v153 = vunpack.c.l.b16 %v46
    %v154 = vunpack.c.h.b16 %v46
    %v155 = vunpack.c.l.b16 %v47
    %v156 = vunpack.c.h.b16 %v47
    %v157 = vunpack.c.l.b16 %v48
    %v158 = vunpack.c.h.b16 %v48
    %v159 = vunpack.c.l.b16 %v49
    %v160 = vunpack.c.h.b16 %v49
    %v161 = vpack.c.b16 %v153, %v151
    %v162 = vpack.c.b16 %v154, %v152
    %v163 = vpack.c.b16 %v157, %v155
    %v164 = vpack.c.b16 %v158, %v156
    %v165 = vpack.c.b16 %v159, %v159
    %v166 = vpack.c.b16 %v160, %v160
    %v269 = vunpack.c.l.b16 %v50
    %v270 = vunpack.c.h.b16 %v50
    %v271 = vunpack.c.l.b16 %v51
    %v272 = vunpack.c.h.b16 %v51
    %v273 = vunpack.c.l.b16 %v52
    %v274 = vunpack.c.h.b16 %v52
    %v275 = vunpack.c.l.b16 %v53
    %v276 = vunpack.c.h.b16 %v53
    %v277 = vunpack.c.l.b16 %v54
    %v278 = vunpack.c.h.b16 %v54
    %v279 = vunpack.c.l.b16 %v55
    %v280 = vunpack.c.h.b16 %v55
    %v281 = vunpack.c.l.b16 %v56
    %v282 = vunpack.c.h.b16 %v56
    %v283 = vunpack.c.l.b16 %v57
    %v284 = vunpack.c.h.b16 %v57
    %v285 = vunpack.c.l.b16 %v58
    %v286 = vunpack.c.h.b16 %v58
    %v287 = vunpack.c.l.b16 %v59
    %v288 = vunpack.c.h.b16 %v59
    %v289 = vunpack.c.l.b16 %v60
    %v290 = vunpack.c.h.b16 %v60
    %v291 = vunpack.c.l.b16 %v61
    %v292 = vunpack.c.h.b16 %v61
    %v293 = vunpack.c.l.b16 %v62
    %v294 = vunpack.c.h.b16 %v62
    %v295 = vunpack.c.l.b16 %v63
    %v296 = vunpack.c.h.b16 %v63
    %v297 = vunpack.c.l.b16 %v64
    %v298 = vunpack.c.h.b16 %v64
    %v299 = vunpack.c.l.b16 %v65
    %v300 = vunpack.c.h.b16 %v65
    %v301 = vunpack.c.l.b16 %v66
    %v302 = vunpack.c.h.b16 %v66
    %v303 = vunpack.c.l.b16 %v67
    %v304 = vunpack.c.h.b16 %v67
    %v305 = vunpack.c.l.b16 %v68
    %v306 = vunpack.c.h.b16 %v68
    %v307 = vunpack.c.l.b16 %v69
    %v308 = vunpack.c.h.b16 %v69
    %v309 = vunpack.c.l.b16 %v70
    %v310 = vunpack.c.h.b16 %v70
    %v311 = vunpack.c.l.b16 %v71
    %v312 = vunpack.c.h.b16 %v71
    %v313 = vunpack.c.l.b16 %v72
    %v314 = vunpack.c.h.b16 %v72
    %v315 = vunpack.c.l.b16 %v73
    %v316 = vunpack.c.h.b16 %v73
    %v317 = vunpack.c.l.b16 %v74
    %v318 = vunpack.c.h.b16 %v74
    %v319 = vunpack.c.l.b16 %v75
    %v320 = vunpack.c.h.b16 %v75
    %v321 = vunpack.c.l.b16 %v76
    %v322 = vunpack.c.h.b16 %v76
    %v323 = vunpack.c.l.b16 %v77
    %v324 = vunpack.c.h.b16 %v77
    %v325 = vunpack.c.l.b16 %v78
    %v326 = vunpack.c.h.b16 %v78
    %v327 = vunpack.c.l.b16 %v79
    %v328 = vunpack.c.h.b16 %v79
    %v329 = vunpack.c.l.b16 %v80
    %v330 = vunpack.c.h.b16 %v80
    %v331 = vunpack.c.l.b16 %v81
    %v332 = vunpack.c.h.b16 %v81
    %v333 = vunpack.c.l.b16 %v82
    %v334 = vunpack.c.h.b16 %v82
    %v335 = vunpack.c.l.b16 %v83
    %v336 = vunpack.c.h.b16 %v83
    %v337 = vunpack.c.l.b16 %v84
    %v338 = vunpack.c.h.b16 %v84
    %v339 = vunpack.c.l.b16 %v85
    %v340 = vunpack.c.h.b16 %v85
    %v341 = vunpack.c.l.b16 %v86
    %v342 = vunpack.c.h.b16 %v86
    %v343 = vunpack.c.l.b16 %v87
    %v344 = vunpack.c.h.b16 %v87
    %v345 = vunpack.c.l.b16 %v88
    %v346 = vunpack.c.h.b16 %v88
    %v347 = vunpack.c.l.b16 %v89
    %v348 = vunpack.c.h.b16 %v89
    %v349 = vunpack.c.l.b16 %v90
    %v350 = vunpack.c.h.b16 %v90
    %v351 = vunpack.c.l.b16 %v91
    %v352 = vunpack.c.h.b16 %v91
    %v353 = vunpack.c.l.b16 %v92
    %v354 = vunpack.c.h.b16 %v92
    %v355 = vunpack.c.l.b16 %v93
    %v356 = vunpack.c.h.b16 %v93
    %v357 = vunpack.c.l.b16 %v94
    %v358 = vunpack.c.h.b16 %v94
    %v359 = vunpack.c.l.b16 %v95
    %v360 = vunpack.c.h.b16 %v95
    %v361 = vunpack.c.l.b16 %v96
    %v362 = vunpack.c.h.b16 %v96
    %v363 = vunpack.c.l.b16 %v97
    %v364 = vunpack.c.h.b16 %v97
    %v365 = vunpack.c.l.b16 %v98
    %v366 = vunpack.c.h.b16 %v98
    %v367 = vunpack.c.l.b16 %v99
    %v368 = vunpack.c.h.b16 %v99
    %v369 = vunpack.c.l.b16 %v100
    %v370 = vunpack.c.h.b16 %v100
    %v371 = vunpack.c.l.b16 %v101
    %v372 = vunpack.c.h.b16 %v101
    %v373 = vunpack.c.l.b16 %v102
    %v374 = vunpack.c.h.b16 %v102
    %v375 = vunpack.c.l.b16 %v103
    %v376 = vunpack.c.h.b16 %v103
    %v377 = vunpack.c.l.b16 %v104
    %v378 = vunpack.c.h.b16 %v104
    %v379 = vunpack.c.l.b16 %v105
    %v380 = vunpack.c.h.b16 %v105
    %v381 = vunpack.c.l.b16 %v106
    %v382 = vunpack.c.h.b16 %v106
    %v383 = vunpack.c.l.b16 %v107
    %v384 = vunpack.c.h.b16 %v107
    %v385 = vunpack.c.l.b16 %v108
    %v386 = vunpack.c.h.b16 %v108
    %v387 = vunpack.c.l.b16 %v109
    %v388 = vunpack.c.h.b16 %v109
    %v389 = vunpack.c.l.b16 %v110
    %v390 = vunpack.c.h.b16 %v110
    %v391 = vunpack.c.l.b16 %v111
    %v392 = vunpack.c.h.b16 %v111
    %v393 = vunpack.c.l.b16 %v112
    %v394 = vunpack.c.h.b16 %v112
    %v395 = vunpack.c.l.b16 %v113
    %v396 = vunpack.c.h.b16 %v113
    %v397 = vunpack.c.l.b16 %v114
    %v398 = vunpack.c.h.b16 %v114
    %v399 = vunpack.c.l.b16 %v115
    %v400 = vunpack.c.h.b16 %v115
    %v401 = vunpack.c.l.b16 %v116
    %v402 = vunpack.c.h.b16 %v116
    %v403 = vunpack.c.l.b16 %v117
    %v404 = vunpack.c.h.b16 %v117
    %v405 = vunpack.c.l.b16 %v118
    %v406 = vunpack.c.h.b16 %v118
    %v407 = vunpack.c.l.b16 %v119
    %v408 = vunpack.c.h.b16 %v119
    %v409 = vunpack.c.l.b16 %v120
    %v410 = vunpack.c.h.b16 %v120
    %v411 = vunpack.c.l.b16 %v121
    %v412 = vunpack.c.h.b16 %v121
    %v413 = vunpack.c.l.b16 %v122
    %v414 = vunpack.c.h.b16 %v122
    %v415 = vunpack.c.l.b16 %v123
    %v416 = vunpack.c.h.b16 %v123
    %v417 = vunpack.c.l.b16 %v124
    %v418 = vunpack.c.h.b16 %v124
    %v419 = vunpack.c.l.b16 %v125
    %v420 = vunpack.c.h.b16 %v125
    %v421 = vunpack.c.l.b16 %v126
    %v422 = vunpack.c.h.b16 %v126
    %v423 = vunpack.c.l.b16 %v127
    %v424 = vunpack.c.h.b16 %v127
    %v425 = vunpack.c.l.b16 %v128
    %v426 = vunpack.c.h.b16 %v128
    %v427 = vunpack.c.l.b16 %v129
    %v428 = vunpack.c.h.b16 %v129
    %v429 = vunpack.c.l.b16 %v130
    %v430 = vunpack.c.h.b16 %v130
    %v431 = vunpack.c.l.b16 %v131
    %v432 = vunpack.c.h.b16 %v131
    %v433 = vunpack.c.l.b16 %v132
    %v434 = vunpack.c.h.b16 %v132
    %v435 = vunpack.c.l.b16 %v133
    %v436 = vunpack.c.h.b16 %v133
    %v437 = vunpack.c.l.b16 %v134
    %v438 = vunpack.c.h.b16 %v134
    %v439 = vunpack.c.l.b16 %v135
    %v440 = vunpack.c.h.b16 %v135
    %v441 = vunpack.c.l.b16 %v136
    %v442 = vunpack.c.h.b16 %v136
    %v443 = vunpack.c.l.b16 %v137
    %v444 = vunpack.c.h.b16 %v137
    %v445 = vunpack.c.l.b16 %v138
    %v446 = vunpack.c.h.b16 %v138
    %v447 = vunpack.c.l.b16 %v139
    %v448 = vunpack.c.h.b16 %v139
    %v449 = vunpack.c.l.b16 %v140
    %v450 = vunpack.c.h.b16 %v140
    %v451 = vunpack.c.l.b16 %v141
    %v452 = vunpack.c.h.b16 %v141
    %v453 = vunpack.c.l.b16 %v142
    %v454 = vunpack.c.h.b16 %v142
    %v455 = vunpack.c.l.b16 %v143
    %v456 = vunpack.c.h.b16 %v143
    %v457 = vunpack.c.l.b16 %v144
    %v458 = vunpack.c.h.b16 %v144
    %v459 = vunpack.c.l.b16 %v145
    %v460 = vunpack.c.h.b16 %v145
    %v461 = vpack.c.b16 %v275, %v269
    %v462 = vpack.c.b16 %v276, %v270
    %v463 = vpack.c.b16 %v277, %v271
    %v464 = vpack.c.b16 %v278, %v272
    %v465 = vpack.c.b16 %v279, %v273
    %v466 = vpack.c.b16 %v280, %v274
    %v467 = vpack.c.b16 %v287, %v281
    %v468 = vpack.c.b16 %v288, %v282
    %v469 = vpack.c.b16 %v289, %v283
    %v470 = vpack.c.b16 %v290, %v284
    %v471 = vpack.c.b16 %v291, %v285
    %v472 = vpack.c.b16 %v292, %v286
    %v473 = vpack.c.b16 %v299, %v293
    %v474 = vpack.c.b16 %v300, %v294
    %v475 = vpack.c.b16 %v301, %v295
    %v476 = vpack.c.b16 %v302, %v296
    %v477 = vpack.c.b16 %v303, %v297
    %v478 = vpack.c.b16 %v304, %v298
    %v479 = vpack.c.b16 %v311, %v305
    %v480 = vpack.c.b16 %v312, %v306
    %v481 = vpack.c.b16 %v313, %v307
    %v482 = vpack.c.b16 %v314, %v308
    %v483 = vpack.c.b16 %v315, %v309
    %v484 = vpack.c.b16 %v316, %v310
    %v485 = vpack.c.b16 %v323, %v317
    %v486 = vpack.c.b16 %v324, %v318
    %v487 = vpack.c.b16 %v325, %v319
    %v488 = vpack.c.b16 %v326, %v320
    %v489 = vpack.c.b16 %v327, %v321
    %v490 = vpack.c.b16 %v328, %v322
    %v491 = vpack.c.b16 %v335, %v329
    %v492 = vpack.c.b16 %v336, %v330
    %v493 = vpack.c.b16 %v337, %v331
    %v494 = vpack.c.b16 %v338, %v332
    %v495 = vpack.c.b16 %v339, %v333
    %v496 = vpack.c.b16 %v340, %v334
    %v497 = vpack.c.b16 %v347, %v341
    %v498 = vpack.c.b16 %v348, %v342
    %v499 = vpack.c.b16 %v349, %v343
    %v500 = vpack.c.b16 %v350, %v344
    %v501 = vpack.c.b16 %v351, %v345
    %v502 = vpack.c.b16 %v352, %v346
    %v503 = vpack.c.b16 %v359, %v353
    %v504 = vpack.c.b16 %v360, %v354
    %v505 = vpack.c.b16 %v361, %v355
    %v506 = vpack.c.b16 %v362, %v356
    %v507 = vpack.c.b16 %v363, %v357
    %v508 = vpack.c.b16 %v364, %v358
    %v509 = vpack.c.b16 %v371, %v365
    %v510 = vpack.c.b16 %v372, %v366
    %v511 = vpack.c.b16 %v373, %v367
    %v512 = vpack.c.b16 %v374, %v368
    %v513 = vpack.c.b16 %v375, %v369
    %v514 = vpack.c.b16 %v376, %v370
    %v515 = vpack.c.b16 %v383, %v377
    %v516 = vpack.c.b16 %v384, %v378
    %v517 = vpack.c.b16 %v385, %v379
    %v518 = vpack.c.b16 %v386, %v380
    %v519 = vpack.c.b16 %v387, %v381
    %v520 = vpack.c.b16 %v388, %v382
    %v521 = vpack.c.b16 %v395, %v389
    %v522 = vpack.c.b16 %v396, %v390
    %v523 = vpack.c.b16 %v397, %v391
    %v524 = vpack.c.b16 %v398, %v392
    %v525 = vpack.c.b16 %v399, %v393
    %v526 = vpack.c.b16 %v400, %v394
    %v527 = vpack.c.b16 %v407, %v401
    %v528 = vpack.c.b16 %v408, %v402
    %v529 = vpack.c.b16 %v409, %v403
    %v530 = vpack.c.b16 %v410, %v404
    %v531 = vpack.c.b16 %v411, %v405
    %v532 = vpack.c.b16 %v412, %v406
    %v533 = vpack.c.b16 %v419, %v413
    %v534 = vpack.c.b16 %v420, %v414
    %v535 = vpack.c.b16 %v421, %v415
    %v536 = vpack.c.b16 %v422, %v416
    %v537 = vpack.c.b16 %v423, %v417
    %v538 = vpack.c.b16 %v424, %v418
    %v539 = vpack.c.b16 %v431, %v425
    %v540 = vpack.c.b16 %v432, %v426
    %v541 = vpack.c.b16 %v433, %v427
    %v542 = vpack.c.b16 %v434, %v428
    %v543 = vpack.c.b16 %v435, %v429
    %v544 = vpack.c.b16 %v436, %v430
    %v545 = vpack.c.b16 %v443, %v437
    %v546 = vpack.c.b16 %v444, %v438
    %v547 = vpack.c.b16 %v445, %v439
    %v548 = vpack.c.b16 %v446, %v440
    %v549 = vpack.c.b16 %v447, %v441
    %v550 = vpack.c.b16 %v448, %v442
    %v551 = vpack.c.b16 %v455, %v449
    %v552 = vpack.c.b16 %v456, %v450
    %v553 = vpack.c.b16 %v457, %v451
    %v554 = vpack.c.b16 %v458, %v452
    %v555 = vpack.c.b16 %v459, %v453
    %v556 = vpack.c.b16 %v460, %v454
    %653 = vmatpush.bf16.msra.mxu0 %v503
    %654 = vmatpush.bf16.msra.mxu0 %v497
    %655 = vmatpush.bf16.msra.mxu0 %v491
    %656 = vmatpush.bf16.msra.mxu0 %v485
    %657 = vmatpush.bf16.msra.mxu0 %v479
    %658 = vmatpush.bf16.msra.mxu0 %v473
    %659 = vmatpush.bf16.msra.mxu0 %v467
    %660 = vmatpush.bf16.msra.mxu0 %v461
    %661 = vmatmul.bf16.gmra.mxu0 %v161
    %v662 = vpop.f32.mrf.mxu0
    %v663 = vadd.f32 0.0, %v662
    %v664 = vpop.f32.mrf.mxu0
    %v665 = vadd.f32 0.0, %v664
    %666 = vmatmul.bf16.gmra.mxu0 %v163
    %v667 = vpop.f32.mrf.mxu0
    %v668 = vadd.f32 0.0, %v667
    %v669 = vpop.f32.mrf.mxu0
    %v670 = vadd.f32 0.0, %v669
    %671 = vmatmul.bf16.gmra.mxu0 %v165
    %v672 = vpop.f32.mrf.mxu0
    %v673 = vadd.f32 0.0, %v672
    %v674 = vpop.f32.mrf.mxu0
    %675 = vdwg.mxu0
    %676 = vmatpush.bf16.msra.mxu0 %v551
    %677 = vmatpush.bf16.msra.mxu0 %v545
    %678 = vmatpush.bf16.msra.mxu0 %v539
    %679 = vmatpush.bf16.msra.mxu0 %v533
    %680 = vmatpush.bf16.msra.mxu0 %v527
    %681 = vmatpush.bf16.msra.mxu0 %v521
    %682 = vmatpush.bf16.msra.mxu0 %v515
    %683 = vmatpush.bf16.msra.mxu0 %v509
    %684 = vmatmul.bf16.gmra.mxu0 %v162
    %v685 = vpop.f32.mrf.mxu0
    %v686 = vadd.f32 %v663, %v685
    %v687 = vpop.f32.mrf.mxu0
    %v688 = vadd.f32 %v665, %v687
    %689 = vmatmul.bf16.gmra.mxu0 %v164
    %v690 = vpop.f32.mrf.mxu0
    %v691 = vadd.f32 %v668, %v690
    %v692 = vpop.f32.mrf.mxu0
    %v693 = vadd.f32 %v670, %v692
    %694 = vmatmul.bf16.gmra.mxu0 %v166
    %v695 = vpop.f32.mrf.mxu0
    %v696 = vadd.f32 %v673, %v695
    %v697 = vpop.f32.mrf.mxu0
    %698 = vdwg.mxu0
    %699 = vmatpush.bf16.msra.mxu0 %v504
    %700 = vmatpush.bf16.msra.mxu0 %v498
    %701 = vmatpush.bf16.msra.mxu0 %v492
    %702 = vmatpush.bf16.msra.mxu0 %v486
    %703 = vmatpush.bf16.msra.mxu0 %v480
    %704 = vmatpush.bf16.msra.mxu0 %v474
    %705 = vmatpush.bf16.msra.mxu0 %v468
    %706 = vmatpush.bf16.msra.mxu0 %v462
    %707 = vmatmul.bf16.gmra.mxu0 %v161
    %v708 = vpop.f32.mrf.mxu0
    %v709 = vadd.f32 0.0, %v708
    %v710 = vpop.f32.mrf.mxu0
    %v711 = vadd.f32 0.0, %v710
    %712 = vmatmul.bf16.gmra.mxu0 %v163
    %v713 = vpop.f32.mrf.mxu0
    %v714 = vadd.f32 0.0, %v713
    %v715 = vpop.f32.mrf.mxu0
    %v716 = vadd.f32 0.0, %v715
    %717 = vmatmul.bf16.gmra.mxu0 %v165
    %v718 = vpop.f32.mrf.mxu0
    %v719 = vadd.f32 0.0, %v718
    %v720 = vpop.f32.mrf.mxu0
    %721 = vdwg.mxu0
    %722 = vmatpush.bf16.msra.mxu0 %v552
    %723 = vmatpush.bf16.msra.mxu0 %v546
    %724 = vmatpush.bf16.msra.mxu0 %v540
    %725 = vmatpush.bf16.msra.mxu0 %v534
    %726 = vmatpush.bf16.msra.mxu0 %v528
    %727 = vmatpush.bf16.msra.mxu0 %v522
    %728 = vmatpush.bf16.msra.mxu0 %v516
    %729 = vmatpush.bf16.msra.mxu0 %v510
    %730 = vmatmul.bf16.gmra.mxu0 %v162
    %v731 = vpop.f32.mrf.mxu0
    %v732 = vadd.f32 %v709, %v731
    %v733 = vpop.f32.mrf.mxu0
    %v734 = vadd.f32 %v711, %v733
    %735 = vmatmul.bf16.gmra.mxu0 %v164
    %v736 = vpop.f32.mrf.mxu0
    %v737 = vadd.f32 %v714, %v736
    %v738 = vpop.f32.mrf.mxu0
    %v739 = vadd.f32 %v716, %v738
    %740 = vmatmul.bf16.gmra.mxu0 %v166
    %v741 = vpop.f32.mrf.mxu0
    %v742 = vadd.f32 %v719, %v741
    %v743 = vpop.f32.mrf.mxu0
    %744 = vdwg.mxu0
    %745 = vmatpush.bf16.msra.mxu0 %v505
    %746 = vmatpush.bf16.msra.mxu0 %v499
    %747 = vmatpush.bf16.msra.mxu0 %v493
    %748 = vmatpush.bf16.msra.mxu0 %v487
    %749 = vmatpush.bf16.msra.mxu0 %v481
    %750 = vmatpush.bf16.msra.mxu0 %v475
    %751 = vmatpush.bf16.msra.mxu0 %v469
    %752 = vmatpush.bf16.msra.mxu0 %v463
    %753 = vmatmul.bf16.gmra.mxu0 %v161
    %v754 = vpop.f32.mrf.mxu0
    %v755 = vadd.f32 0.0, %v754
    %v756 = vpop.f32.mrf.mxu0
    %v757 = vadd.f32 0.0, %v756
    %758 = vmatmul.bf16.gmra.mxu0 %v163
    %v759 = vpop.f32.mrf.mxu0
    %v760 = vadd.f32 0.0, %v759
    %v761 = vpop.f32.mrf.mxu0
    %v762 = vadd.f32 0.0, %v761
    %763 = vmatmul.bf16.gmra.mxu0 %v165
    %v764 = vpop.f32.mrf.mxu0
    %v765 = vadd.f32 0.0, %v764
    %v766 = vpop.f32.mrf.mxu0
    %767 = vdwg.mxu0
    %768 = vmatpush.bf16.msra.mxu0 %v553
    %769 = vmatpush.bf16.msra.mxu0 %v547
    %770 = vmatpush.bf16.msra.mxu0 %v541
    %771 = vmatpush.bf16.msra.mxu0 %v535
    %772 = vmatpush.bf16.msra.mxu0 %v529
    %773 = vmatpush.bf16.msra.mxu0 %v523
    %774 = vmatpush.bf16.msra.mxu0 %v517
    %775 = vmatpush.bf16.msra.mxu0 %v511
    %776 = vmatmul.bf16.gmra.mxu0 %v162
    %v777 = vpop.f32.mrf.mxu0
    %v778 = vadd.f32 %v755, %v777
    %v779 = vpop.f32.mrf.mxu0
    %v780 = vadd.f32 %v757, %v779
    %781 = vmatmul.bf16.gmra.mxu0 %v164
    %v782 = vpop.f32.mrf.mxu0
    %v783 = vadd.f32 %v760, %v782
    %v784 = vpop.f32.mrf.mxu0
    %v785 = vadd.f32 %v762, %v784
    %786 = vmatmul.bf16.gmra.mxu0 %v166
    %v787 = vpop.f32.mrf.mxu0
    %v788 = vadd.f32 %v765, %v787
    %v789 = vpop.f32.mrf.mxu0
    %790 = vdwg.mxu0
    %791 = vmatpush.bf16.msra.mxu0 %v506
    %792 = vmatpush.bf16.msra.mxu0 %v500
    %793 = vmatpush.bf16.msra.mxu0 %v494
    %794 = vmatpush.bf16.msra.mxu0 %v488
    %795 = vmatpush.bf16.msra.mxu0 %v482
    %796 = vmatpush.bf16.msra.mxu0 %v476
    %797 = vmatpush.bf16.msra.mxu0 %v470
    %798 = vmatpush.bf16.msra.mxu0 %v464
    %799 = vmatmul.bf16.gmra.mxu0 %v161
    %v800 = vpop.f32.mrf.mxu0
    %v801 = vadd.f32 0.0, %v800
    %v802 = vpop.f32.mrf.mxu0
    %v803 = vadd.f32 0.0, %v802
    %804 = vmatmul.bf16.gmra.mxu0 %v163
    %v805 = vpop.f32.mrf.mxu0
    %v806 = vadd.f32 0.0, %v805
    %v807 = vpop.f32.mrf.mxu0
    %v808 = vadd.f32 0.0, %v807
    %809 = vmatmul.bf16.gmra.mxu0 %v165
    %v810 = vpop.f32.mrf.mxu0
    %v811 = vadd.f32 0.0, %v810
    %v812 = vpop.f32.mrf.mxu0
    %813 = vdwg.mxu0
    %814 = vmatpush.bf16.msra.mxu0 %v554
    %815 = vmatpush.bf16.msra.mxu0 %v548
    %816 = vmatpush.bf16.msra.mxu0 %v542
    %817 = vmatpush.bf16.msra.mxu0 %v536
    %818 = vmatpush.bf16.msra.mxu0 %v530
    %819 = vmatpush.bf16.msra.mxu0 %v524
    %820 = vmatpush.bf16.msra.mxu0 %v518
    %821 = vmatpush.bf16.msra.mxu0 %v512
    %822 = vmatmul.bf16.gmra.mxu0 %v162
    %v823 = vpop.f32.mrf.mxu0
    %v824 = vadd.f32 %v801, %v823
    %v825 = vpop.f32.mrf.mxu0
    %v826 = vadd.f32 %v803, %v825
    %827 = vmatmul.bf16.gmra.mxu0 %v164
    %v828 = vpop.f32.mrf.mxu0
    %v829 = vadd.f32 %v806, %v828
    %v830 = vpop.f32.mrf.mxu0
    %v831 = vadd.f32 %v808, %v830
    %832 = vmatmul.bf16.gmra.mxu0 %v166
    %v833 = vpop.f32.mrf.mxu0
    %v834 = vadd.f32 %v811, %v833
    %v835 = vpop.f32.mrf.mxu0
    %836 = vdwg.mxu0
    %837 = vmatpush.bf16.msra.mxu0 %v507
    %838 = vmatpush.bf16.msra.mxu0 %v501
    %839 = vmatpush.bf16.msra.mxu0 %v495
    %840 = vmatpush.bf16.msra.mxu0 %v489
    %841 = vmatpush.bf16.msra.mxu0 %v483
    %842 = vmatpush.bf16.msra.mxu0 %v477
    %843 = vmatpush.bf16.msra.mxu0 %v471
    %844 = vmatpush.bf16.msra.mxu0 %v465
    %845 = vmatmul.bf16.gmra.mxu0 %v161
    %v846 = vpop.f32.mrf.mxu0
    %v847 = vadd.f32 0.0, %v846
    %v848 = vpop.f32.mrf.mxu0
    %v849 = vadd.f32 0.0, %v848
    %850 = vmatmul.bf16.gmra.mxu0 %v163
    %v851 = vpop.f32.mrf.mxu0
    %v852 = vadd.f32 0.0, %v851
    %v853 = vpop.f32.mrf.mxu0
    %v854 = vadd.f32 0.0, %v853
    %855 = vmatmul.bf16.gmra.mxu0 %v165
    %v856 = vpop.f32.mrf.mxu0
    %v857 = vadd.f32 0.0, %v856
    %v858 = vpop.f32.mrf.mxu0
    %859 = vdwg.mxu0
    %860 = vmatpush.bf16.msra.mxu0 %v555
    %861 = vmatpush.bf16.msra.mxu0 %v549
    %862 = vmatpush.bf16.msra.mxu0 %v543
    %863 = vmatpush.bf16.msra.mxu0 %v537
    %864 = vmatpush.bf16.msra.mxu0 %v531
    %865 = vmatpush.bf16.msra.mxu0 %v525
    %866 = vmatpush.bf16.msra.mxu0 %v519
    %867 = vmatpush.bf16.msra.mxu0 %v513
    %868 = vmatmul.bf16.gmra.mxu0 %v162
    %v869 = vpop.f32.mrf.mxu0
    %v870 = vadd.f32 %v847, %v869
    %v871 = vpop.f32.mrf.mxu0
    %v872 = vadd.f32 %v849, %v871
    %873 = vmatmul.bf16.gmra.mxu0 %v164
    %v874 = vpop.f32.mrf.mxu0
    %v875 = vadd.f32 %v852, %v874
    %v876 = vpop.f32.mrf.mxu0
    %v877 = vadd.f32 %v854, %v876
    %878 = vmatmul.bf16.gmra.mxu0 %v166
    %v879 = vpop.f32.mrf.mxu0
    %v880 = vadd.f32 %v857, %v879
    %v881 = vpop.f32.mrf.mxu0
    %882 = vdwg.mxu0
    %883 = vmatpush.bf16.msra.mxu0 %v508
    %884 = vmatpush.bf16.msra.mxu0 %v502
    %885 = vmatpush.bf16.msra.mxu0 %v496
    %886 = vmatpush.bf16.msra.mxu0 %v490
    %887 = vmatpush.bf16.msra.mxu0 %v484
    %888 = vmatpush.bf16.msra.mxu0 %v478
    %889 = vmatpush.bf16.msra.mxu0 %v472
    %890 = vmatpush.bf16.msra.mxu0 %v466
    %891 = vmatmul.bf16.gmra.mxu0 %v161
    %v892 = vpop.f32.mrf.mxu0
    %v893 = vadd.f32 0.0, %v892
    %v894 = vpop.f32.mrf.mxu0
    %v895 = vadd.f32 0.0, %v894
    %896 = vmatmul.bf16.gmra.mxu0 %v163
    %v897 = vpop.f32.mrf.mxu0
    %v898 = vadd.f32 0.0, %v897
    %v899 = vpop.f32.mrf.mxu0
    %v900 = vadd.f32 0.0, %v899
    %901 = vmatmul.bf16.gmra.mxu0 %v165
    %v902 = vpop.f32.mrf.mxu0
    %v903 = vadd.f32 0.0, %v902
    %v904 = vpop.f32.mrf.mxu0
    %905 = vdwg.mxu0
    %906 = vmatpush.bf16.msra.mxu0 %v556
    %907 = vmatpush.bf16.msra.mxu0 %v550
    %908 = vmatpush.bf16.msra.mxu0 %v544
    %909 = vmatpush.bf16.msra.mxu0 %v538
    %910 = vmatpush.bf16.msra.mxu0 %v532
    %911 = vmatpush.bf16.msra.mxu0 %v526
    %912 = vmatpush.bf16.msra.mxu0 %v520
    %913 = vmatpush.bf16.msra.mxu0 %v514
    %914 = vmatmul.bf16.gmra.mxu0 %v162
    %v915 = vpop.f32.mrf.mxu0
    %v916 = vadd.f32 %v893, %v915
    %v917 = vpop.f32.mrf.mxu0
    %v918 = vadd.f32 %v895, %v917
    %919 = vmatmul.bf16.gmra.mxu0 %v164
    %v920 = vpop.f32.mrf.mxu0
    %v921 = vadd.f32 %v898, %v920
    %v922 = vpop.f32.mrf.mxu0
    %v923 = vadd.f32 %v900, %v922
    %924 = vmatmul.bf16.gmra.mxu0 %v166
    %v925 = vpop.f32.mrf.mxu0
    %v926 = vadd.f32 %v903, %v925
    %v927 = vpop.f32.mrf.mxu0
    %928 = vdwg.mxu0
    %v929 = vpack.c.bf16 %v732, %v686
    %v930 = vpack.c.bf16 %v824, %v778
    %v931 = vpack.c.bf16 %v916, %v870
    %v932 = vpack.c.bf16 %v734, %v688
    %v933 = vpack.c.bf16 %v826, %v780
    %v934 = vpack.c.bf16 %v918, %v872
    %v935 = vpack.c.bf16 %v737, %v691
    %v936 = vpack.c.bf16 %v829, %v783
    %v937 = vpack.c.bf16 %v921, %v875
    %v938 = vpack.c.bf16 %v739, %v693
    %v939 = vpack.c.bf16 %v831, %v785
    %v940 = vpack.c.bf16 %v923, %v877
    %v941 = vpack.c.bf16 %v742, %v696
    %v942 = vpack.c.bf16 %v834, %v788
    %v943 = vpack.c.bf16 %v926, %v880
    %v944 = vlaneseq
    %v945 = vshrl.u32 %v944, 7
    %v946 = vadd.s32 %v945, 8
    %v947 = vadd.s32 %v945, 16
    %v948 = vlaneseq
    %v949 = vand.u32 %v948, 127
    %vm950 = vcmp.gt.s32.totalorder %v949, %v945
    %vm951 = vcmp.gt.s32.totalorder %v949, %v946
    %vm952 = vcmp.gt.s32.totalorder %v949, %v947
    %v953 = vsel %vm950, -inf, 0.0
    %v954 = vsel %vm951, -inf, 0.0
    %v955 = vsel %vm952, -inf, 0.0
    %v959 = vunpack.c.l.b16 %v929
    %v960 = vunpack.c.l.b16 %v932
    %v961 = vunpack.c.l.b16 %v935
    %v962 = vpack.c.b16 %v960, %v959
    %v963 = vpack.c.b16 %v961, %v961
    %v967 = vunpack.c.l.b16 %v930
    %v968 = vunpack.c.l.b16 %v933
    %v969 = vunpack.c.l.b16 %v936
    %v970 = vpack.c.b16 %v968, %v967
    %v971 = vpack.c.b16 %v969, %v969
    %vm972 = vcmask 261120
    %v974 = vsel %vm972, %v962, 0
    %v977 = vsel %vm972, %v963, 0
    %v980 = vsel %vm972, %v970, 0
    %v983 = vsel %vm972, %v971, 0
    %985 = vmatpush.bf16.xpose.msra.mxu0 0
    %986 = vmatpush.bf16.xpose.msra.mxu0 0
    %987 = vmatpush.bf16.xpose.msra.mxu0 0
    %988 = vmatpush.bf16.xpose.msra.mxu0 0
    %989 = vmatpush.bf16.xpose.msra.mxu0 0
    %990 = vmatpush.bf16.xpose.msra.mxu0 0
    %991 = vmatpush.bf16.xpose.msra.mxu0 %v983
    %992 = vmatpush.bf16.xpose.msra.mxu0 %v980
    %993 = vmatmul.bf16.gmra.mxu0 %v974
    %v994 = vpop.f32.mrf.mxu0
    %v995 = vadd.f32 %v953, %v994
    %v996 = vpop.f32.mrf.mxu0
    %v997 = vadd.f32 %v954, %v996
    %998 = vmatmul.bf16.gmra.mxu0 %v977
    %v999 = vpop.f32.mrf.mxu0
    %v1000 = vadd.f32 %v955, %v999
    %v1001 = vpop.f32.mrf.mxu0
    %1002 = vdwg.mxu0
    %vm1003 = vcmask 146432
    %v1004 = vsel %vm1003, %v995, -inf
    %1005 = vmax.xlane.f32.xlu0 %v1004
    %v1006 = vpop.xlane.xlu0 %1005
    %v1007 = vsel %vm1003, %v997, -inf
    %1008 = vmax.xlane.f32.xlu0 %v1007
    %v1009 = vpop.xlane.xlu0 %1008
    %vm1010 = vcmask 140288
    %v1011 = vsel %vm1010, %v1000, -inf
    %1012 = vmax.xlane.f32.xlu0 %v1011
    %v1013 = vpop.xlane.xlu0 %1012
    %v1014 = vsub.f32 %v995, %v1006
    %v1015 = vsub.f32 %v997, %v1009
    %v1016 = vsub.f32 %v1000, %v1013
    %v1017 = vmul.f32 %v1014, 1.442695
    %v1018 = vpow.pop %v1017
    %v1019 = vmul.f32 %v1015, 1.442695
    %v1020 = vpow.pop %v1019
    %v1021 = vmul.f32 %v1016, 1.442695
    %v1022 = vpow.pop %v1021
    %v1023 = vsel %vm1003, %v1018, 0.0
    %1024 = vadd.xlane.f32.xlu0 %v1023
    %v1025 = vpop.xlane.xlu0 %1024
    %v1026 = vsel %vm1003, %v1020, 0.0
    %1027 = vadd.xlane.f32.xlu0 %v1026
    %v1028 = vpop.xlane.xlu0 %1027
    %v1029 = vsel %vm1010, %v1022, 0.0
    %1030 = vadd.xlane.f32.xlu0 %v1029
    %v1031 = vpop.xlane.xlu0 %1030
    %v1032 = vrcp.pop %v1025
    %v1033 = vrcp.pop %v1028
    %v1034 = vrcp.pop %v1031
    %v1035 = vmul.f32 %v1018, %v1032
    %v1036 = vmul.f32 %v1020, %v1033
    %v1037 = vmul.f32 %v1022, %v1034
    %v1038 = vpack.c.bf16 %v1036, %v1035
    %v1039 = vpack.c.bf16 %v1037, %v1037
    %v1043 = vunpack.c.l.b16 %v931
    %v1044 = vunpack.c.l.b16 %v934
    %v1045 = vunpack.c.l.b16 %v937
    %v1046 = vpack.c.b16 %v1044, %v1043
    %v1047 = vpack.c.b16 %v1045, %v1045
    %v1050 = vsel %vm1003, %v1038, 0
    %v1053 = vsel %vm1003, %v1039, 0
    %vm1055 = vcmask 1040384
    %v1057 = vsel %vm1055, %v1047, 0
    %1059 = vmatpush.bf16.msra.mxu0 0
    %1060 = vmatpush.bf16.msra.mxu0 0
    %1061 = vmatpush.bf16.msra.mxu0 0
    %1062 = vmatpush.bf16.msra.mxu0 0
    %1063 = vmatpush.bf16.msra.mxu0 0
    %1064 = vmatpush.bf16.msra.mxu0 0
    %1065 = vmatpush.bf16.msra.mxu0 %v1057
    %1066 = vmatpush.bf16.msra.mxu0 %v1046
    %1067 = vmatmul.bf16.gmra.mxu0 %v1050
    %v1068 = vpop.f32.mrf.mxu0
    %v1069 = vadd.f32 0.0, %v1068
    %v1070 = vpop.f32.mrf.mxu0
    %v1071 = vadd.f32 0.0, %v1070
    %1072 = vmatmul.bf16.gmra.mxu0 %v1053
    %v1073 = vpop.f32.mrf.mxu0
    %v1074 = vadd.f32 0.0, %v1073
    %v1075 = vpop.f32.mrf.mxu0
    %1076 = vdwg.mxu0
    %1077 = vst.msk [vmem:[#allocation7] sm:$0xff] %vm972, %v1069
    %1078 = vst.msk [vmem:[#allocation7 + $0x10] sm:$0xff] %vm972, %v1071
    %vm1079 = vcmask 254976
    %1080 = vst.msk [vmem:[#allocation7 + $0x20] sm:$0x3] %vm1079, %v1074
    %1081 = vrot.lane.b32.xlu0 %v962, 96
    %v1082 = vpop.permute.xlu0 %1081
    %1083 = vrot.lane.b32.xlu0 %v963, 96
    %v1084 = vpop.permute.xlu0 %1083
    %1085 = vrot.lane.b32.xlu0 %v970, 96
    %v1086 = vpop.permute.xlu0 %1085
    %1087 = vrot.lane.b32.xlu0 %v971, 96
    %v1088 = vpop.permute.xlu0 %1087
    %v1090 = vsel %vm972, %v1082, 0
    %v1093 = vsel %vm972, %v1084, 0
    %v1096 = vsel %vm972, %v1086, 0
    %v1099 = vsel %vm972, %v1088, 0
    %1101 = vmatpush.bf16.xpose.msra.mxu0 0
    %1102 = vmatpush.bf16.xpose.msra.mxu0 0
    %1103 = vmatpush.bf16.xpose.msra.mxu0 0
    %1104 = vmatpush.bf16.xpose.msra.mxu0 0
    %1105 = vmatpush.bf16.xpose.msra.mxu0 0
    %1106 = vmatpush.bf16.xpose.msra.mxu0 0
    %1107 = vmatpush.bf16.xpose.msra.mxu0 %v1099
    %1108 = vmatpush.bf16.xpose.msra.mxu0 %v1096
    %1109 = vmatmul.bf16.gmra.mxu0 %v1090
    %v1110 = vpop.f32.mrf.mxu0
    %v1111 = vadd.f32 %v953, %v1110
    %v1112 = vpop.f32.mrf.mxu0
    %v1113 = vadd.f32 %v954, %v1112
    %1114 = vmatmul.bf16.gmra.mxu0 %v1093
    %v1115 = vpop.f32.mrf.mxu0
    %v1116 = vadd.f32 %v955, %v1115
    %v1117 = vpop.f32.mrf.mxu0
    %1118 = vdwg.mxu0
    %v1119 = vsel %vm1003, %v1111, -inf
    %1120 = vmax.xlane.f32.xlu0 %v1119
    %v1121 = vpop.xlane.xlu0 %1120
    %v1122 = vsel %vm1003, %v1113, -inf
    %1123 = vmax.xlane.f32.xlu0 %v1122
    %v1124 = vpop.xlane.xlu0 %1123
    %v1125 = vsel %vm1010, %v1116, -inf
    %1126 = vmax.xlane.f32.xlu0 %v1125
    %v1127 = vpop.xlane.xlu0 %1126
    %v1128 = vsub.f32 %v1111, %v1121
    %v1129 = vsub.f32 %v1113, %v1124
    %v1130 = vsub.f32 %v1116, %v1127
    %v1131 = vmul.f32 %v1128, 1.442695
    %v1132 = vpow.pop %v1131
    %v1133 = vmul.f32 %v1129, 1.442695
    %v1134 = vpow.pop %v1133
    %v1135 = vmul.f32 %v1130, 1.442695
    %v1136 = vpow.pop %v1135
    %v1137 = vsel %vm1003, %v1132, 0.0
    %1138 = vadd.xlane.f32.xlu0 %v1137
    %v1139 = vpop.xlane.xlu0 %1138
    %v1140 = vsel %vm1003, %v1134, 0.0
    %1141 = vadd.xlane.f32.xlu0 %v1140
    %v1142 = vpop.xlane.xlu0 %1141
    %v1143 = vsel %vm1010, %v1136, 0.0
    %1144 = vadd.xlane.f32.xlu0 %v1143
    %v1145 = vpop.xlane.xlu0 %1144
    %v1146 = vrcp.pop %v1139
    %v1147 = vrcp.pop %v1142
    %v1148 = vrcp.pop %v1145
    %v1149 = vmul.f32 %v1132, %v1146
    %v1150 = vmul.f32 %v1134, %v1147
    %v1151 = vmul.f32 %v1136, %v1148
    %v1152 = vpack.c.bf16 %v1150, %v1149
    %v1153 = vpack.c.bf16 %v1151, %v1151
    %1154 = vrot.lane.b32.xlu0 %v1046, 96
    %v1155 = vpop.permute.xlu0 %1154
    %1156 = vrot.lane.b32.xlu0 %v1047, 96
    %v1157 = vpop.permute.xlu0 %1156
    %v1160 = vsel %vm1003, %v1152, 0
    %v1163 = vsel %vm1003, %v1153, 0
    %v1166 = vsel %vm1055, %v1157, 0
    %1168 = vmatpush.bf16.msra.mxu0 0
    %1169 = vmatpush.bf16.msra.mxu0 0
    %1170 = vmatpush.bf16.msra.mxu0 0
    %1171 = vmatpush.bf16.msra.mxu0 0
    %1172 = vmatpush.bf16.msra.mxu0 0
    %1173 = vmatpush.bf16.msra.mxu0 0
    %1174 = vmatpush.bf16.msra.mxu0 %v1166
    %1175 = vmatpush.bf16.msra.mxu0 %v1155
    %1176 = vmatmul.bf16.gmra.mxu0 %v1160
    %v1177 = vpop.f32.mrf.mxu0
    %v1178 = vadd.f32 0.0, %v1177
    %v1179 = vpop.f32.mrf.mxu0
    %v1180 = vadd.f32 0.0, %v1179
    %1181 = vmatmul.bf16.gmra.mxu0 %v1163
    %v1182 = vpop.f32.mrf.mxu0
    %v1183 = vadd.f32 0.0, %v1182
    %v1184 = vpop.f32.mrf.mxu0
    %1185 = vdwg.mxu0
    %1189 = vrot.lane.b32.xlu0 %v1178, 32
    %v1190 = vpop.permute.xlu0 %1189
    %1191 = vrot.lane.b32.xlu0 %v1180, 32
    %v1192 = vpop.permute.xlu0 %1191
    %1193 = vrot.lane.b32.xlu0 %v1183, 32
    %v1194 = vpop.permute.xlu0 %1193
    %vm1198 = vcmask 523520
    %1199 = vst.msk [vmem:[#allocation7] sm:$0xff] %vm1198, %v1190
    %1200 = vst.msk [vmem:[#allocation7 + $0x10] sm:$0xff] %vm1198, %v1192
    %vm1201 = vcmask 517376
    %1202 = vst.msk [vmem:[#allocation7 + $0x20] sm:$0x3] %vm1201, %v1194
    %1203 = vrot.lane.b32.xlu0 %v962, 64
    %v1204 = vpop.permute.xlu0 %1203
    %1205 = vrot.lane.b32.xlu0 %v963, 64
    %v1206 = vpop.permute.xlu0 %1205
    %1207 = vrot.lane.b32.xlu0 %v970, 64
    %v1208 = vpop.permute.xlu0 %1207
    %1209 = vrot.lane.b32.xlu0 %v971, 64
    %v1210 = vpop.permute.xlu0 %1209
    %v1212 = vsel %vm972, %v1204, 0
    %v1215 = vsel %vm972, %v1206, 0
    %v1218 = vsel %vm972, %v1208, 0
    %v1221 = vsel %vm972, %v1210, 0
    %1223 = vmatpush.bf16.xpose.msra.mxu0 0
    %1224 = vmatpush.bf16.xpose.msra.mxu0 0
    %1225 = vmatpush.bf16.xpose.msra.mxu0 0
    %1226 = vmatpush.bf16.xpose.msra.mxu0 0
    %1227 = vmatpush.bf16.xpose.msra.mxu0 0
    %1228 = vmatpush.bf16.xpose.msra.mxu0 0
    %1229 = vmatpush.bf16.xpose.msra.mxu0 %v1221
    %1230 = vmatpush.bf16.xpose.msra.mxu0 %v1218
    %1231 = vmatmul.bf16.gmra.mxu0 %v1212
    %v1232 = vpop.f32.mrf.mxu0
    %v1233 = vadd.f32 %v953, %v1232
    %v1234 = vpop.f32.mrf.mxu0
    %v1235 = vadd.f32 %v954, %v1234
    %1236 = vmatmul.bf16.gmra.mxu0 %v1215
    %v1237 = vpop.f32.mrf.mxu0
    %v1238 = vadd.f32 %v955, %v1237
    %v1239 = vpop.f32.mrf.mxu0
    %1240 = vdwg.mxu0
    %v1241 = vsel %vm1003, %v1233, -inf
    %1242 = vmax.xlane.f32.xlu0 %v1241
    %v1243 = vpop.xlane.xlu0 %1242
    %v1244 = vsel %vm1003, %v1235, -inf
    %1245 = vmax.xlane.f32.xlu0 %v1244
    %v1246 = vpop.xlane.xlu0 %1245
    %v1247 = vsel %vm1010, %v1238, -inf
    %1248 = vmax.xlane.f32.xlu0 %v1247
    %v1249 = vpop.xlane.xlu0 %1248
    %v1250 = vsub.f32 %v1233, %v1243
    %v1251 = vsub.f32 %v1235, %v1246
    %v1252 = vsub.f32 %v1238, %v1249
    %v1253 = vmul.f32 %v1250, 1.442695
    %v1254 = vpow.pop %v1253
    %v1255 = vmul.f32 %v1251, 1.442695
    %v1256 = vpow.pop %v1255
    %v1257 = vmul.f32 %v1252, 1.442695
    %v1258 = vpow.pop %v1257
    %v1259 = vsel %vm1003, %v1254, 0.0
    %1260 = vadd.xlane.f32.xlu0 %v1259
    %v1261 = vpop.xlane.xlu0 %1260
    %v1262 = vsel %vm1003, %v1256, 0.0
    %1263 = vadd.xlane.f32.xlu0 %v1262
    %v1264 = vpop.xlane.xlu0 %1263
    %v1265 = vsel %vm1010, %v1258, 0.0
    %1266 = vadd.xlane.f32.xlu0 %v1265
    %v1267 = vpop.xlane.xlu0 %1266
    %v1268 = vrcp.pop %v1261
    %v1269 = vrcp.pop %v1264
    %v1270 = vrcp.pop %v1267
    %v1271 = vmul.f32 %v1254, %v1268
    %v1272 = vmul.f32 %v1256, %v1269
    %v1273 = vmul.f32 %v1258, %v1270
    %v1274 = vpack.c.bf16 %v1272, %v1271
    %v1275 = vpack.c.bf16 %v1273, %v1273
    %1276 = vrot.lane.b32.xlu0 %v1046, 64
    %v1277 = vpop.permute.xlu0 %1276
    %1278 = vrot.lane.b32.xlu0 %v1047, 64
    %v1279 = vpop.permute.xlu0 %1278
    %v1282 = vsel %vm1003, %v1274, 0
    %v1285 = vsel %vm1003, %v1275, 0
    %v1288 = vsel %vm1055, %v1279, 0
    %1290 = vmatpush.bf16.msra.mxu0 0
    %1291 = vmatpush.bf16.msra.mxu0 0
    %1292 = vmatpush.bf16.msra.mxu0 0
    %1293 = vmatpush.bf16.msra.mxu0 0
    %1294 = vmatpush.bf16.msra.mxu0 0
    %1295 = vmatpush.bf16.msra.mxu0 0
    %1296 = vmatpush.bf16.msra.mxu0 %v1288
    %1297 = vmatpush.bf16.msra.mxu0 %v1277
    %1298 = vmatmul.bf16.gmra.mxu0 %v1282
    %v1299 = vpop.f32.mrf.mxu0
    %v1300 = vadd.f32 0.0, %v1299
    %v1301 = vpop.f32.mrf.mxu0
    %v1302 = vadd.f32 0.0, %v1301
    %1303 = vmatmul.bf16.gmra.mxu0 %v1285
    %v1304 = vpop.f32.mrf.mxu0
    %v1305 = vadd.f32 0.0, %v1304
    %v1306 = vpop.f32.mrf.mxu0
    %1307 = vdwg.mxu0
    %1311 = vrot.lane.b32.xlu0 %v1300, 64
    %v1312 = vpop.permute.xlu0 %1311
    %1313 = vrot.lane.b32.xlu0 %v1302, 64
    %v1314 = vpop.permute.xlu0 %1313
    %1315 = vrot.lane.b32.xlu0 %v1305, 64
    %v1316 = vpop.permute.xlu0 %1315
    %vm1320 = vcmask 785920
    %1321 = vst.msk [vmem:[#allocation7] sm:$0xff] %vm1320, %v1312
    %1322 = vst.msk [vmem:[#allocation7 + $0x10] sm:$0xff] %vm1320, %v1314
    %vm1323 = vcmask 779776
    %1324 = vst.msk [vmem:[#allocation7 + $0x20] sm:$0x3] %vm1323, %v1316
    %1325 = vrot.lane.b32.xlu0 %v962, 32
    %v1326 = vpop.permute.xlu0 %1325
    %1327 = vrot.lane.b32.xlu0 %v963, 32
    %v1328 = vpop.permute.xlu0 %1327
    %1329 = vrot.lane.b32.xlu0 %v970, 32
    %v1330 = vpop.permute.xlu0 %1329
    %1331 = vrot.lane.b32.xlu0 %v971, 32
    %v1332 = vpop.permute.xlu0 %1331
    %v1334 = vsel %vm972, %v1326, 0
    %v1337 = vsel %vm972, %v1328, 0
    %v1340 = vsel %vm972, %v1330, 0
    %v1343 = vsel %vm972, %v1332, 0
    %1345 = vmatpush.bf16.xpose.msra.mxu0 0
    %1346 = vmatpush.bf16.xpose.msra.mxu0 0
    %1347 = vmatpush.bf16.xpose.msra.mxu0 0
    %1348 = vmatpush.bf16.xpose.msra.mxu0 0
    %1349 = vmatpush.bf16.xpose.msra.mxu0 0
    %1350 = vmatpush.bf16.xpose.msra.mxu0 0
    %1351 = vmatpush.bf16.xpose.msra.mxu0 %v1343
    %1352 = vmatpush.bf16.xpose.msra.mxu0 %v1340
    %1353 = vmatmul.bf16.gmra.mxu0 %v1334
    %v1354 = vpop.f32.mrf.mxu0
    %v1355 = vadd.f32 %v953, %v1354
    %v1356 = vpop.f32.mrf.mxu0
    %v1357 = vadd.f32 %v954, %v1356
    %1358 = vmatmul.bf16.gmra.mxu0 %v1337
    %v1359 = vpop.f32.mrf.mxu0
    %v1360 = vadd.f32 %v955, %v1359
    %v1361 = vpop.f32.mrf.mxu0
    %1362 = vdwg.mxu0
    %v1363 = vsel %vm1003, %v1355, -inf
    %1364 = vmax.xlane.f32.xlu0 %v1363
    %v1365 = vpop.xlane.xlu0 %1364
    %v1366 = vsel %vm1003, %v1357, -inf
    %1367 = vmax.xlane.f32.xlu0 %v1366
    %v1368 = vpop.xlane.xlu0 %1367
    %v1369 = vsel %vm1010, %v1360, -inf
    %1370 = vmax.xlane.f32.xlu0 %v1369
    %v1371 = vpop.xlane.xlu0 %1370
    %v1372 = vsub.f32 %v1355, %v1365
    %v1373 = vsub.f32 %v1357, %v1368
    %v1374 = vsub.f32 %v1360, %v1371
    %v1375 = vmul.f32 %v1372, 1.442695
    %v1376 = vpow.pop %v1375
    %v1377 = vmul.f32 %v1373, 1.442695
    %v1378 = vpow.pop %v1377
    %v1379 = vmul.f32 %v1374, 1.442695
    %v1380 = vpow.pop %v1379
    %v1381 = vsel %vm1003, %v1376, 0.0
    %1382 = vadd.xlane.f32.xlu0 %v1381
    %v1383 = vpop.xlane.xlu0 %1382
    %v1384 = vsel %vm1003, %v1378, 0.0
    %1385 = vadd.xlane.f32.xlu0 %v1384
    %v1386 = vpop.xlane.xlu0 %1385
    %v1387 = vsel %vm1010, %v1380, 0.0
    %1388 = vadd.xlane.f32.xlu0 %v1387
    %v1389 = vpop.xlane.xlu0 %1388
    %v1390 = vrcp.pop %v1383
    %v1391 = vrcp.pop %v1386
    %v1392 = vrcp.pop %v1389
    %v1393 = vmul.f32 %v1376, %v1390
    %v1394 = vmul.f32 %v1378, %v1391
    %v1395 = vmul.f32 %v1380, %v1392
    %v1396 = vpack.c.bf16 %v1394, %v1393
    %v1397 = vpack.c.bf16 %v1395, %v1395
    %1398 = vrot.lane.b32.xlu0 %v1046, 32
    %v1399 = vpop.permute.xlu0 %1398
    %1400 = vrot.lane.b32.xlu0 %v1047, 32
    %v1401 = vpop.permute.xlu0 %1400
    %v1404 = vsel %vm1003, %v1396, 0
    %v1407 = vsel %vm1003, %v1397, 0
    %v1410 = vsel %vm1055, %v1401, 0
    %1412 = vmatpush.bf16.msra.mxu0 0
    %1413 = vmatpush.bf16.msra.mxu0 0
    %1414 = vmatpush.bf16.msra.mxu0 0
    %1415 = vmatpush.bf16.msra.mxu0 0
    %1416 = vmatpush.bf16.msra.mxu0 0
    %1417 = vmatpush.bf16.msra.mxu0 0
    %1418 = vmatpush.bf16.msra.mxu0 %v1410
    %1419 = vmatpush.bf16.msra.mxu0 %v1399
    %1420 = vmatmul.bf16.gmra.mxu0 %v1404
    %v1421 = vpop.f32.mrf.mxu0
    %v1422 = vadd.f32 0.0, %v1421
    %v1423 = vpop.f32.mrf.mxu0
    %v1424 = vadd.f32 0.0, %v1423
    %1425 = vmatmul.bf16.gmra.mxu0 %v1407
    %v1426 = vpop.f32.mrf.mxu0
    %v1427 = vadd.f32 0.0, %v1426
    %v1428 = vpop.f32.mrf.mxu0
    %1429 = vdwg.mxu0
    %1433 = vrot.lane.b32.xlu0 %v1422, 96
    %v1434 = vpop.permute.xlu0 %1433
    %1435 = vrot.lane.b32.xlu0 %v1424, 96
    %v1436 = vpop.permute.xlu0 %1435
    %1437 = vrot.lane.b32.xlu0 %v1427, 96
    %v1438 = vpop.permute.xlu0 %1437
    %vm1442 = vcmask 1048320
    %1443 = vst.msk [vmem:[#allocation7] sm:$0xff] %vm1442, %v1434
    %1444 = vst.msk [vmem:[#allocation7 + $0x10] sm:$0xff] %vm1442, %v1436
    %vm1445 = vcmask 1042176
    %1446 = vst.msk [vmem:[#allocation7 + $0x20] sm:$0x3] %vm1445, %v1438
    %v1447 = vunpack.c.h.b16 %v929
    %v1448 = vunpack.c.h.b16 %v932
    %v1449 = vunpack.c.h.b16 %v935
    %v1450 = vpack.c.b16 %v1448, %v1447
    %v1451 = vpack.c.b16 %v1449, %v1449
    %v1452 = vunpack.c.h.b16 %v930
    %v1453 = vunpack.c.h.b16 %v933
    %v1454 = vunpack.c.h.b16 %v936
    %v1455 = vpack.c.b16 %v1453, %v1452
    %v1456 = vpack.c.b16 %v1454, %v1454
    %v1458 = vsel %vm972, %v1450, 0
    %v1461 = vsel %vm972, %v1451, 0
    %v1464 = vsel %vm972, %v1455, 0
    %v1467 = vsel %vm972, %v1456, 0
    %1469 = vmatpush.bf16.xpose.msra.mxu0 0
    %1470 = vmatpush.bf16.xpose.msra.mxu0 0
    %1471 = vmatpush.bf16.xpose.msra.mxu0 0
    %1472 = vmatpush.bf16.xpose.msra.mxu0 0
    %1473 = vmatpush.bf16.xpose.msra.mxu0 0
    %1474 = vmatpush.bf16.xpose.msra.mxu0 0
    %1475 = vmatpush.bf16.xpose.msra.mxu0 %v1467
    %1476 = vmatpush.bf16.xpose.msra.mxu0 %v1464
    %1477 = vmatmul.bf16.gmra.mxu0 %v1458
    %v1478 = vpop.f32.mrf.mxu0
    %v1479 = vadd.f32 %v953, %v1478
    %v1480 = vpop.f32.mrf.mxu0
    %v1481 = vadd.f32 %v954, %v1480
    %1482 = vmatmul.bf16.gmra.mxu0 %v1461
    %v1483 = vpop.f32.mrf.mxu0
    %v1484 = vadd.f32 %v955, %v1483
    %v1485 = vpop.f32.mrf.mxu0
    %1486 = vdwg.mxu0
    %v1487 = vsel %vm1003, %v1479, -inf
    %1488 = vmax.xlane.f32.xlu0 %v1487
    %v1489 = vpop.xlane.xlu0 %1488
    %v1490 = vsel %vm1003, %v1481, -inf
    %1491 = vmax.xlane.f32.xlu0 %v1490
    %v1492 = vpop.xlane.xlu0 %1491
    %v1493 = vsel %vm1010, %v1484, -inf
    %1494 = vmax.xlane.f32.xlu0 %v1493
    %v1495 = vpop.xlane.xlu0 %1494
    %v1496 = vsub.f32 %v1479, %v1489
    %v1497 = vsub.f32 %v1481, %v1492
    %v1498 = vsub.f32 %v1484, %v1495
    %v1499 = vmul.f32 %v1496, 1.442695
    %v1500 = vpow.pop %v1499
    %v1501 = vmul.f32 %v1497, 1.442695
    %v1502 = vpow.pop %v1501
    %v1503 = vmul.f32 %v1498, 1.442695
    %v1504 = vpow.pop %v1503
    %v1505 = vsel %vm1003, %v1500, 0.0
    %1506 = vadd.xlane.f32.xlu0 %v1505
    %v1507 = vpop.xlane.xlu0 %1506
    %v1508 = vsel %vm1003, %v1502, 0.0
    %1509 = vadd.xlane.f32.xlu0 %v1508
    %v1510 = vpop.xlane.xlu0 %1509
    %v1511 = vsel %vm1010, %v1504, 0.0
    %1512 = vadd.xlane.f32.xlu0 %v1511
    %v1513 = vpop.xlane.xlu0 %1512
    %v1514 = vrcp.pop %v1507
    %v1515 = vrcp.pop %v1510
    %v1516 = vrcp.pop %v1513
    %v1517 = vmul.f32 %v1500, %v1514
    %v1518 = vmul.f32 %v1502, %v1515
    %v1519 = vmul.f32 %v1504, %v1516
    %v1520 = vpack.c.bf16 %v1518, %v1517
    %v1521 = vpack.c.bf16 %v1519, %v1519
    %v1522 = vunpack.c.h.b16 %v931
    %v1523 = vunpack.c.h.b16 %v934
    %v1524 = vunpack.c.h.b16 %v937
    %v1525 = vpack.c.b16 %v1523, %v1522
    %v1526 = vpack.c.b16 %v1524, %v1524
    %v1529 = vsel %vm1003, %v1520, 0
    %v1532 = vsel %vm1003, %v1521, 0
    %v1535 = vsel %vm1055, %v1526, 0
    %1537 = vmatpush.bf16.msra.mxu0 0
    %1538 = vmatpush.bf16.msra.mxu0 0
    %1539 = vmatpush.bf16.msra.mxu0 0
    %1540 = vmatpush.bf16.msra.mxu0 0
    %1541 = vmatpush.bf16.msra.mxu0 0
    %1542 = vmatpush.bf16.msra.mxu0 0
    %1543 = vmatpush.bf16.msra.mxu0 %v1535
    %1544 = vmatpush.bf16.msra.mxu0 %v1525
    %1545 = vmatmul.bf16.gmra.mxu0 %v1529
    %v1546 = vpop.f32.mrf.mxu0
    %v1547 = vadd.f32 0.0, %v1546
    %v1548 = vpop.f32.mrf.mxu0
    %v1549 = vadd.f32 0.0, %v1548
    %1550 = vmatmul.bf16.gmra.mxu0 %v1532
    %v1551 = vpop.f32.mrf.mxu0
    %v1552 = vadd.f32 0.0, %v1551
    %v1553 = vpop.f32.mrf.mxu0
    %1554 = vdwg.mxu0
    %1555 = vst.msk [vmem:[#allocation7 + $0x8] sm:$0xff] %vm972, %v1547
    %1556 = vst.msk [vmem:[#allocation7 + $0x18] sm:$0xff] %vm972, %v1549
    %1557 = vst.msk [vmem:[#allocation7 + $0x28] sm:$0x3] %vm1079, %v1552
    %1558 = vrot.lane.b32.xlu0 %v1450, 96
    %v1559 = vpop.permute.xlu0 %1558
    %1560 = vrot.lane.b32.xlu0 %v1451, 96
    %v1561 = vpop.permute.xlu0 %1560
    %1562 = vrot.lane.b32.xlu0 %v1455, 96
    %v1563 = vpop.permute.xlu0 %1562
    %1564 = vrot.lane.b32.xlu0 %v1456, 96
    %v1565 = vpop.permute.xlu0 %1564
    %v1567 = vsel %vm972, %v1559, 0
    %v1570 = vsel %vm972, %v1561, 0
    %v1573 = vsel %vm972, %v1563, 0
    %v1576 = vsel %vm972, %v1565, 0
    %1578 = vmatpush.bf16.xpose.msra.mxu0 0
    %1579 = vmatpush.bf16.xpose.msra.mxu0 0
    %1580 = vmatpush.bf16.xpose.msra.mxu0 0
    %1581 = vmatpush.bf16.xpose.msra.mxu0 0
    %1582 = vmatpush.bf16.xpose.msra.mxu0 0
    %1583 = vmatpush.bf16.xpose.msra.mxu0 0
    %1584 = vmatpush.bf16.xpose.msra.mxu0 %v1576
    %1585 = vmatpush.bf16.xpose.msra.mxu0 %v1573
    %1586 = vmatmul.bf16.gmra.mxu0 %v1567
    %v1587 = vpop.f32.mrf.mxu0
    %v1588 = vadd.f32 %v953, %v1587
    %v1589 = vpop.f32.mrf.mxu0
    %v1590 = vadd.f32 %v954, %v1589
    %1591 = vmatmul.bf16.gmra.mxu0 %v1570
    %v1592 = vpop.f32.mrf.mxu0
    %v1593 = vadd.f32 %v955, %v1592
    %v1594 = vpop.f32.mrf.mxu0
    %1595 = vdwg.mxu0
    %v1596 = vsel %vm1003, %v1588, -inf
    %1597 = vmax.xlane.f32.xlu0 %v1596
    %v1598 = vpop.xlane.xlu0 %1597
    %v1599 = vsel %vm1003, %v1590, -inf
    %1600 = vmax.xlane.f32.xlu0 %v1599
    %v1601 = vpop.xlane.xlu0 %1600
    %v1602 = vsel %vm1010, %v1593, -inf
    %1603 = vmax.xlane.f32.xlu0 %v1602
    %v1604 = vpop.xlane.xlu0 %1603
    %v1605 = vsub.f32 %v1588, %v1598
    %v1606 = vsub.f32 %v1590, %v1601
    %v1607 = vsub.f32 %v1593, %v1604
    %v1608 = vmul.f32 %v1605, 1.442695
    %v1609 = vpow.pop %v1608
    %v1610 = vmul.f32 %v1606, 1.442695
    %v1611 = vpow.pop %v1610
    %v1612 = vmul.f32 %v1607, 1.442695
    %v1613 = vpow.pop %v1612
    %v1614 = vsel %vm1003, %v1609, 0.0
    %1615 = vadd.xlane.f32.xlu0 %v1614
    %v1616 = vpop.xlane.xlu0 %1615
    %v1617 = vsel %vm1003, %v1611, 0.0
    %1618 = vadd.xlane.f32.xlu0 %v1617
    %v1619 = vpop.xlane.xlu0 %1618
    %v1620 = vsel %vm1010, %v1613, 0.0
    %1621 = vadd.xlane.f32.xlu0 %v1620
    %v1622 = vpop.xlane.xlu0 %1621
    %v1623 = vrcp.pop %v1616
    %v1624 = vrcp.pop %v1619
    %v1625 = vrcp.pop %v1622
    %v1626 = vmul.f32 %v1609, %v1623
    %v1627 = vmul.f32 %v1611, %v1624
    %v1628 = vmul.f32 %v1613, %v1625
    %v1629 = vpack.c.bf16 %v1627, %v1626
    %v1630 = vpack.c.bf16 %v1628, %v1628
    %1631 = vrot.lane.b32.xlu0 %v1525, 96
    %v1632 = vpop.permute.xlu0 %1631
    %1633 = vrot.lane.b32.xlu0 %v1526, 96
    %v1634 = vpop.permute.xlu0 %1633
    %v1637 = vsel %vm1003, %v1629, 0
    %v1640 = vsel %vm1003, %v1630, 0
    %v1643 = vsel %vm1055, %v1634, 0
    %1645 = vmatpush.bf16.msra.mxu0 0
    %1646 = vmatpush.bf16.msra.mxu0 0
    %1647 = vmatpush.bf16.msra.mxu0 0
    %1648 = vmatpush.bf16.msra.mxu0 0
    %1649 = vmatpush.bf16.msra.mxu0 0
    %1650 = vmatpush.bf16.msra.mxu0 0
    %1651 = vmatpush.bf16.msra.mxu0 %v1643
    %1652 = vmatpush.bf16.msra.mxu0 %v1632
    %1653 = vmatmul.bf16.gmra.mxu0 %v1637
    %v1654 = vpop.f32.mrf.mxu0
    %v1655 = vadd.f32 0.0, %v1654
    %v1656 = vpop.f32.mrf.mxu0
    %v1657 = vadd.f32 0.0, %v1656
    %1658 = vmatmul.bf16.gmra.mxu0 %v1640
    %v1659 = vpop.f32.mrf.mxu0
    %v1660 = vadd.f32 0.0, %v1659
    %v1661 = vpop.f32.mrf.mxu0
    %1662 = vdwg.mxu0
    %1666 = vrot.lane.b32.xlu0 %v1655, 32
    %v1667 = vpop.permute.xlu0 %1666
    %1668 = vrot.lane.b32.xlu0 %v1657, 32
    %v1669 = vpop.permute.xlu0 %1668
    %1670 = vrot.lane.b32.xlu0 %v1660, 32
    %v1671 = vpop.permute.xlu0 %1670
    %1675 = vst.msk [vmem:[#allocation7 + $0x8] sm:$0xff] %vm1198, %v1667
    %1676 = vst.msk [vmem:[#allocation7 + $0x18] sm:$0xff] %vm1198, %v1669
    %1677 = vst.msk [vmem:[#allocation7 + $0x28] sm:$0x3] %vm1201, %v1671
    %1678 = vrot.lane.b32.xlu0 %v1450, 64
    %v1679 = vpop.permute.xlu0 %1678
    %1680 = vrot.lane.b32.xlu0 %v1451, 64
    %v1681 = vpop.permute.xlu0 %1680
    %1682 = vrot.lane.b32.xlu0 %v1455, 64
    %v1683 = vpop.permute.xlu0 %1682
    %1684 = vrot.lane.b32.xlu0 %v1456, 64
    %v1685 = vpop.permute.xlu0 %1684
    %v1687 = vsel %vm972, %v1679, 0
    %v1690 = vsel %vm972, %v1681, 0
    %v1693 = vsel %vm972, %v1683, 0
    %v1696 = vsel %vm972, %v1685, 0
    %1698 = vmatpush.bf16.xpose.msra.mxu0 0
    %1699 = vmatpush.bf16.xpose.msra.mxu0 0
    %1700 = vmatpush.bf16.xpose.msra.mxu0 0
    %1701 = vmatpush.bf16.xpose.msra.mxu0 0
    %1702 = vmatpush.bf16.xpose.msra.mxu0 0
    %1703 = vmatpush.bf16.xpose.msra.mxu0 0
    %1704 = vmatpush.bf16.xpose.msra.mxu0 %v1696
    %1705 = vmatpush.bf16.xpose.msra.mxu0 %v1693
    %1706 = vmatmul.bf16.gmra.mxu0 %v1687
    %v1707 = vpop.f32.mrf.mxu0
    %v1708 = vadd.f32 %v953, %v1707
    %v1709 = vpop.f32.mrf.mxu0
    %v1710 = vadd.f32 %v954, %v1709
    %1711 = vmatmul.bf16.gmra.mxu0 %v1690
    %v1712 = vpop.f32.mrf.mxu0
    %v1713 = vadd.f32 %v955, %v1712
    %v1714 = vpop.f32.mrf.mxu0
    %1715 = vdwg.mxu0
    %v1716 = vsel %vm1003, %v1708, -inf
    %1717 = vmax.xlane.f32.xlu0 %v1716
    %v1718 = vpop.xlane.xlu0 %1717
    %v1719 = vsel %vm1003, %v1710, -inf
    %1720 = vmax.xlane.f32.xlu0 %v1719
    %v1721 = vpop.xlane.xlu0 %1720
    %v1722 = vsel %vm1010, %v1713, -inf
    %1723 = vmax.xlane.f32.xlu0 %v1722
    %v1724 = vpop.xlane.xlu0 %1723
    %v1725 = vsub.f32 %v1708, %v1718
    %v1726 = vsub.f32 %v1710, %v1721
    %v1727 = vsub.f32 %v1713, %v1724
    %v1728 = vmul.f32 %v1725, 1.442695
    %v1729 = vpow.pop %v1728
    %v1730 = vmul.f32 %v1726, 1.442695
    %v1731 = vpow.pop %v1730
    %v1732 = vmul.f32 %v1727, 1.442695
    %v1733 = vpow.pop %v1732
    %v1734 = vsel %vm1003, %v1729, 0.0
    %1735 = vadd.xlane.f32.xlu0 %v1734
    %v1736 = vpop.xlane.xlu0 %1735
    %v1737 = vsel %vm1003, %v1731, 0.0
    %1738 = vadd.xlane.f32.xlu0 %v1737
    %v1739 = vpop.xlane.xlu0 %1738
    %v1740 = vsel %vm1010, %v1733, 0.0
    %1741 = vadd.xlane.f32.xlu0 %v1740
    %v1742 = vpop.xlane.xlu0 %1741
    %v1743 = vrcp.pop %v1736
    %v1744 = vrcp.pop %v1739
    %v1745 = vrcp.pop %v1742
    %v1746 = vmul.f32 %v1729, %v1743
    %v1747 = vmul.f32 %v1731, %v1744
    %v1748 = vmul.f32 %v1733, %v1745
    %v1749 = vpack.c.bf16 %v1747, %v1746
    %v1750 = vpack.c.bf16 %v1748, %v1748
    %1751 = vrot.lane.b32.xlu0 %v1525, 64
    %v1752 = vpop.permute.xlu0 %1751
    %1753 = vrot.lane.b32.xlu0 %v1526, 64
    %v1754 = vpop.permute.xlu0 %1753
    %v1757 = vsel %vm1003, %v1749, 0
    %v1760 = vsel %vm1003, %v1750, 0
    %v1763 = vsel %vm1055, %v1754, 0
    %1765 = vmatpush.bf16.msra.mxu0 0
    %1766 = vmatpush.bf16.msra.mxu0 0
    %1767 = vmatpush.bf16.msra.mxu0 0
    %1768 = vmatpush.bf16.msra.mxu0 0
    %1769 = vmatpush.bf16.msra.mxu0 0
    %1770 = vmatpush.bf16.msra.mxu0 0
    %1771 = vmatpush.bf16.msra.mxu0 %v1763
    %1772 = vmatpush.bf16.msra.mxu0 %v1752
    %1773 = vmatmul.bf16.gmra.mxu0 %v1757
    %v1774 = vpop.f32.mrf.mxu0
    %v1775 = vadd.f32 0.0, %v1774
    %v1776 = vpop.f32.mrf.mxu0
    %v1777 = vadd.f32 0.0, %v1776
    %1778 = vmatmul.bf16.gmra.mxu0 %v1760
    %v1779 = vpop.f32.mrf.mxu0
    %v1780 = vadd.f32 0.0, %v1779
    %v1781 = vpop.f32.mrf.mxu0
    %1782 = vdwg.mxu0
    %1786 = vrot.lane.b32.xlu0 %v1775, 64
    %v1787 = vpop.permute.xlu0 %1786
    %1788 = vrot.lane.b32.xlu0 %v1777, 64
    %v1789 = vpop.permute.xlu0 %1788
    %1790 = vrot.lane.b32.xlu0 %v1780, 64
    %v1791 = vpop.permute.xlu0 %1790
    %1795 = vst.msk [vmem:[#allocation7 + $0x8] sm:$0xff] %vm1320, %v1787
    %1796 = vst.msk [vmem:[#allocation7 + $0x18] sm:$0xff] %vm1320, %v1789
    %1797 = vst.msk [vmem:[#allocation7 + $0x28] sm:$0x3] %vm1323, %v1791
    %1798 = vrot.lane.b32.xlu0 %v1450, 32
    %v1799 = vpop.permute.xlu0 %1798
    %1800 = vrot.lane.b32.xlu0 %v1451, 32
    %v1801 = vpop.permute.xlu0 %1800
    %1802 = vrot.lane.b32.xlu0 %v1455, 32
    %v1803 = vpop.permute.xlu0 %1802
    %1804 = vrot.lane.b32.xlu0 %v1456, 32
    %v1805 = vpop.permute.xlu0 %1804
    %v1807 = vsel %vm972, %v1799, 0
    %v1810 = vsel %vm972, %v1801, 0
    %v1813 = vsel %vm972, %v1803, 0
    %v1816 = vsel %vm972, %v1805, 0
    %1818 = vmatpush.bf16.xpose.msra.mxu0 0
    %1819 = vmatpush.bf16.xpose.msra.mxu0 0
    %1820 = vmatpush.bf16.xpose.msra.mxu0 0
    %1821 = vmatpush.bf16.xpose.msra.mxu0 0
    %1822 = vmatpush.bf16.xpose.msra.mxu0 0
    %1823 = vmatpush.bf16.xpose.msra.mxu0 0
    %1824 = vmatpush.bf16.xpose.msra.mxu0 %v1816
    %1825 = vmatpush.bf16.xpose.msra.mxu0 %v1813
    %1826 = vmatmul.bf16.gmra.mxu0 %v1807
    %v1827 = vpop.f32.mrf.mxu0
    %v1828 = vadd.f32 %v953, %v1827
    %v1829 = vpop.f32.mrf.mxu0
    %v1830 = vadd.f32 %v954, %v1829
    %1831 = vmatmul.bf16.gmra.mxu0 %v1810
    %v1832 = vpop.f32.mrf.mxu0
    %v1833 = vadd.f32 %v955, %v1832
    %v1834 = vpop.f32.mrf.mxu0
    %1835 = vdwg.mxu0
    %v1836 = vsel %vm1003, %v1828, -inf
    %1837 = vmax.xlane.f32.xlu0 %v1836
    %v1838 = vpop.xlane.xlu0 %1837
    %v1839 = vsel %vm1003, %v1830, -inf
    %1840 = vmax.xlane.f32.xlu0 %v1839
    %v1841 = vpop.xlane.xlu0 %1840
    %v1842 = vsel %vm1010, %v1833, -inf
    %1843 = vmax.xlane.f32.xlu0 %v1842
    %v1844 = vpop.xlane.xlu0 %1843
    %v1845 = vsub.f32 %v1828, %v1838
    %v1846 = vsub.f32 %v1830, %v1841
    %v1847 = vsub.f32 %v1833, %v1844
    %v1848 = vmul.f32 %v1845, 1.442695
    %v1849 = vpow.pop %v1848
    %v1850 = vmul.f32 %v1846, 1.442695
    %v1851 = vpow.pop %v1850
    %v1852 = vmul.f32 %v1847, 1.442695
    %v1853 = vpow.pop %v1852
    %v1854 = vsel %vm1003, %v1849, 0.0
    %1855 = vadd.xlane.f32.xlu0 %v1854
    %v1856 = vpop.xlane.xlu0 %1855
    %v1857 = vsel %vm1003, %v1851, 0.0
    %1858 = vadd.xlane.f32.xlu0 %v1857
    %v1859 = vpop.xlane.xlu0 %1858
    %v1860 = vsel %vm1010, %v1853, 0.0
    %1861 = vadd.xlane.f32.xlu0 %v1860
    %v1862 = vpop.xlane.xlu0 %1861
    %v1863 = vrcp.pop %v1856
    %v1864 = vrcp.pop %v1859
    %v1865 = vrcp.pop %v1862
    %v1866 = vmul.f32 %v1849, %v1863
    %v1867 = vmul.f32 %v1851, %v1864
    %v1868 = vmul.f32 %v1853, %v1865
    %v1869 = vpack.c.bf16 %v1867, %v1866
    %v1870 = vpack.c.bf16 %v1868, %v1868
    %1871 = vrot.lane.b32.xlu0 %v1525, 32
    %v1872 = vpop.permute.xlu0 %1871
    %1873 = vrot.lane.b32.xlu0 %v1526, 32
    %v1874 = vpop.permute.xlu0 %1873
    %v1877 = vsel %vm1003, %v1869, 0
    %v1880 = vsel %vm1003, %v1870, 0
    %v1883 = vsel %vm1055, %v1874, 0
    %1885 = vmatpush.bf16.msra.mxu0 0
    %1886 = vmatpush.bf16.msra.mxu0 0
    %1887 = vmatpush.bf16.msra.mxu0 0
    %1888 = vmatpush.bf16.msra.mxu0 0
    %1889 = vmatpush.bf16.msra.mxu0 0
    %1890 = vmatpush.bf16.msra.mxu0 0
    %1891 = vmatpush.bf16.msra.mxu0 %v1883
    %1892 = vmatpush.bf16.msra.mxu0 %v1872
    %1893 = vmatmul.bf16.gmra.mxu0 %v1877
    %v1894 = vpop.f32.mrf.mxu0
    %v1895 = vadd.f32 0.0, %v1894
    %v1896 = vpop.f32.mrf.mxu0
    %v1897 = vadd.f32 0.0, %v1896
    %1898 = vmatmul.bf16.gmra.mxu0 %v1880
    %v1899 = vpop.f32.mrf.mxu0
    %v1900 = vadd.f32 0.0, %v1899
    %v1901 = vpop.f32.mrf.mxu0
    %1902 = vdwg.mxu0
    %1906 = vrot.lane.b32.xlu0 %v1895, 96
    %v1907 = vpop.permute.xlu0 %1906
    %1908 = vrot.lane.b32.xlu0 %v1897, 96
    %v1909 = vpop.permute.xlu0 %1908
    %1910 = vrot.lane.b32.xlu0 %v1900, 96
    %v1911 = vpop.permute.xlu0 %1910
    %1915 = vst.msk [vmem:[#allocation7 + $0x8] sm:$0xff] %vm1442, %v1907
    %1916 = vst.msk [vmem:[#allocation7 + $0x18] sm:$0xff] %vm1442, %v1909
    %1917 = vst.msk [vmem:[#allocation7 + $0x28] sm:$0x3] %vm1445, %v1911
    %v1920 = vunpack.c.l.b16 %v938
    %v1921 = vunpack.c.l.b16 %v941
    %v1922 = vpack.c.b16 %v1920, %v961
    %v1923 = vpack.c.b16 %v1921, %v1921
    %vm1924 = vcmask 1046528
    %v1925 = vrot.slane %v1922, 1
    %v1926 = vrot.slane %v1923, 1
    %v1927 = vsel %vm1924, %v1925, %v1926
    %v1930 = vunpack.c.l.b16 %v939
    %v1931 = vunpack.c.l.b16 %v942
    %v1932 = vpack.c.b16 %v1930, %v969
    %v1933 = vpack.c.b16 %v1931, %v1931
    %v1934 = vrot.slane %v1932, 1
    %v1935 = vrot.slane %v1933, 1
    %v1936 = vsel %vm1924, %v1934, %v1935
    %v1938 = vsel %vm972, %v1927, 0
    %v1941 = vsel %vm972, %v1926, 0
    %v1944 = vsel %vm972, %v1936, 0
    %v1947 = vsel %vm972, %v1935, 0
    %1949 = vmatpush.bf16.xpose.msra.mxu0 0
    %1950 = vmatpush.bf16.xpose.msra.mxu0 0
    %1951 = vmatpush.bf16.xpose.msra.mxu0 0
    %1952 = vmatpush.bf16.xpose.msra.mxu0 0
    %1953 = vmatpush.bf16.xpose.msra.mxu0 0
    %1954 = vmatpush.bf16.xpose.msra.mxu0 0
    %1955 = vmatpush.bf16.xpose.msra.mxu0 %v1947
    %1956 = vmatpush.bf16.xpose.msra.mxu0 %v1944
    %1957 = vmatmul.bf16.gmra.mxu0 %v1938
    %v1958 = vpop.f32.mrf.mxu0
    %v1959 = vadd.f32 %v953, %v1958
    %v1960 = vpop.f32.mrf.mxu0
    %v1961 = vadd.f32 %v954, %v1960
    %1962 = vmatmul.bf16.gmra.mxu0 %v1941
    %v1963 = vpop.f32.mrf.mxu0
    %v1964 = vadd.f32 %v955, %v1963
    %v1965 = vpop.f32.mrf.mxu0
    %1966 = vdwg.mxu0
    %v1967 = vsel %vm1003, %v1959, -inf
    %1968 = vmax.xlane.f32.xlu0 %v1967
    %v1969 = vpop.xlane.xlu0 %1968
    %v1970 = vsel %vm1003, %v1961, -inf
    %1971 = vmax.xlane.f32.xlu0 %v1970
    %v1972 = vpop.xlane.xlu0 %1971
    %v1973 = vsel %vm1010, %v1964, -inf
    %1974 = vmax.xlane.f32.xlu0 %v1973
    %v1975 = vpop.xlane.xlu0 %1974
    %v1976 = vsub.f32 %v1959, %v1969
    %v1977 = vsub.f32 %v1961, %v1972
    %v1978 = vsub.f32 %v1964, %v1975
    %v1979 = vmul.f32 %v1976, 1.442695
    %v1980 = vpow.pop %v1979
    %v1981 = vmul.f32 %v1977, 1.442695
    %v1982 = vpow.pop %v1981
    %v1983 = vmul.f32 %v1978, 1.442695
    %v1984 = vpow.pop %v1983
    %v1985 = vsel %vm1003, %v1980, 0.0
    %1986 = vadd.xlane.f32.xlu0 %v1985
    %v1987 = vpop.xlane.xlu0 %1986
    %v1988 = vsel %vm1003, %v1982, 0.0
    %1989 = vadd.xlane.f32.xlu0 %v1988
    %v1990 = vpop.xlane.xlu0 %1989
    %v1991 = vsel %vm1010, %v1984, 0.0
    %1992 = vadd.xlane.f32.xlu0 %v1991
    %v1993 = vpop.xlane.xlu0 %1992
    %v1994 = vrcp.pop %v1987
    %v1995 = vrcp.pop %v1990
    %v1996 = vrcp.pop %v1993
    %v1997 = vmul.f32 %v1980, %v1994
    %v1998 = vmul.f32 %v1982, %v1995
    %v1999 = vmul.f32 %v1984, %v1996
    %v2000 = vpack.c.bf16 %v1998, %v1997
    %v2001 = vpack.c.bf16 %v1999, %v1999
    %v2004 = vunpack.c.l.b16 %v940
    %v2005 = vunpack.c.l.b16 %v943
    %v2006 = vpack.c.b16 %v2004, %v1045
    %v2007 = vpack.c.b16 %v2005, %v2005
    %v2008 = vrot.slane %v2006, 1
    %v2009 = vrot.slane %v2007, 1
    %v2010 = vsel %vm1924, %v2008, %v2009
    %v2013 = vsel %vm1003, %v2000, 0
    %v2016 = vsel %vm1003, %v2001, 0
    %v2019 = vsel %vm1055, %v2009, 0
    %2021 = vmatpush.bf16.msra.mxu0 0
    %2022 = vmatpush.bf16.msra.mxu0 0
    %2023 = vmatpush.bf16.msra.mxu0 0
    %2024 = vmatpush.bf16.msra.mxu0 0
    %2025 = vmatpush.bf16.msra.mxu0 0
    %2026 = vmatpush.bf16.msra.mxu0 0
    %2027 = vmatpush.bf16.msra.mxu0 %v2019
    %2028 = vmatpush.bf16.msra.mxu0 %v2010
    %2029 = vmatmul.bf16.gmra.mxu0 %v2013
    %v2030 = vpop.f32.mrf.mxu0
    %v2031 = vadd.f32 0.0, %v2030
    %v2032 = vpop.f32.mrf.mxu0
    %v2033 = vadd.f32 0.0, %v2032
    %2034 = vmatmul.bf16.gmra.mxu0 %v2016
    %v2035 = vpop.f32.mrf.mxu0
    %v2036 = vadd.f32 0.0, %v2035
    %v2037 = vpop.f32.mrf.mxu0
    %2038 = vdwg.mxu0
    %vm2042 = vcmask 1041408
    %v2043 = vrot.slane %v2031, 6
    %v2044 = vrot.slane %v2033, 6
    %v2045 = vsel %vm2042, %v2043, %v2044
    %v2046 = vrot.slane %v2036, 6
    %v2047 = vsel %vm2042, %v2044, %v2046
    %vm2051 = vcmask 261122
    %2052 = vst.msk [vmem:[#allocation7 + $0x20] sm:$0xfc] %vm2051, %v2043
    %2053 = vst.msk [vmem:[#allocation7 + $0x30] sm:$0xff] %vm972, %v2045
    %vm2054 = vcmask 257024
    %2055 = vst.msk [vmem:[#allocation7 + $0x40] sm:$0xf] %vm2054, %v2047
    %2056 = vrot.lane.b32.xlu0 %v1927, 96
    %v2057 = vpop.permute.xlu0 %2056
    %2058 = vrot.lane.b32.xlu0 %v1926, 96
    %v2059 = vpop.permute.xlu0 %2058
    %2060 = vrot.lane.b32.xlu0 %v1936, 96
    %v2061 = vpop.permute.xlu0 %2060
    %2062 = vrot.lane.b32.xlu0 %v1935, 96
    %v2063 = vpop.permute.xlu0 %2062
    %v2065 = vsel %vm972, %v2057, 0
    %v2068 = vsel %vm972, %v2059, 0
    %v2071 = vsel %vm972, %v2061, 0
    %v2074 = vsel %vm972, %v2063, 0
    %2076 = vmatpush.bf16.xpose.msra.mxu0 0
    %2077 = vmatpush.bf16.xpose.msra.mxu0 0
    %2078 = vmatpush.bf16.xpose.msra.mxu0 0
    %2079 = vmatpush.bf16.xpose.msra.mxu0 0
    %2080 = vmatpush.bf16.xpose.msra.mxu0 0
    %2081 = vmatpush.bf16.xpose.msra.mxu0 0
    %2082 = vmatpush.bf16.xpose.msra.mxu0 %v2074
    %2083 = vmatpush.bf16.xpose.msra.mxu0 %v2071
    %2084 = vmatmul.bf16.gmra.mxu0 %v2065
    %v2085 = vpop.f32.mrf.mxu0
    %v2086 = vadd.f32 %v953, %v2085
    %v2087 = vpop.f32.mrf.mxu0
    %v2088 = vadd.f32 %v954, %v2087
    %2089 = vmatmul.bf16.gmra.mxu0 %v2068
    %v2090 = vpop.f32.mrf.mxu0
    %v2091 = vadd.f32 %v955, %v2090
    %v2092 = vpop.f32.mrf.mxu0
    %2093 = vdwg.mxu0
    %v2094 = vsel %vm1003, %v2086, -inf
    %2095 = vmax.xlane.f32.xlu0 %v2094
    %v2096 = vpop.xlane.xlu0 %2095
    %v2097 = vsel %vm1003, %v2088, -inf
    %2098 = vmax.xlane.f32.xlu0 %v2097
    %v2099 = vpop.xlane.xlu0 %2098
    %v2100 = vsel %vm1010, %v2091, -inf
    %2101 = vmax.xlane.f32.xlu0 %v2100
    %v2102 = vpop.xlane.xlu0 %2101
    %v2103 = vsub.f32 %v2086, %v2096
    %v2104 = vsub.f32 %v2088, %v2099
    %v2105 = vsub.f32 %v2091, %v2102
    %v2106 = vmul.f32 %v2103, 1.442695
    %v2107 = vpow.pop %v2106
    %v2108 = vmul.f32 %v2104, 1.442695
    %v2109 = vpow.pop %v2108
    %v2110 = vmul.f32 %v2105, 1.442695
    %v2111 = vpow.pop %v2110
    %v2112 = vsel %vm1003, %v2107, 0.0
    %2113 = vadd.xlane.f32.xlu0 %v2112
    %v2114 = vpop.xlane.xlu0 %2113
    %v2115 = vsel %vm1003, %v2109, 0.0
    %2116 = vadd.xlane.f32.xlu0 %v2115
    %v2117 = vpop.xlane.xlu0 %2116
    %v2118 = vsel %vm1010, %v2111, 0.0
    %2119 = vadd.xlane.f32.xlu0 %v2118
    %v2120 = vpop.xlane.xlu0 %2119
    %v2121 = vrcp.pop %v2114
    %v2122 = vrcp.pop %v2117
    %v2123 = vrcp.pop %v2120
    %v2124 = vmul.f32 %v2107, %v2121
    %v2125 = vmul.f32 %v2109, %v2122
    %v2126 = vmul.f32 %v2111, %v2123
    %v2127 = vpack.c.bf16 %v2125, %v2124
    %v2128 = vpack.c.bf16 %v2126, %v2126
    %2129 = vrot.lane.b32.xlu0 %v2010, 96
    %v2130 = vpop.permute.xlu0 %2129
    %2131 = vrot.lane.b32.xlu0 %v2009, 96
    %v2132 = vpop.permute.xlu0 %2131
    %v2135 = vsel %vm1003, %v2127, 0
    %v2138 = vsel %vm1003, %v2128, 0
    %v2141 = vsel %vm1055, %v2132, 0
    %2143 = vmatpush.bf16.msra.mxu0 0
    %2144 = vmatpush.bf16.msra.mxu0 0
    %2145 = vmatpush.bf16.msra.mxu0 0
    %2146 = vmatpush.bf16.msra.mxu0 0
    %2147 = vmatpush.bf16.msra.mxu0 0
    %2148 = vmatpush.bf16.msra.mxu0 0
    %2149 = vmatpush.bf16.msra.mxu0 %v2141
    %2150 = vmatpush.bf16.msra.mxu0 %v2130
    %2151 = vmatmul.bf16.gmra.mxu0 %v2135
    %v2152 = vpop.f32.mrf.mxu0
    %v2153 = vadd.f32 0.0, %v2152
    %v2154 = vpop.f32.mrf.mxu0
    %v2155 = vadd.f32 0.0, %v2154
    %2156 = vmatmul.bf16.gmra.mxu0 %v2138
    %v2157 = vpop.f32.mrf.mxu0
    %v2158 = vadd.f32 0.0, %v2157
    %v2159 = vpop.f32.mrf.mxu0
    %2160 = vdwg.mxu0
    %v2164 = vrot.slane %v2153, 6
    %v2165 = vrot.slane %v2155, 6
    %v2166 = vsel %vm2042, %v2164, %v2165
    %v2167 = vrot.slane %v2158, 6
    %v2168 = vsel %vm2042, %v2165, %v2167
    %2169 = vrot.lane.b32.xlu0 %v2164, 32
    %v2170 = vpop.permute.xlu0 %2169
    %2171 = vrot.lane.b32.xlu0 %v2166, 32
    %v2172 = vpop.permute.xlu0 %2171
    %2173 = vrot.lane.b32.xlu0 %v2168, 32
    %v2174 = vpop.permute.xlu0 %2173
    %vm2178 = vcmask 523522
    %2179 = vst.msk [vmem:[#allocation7 + $0x20] sm:$0xfc] %vm2178, %v2170
    %2180 = vst.msk [vmem:[#allocation7 + $0x30] sm:$0xff] %vm1198, %v2172
    %vm2181 = vcmask 519424
    %2182 = vst.msk [vmem:[#allocation7 + $0x40] sm:$0xf] %vm2181, %v2174
    %2183 = vrot.lane.b32.xlu0 %v1927, 64
    %v2184 = vpop.permute.xlu0 %2183
    %2185 = vrot.lane.b32.xlu0 %v1926, 64
    %v2186 = vpop.permute.xlu0 %2185
    %2187 = vrot.lane.b32.xlu0 %v1936, 64
    %v2188 = vpop.permute.xlu0 %2187
    %2189 = vrot.lane.b32.xlu0 %v1935, 64
    %v2190 = vpop.permute.xlu0 %2189
    %v2192 = vsel %vm972, %v2184, 0
    %v2195 = vsel %vm972, %v2186, 0
    %v2198 = vsel %vm972, %v2188, 0
    %v2201 = vsel %vm972, %v2190, 0
    %2203 = vmatpush.bf16.xpose.msra.mxu0 0
    %2204 = vmatpush.bf16.xpose.msra.mxu0 0
    %2205 = vmatpush.bf16.xpose.msra.mxu0 0
    %2206 = vmatpush.bf16.xpose.msra.mxu0 0
    %2207 = vmatpush.bf16.xpose.msra.mxu0 0
    %2208 = vmatpush.bf16.xpose.msra.mxu0 0
    %2209 = vmatpush.bf16.xpose.msra.mxu0 %v2201
    %2210 = vmatpush.bf16.xpose.msra.mxu0 %v2198
    %2211 = vmatmul.bf16.gmra.mxu0 %v2192
    %v2212 = vpop.f32.mrf.mxu0
    %v2213 = vadd.f32 %v953, %v2212
    %v2214 = vpop.f32.mrf.mxu0
    %v2215 = vadd.f32 %v954, %v2214
    %2216 = vmatmul.bf16.gmra.mxu0 %v2195
    %v2217 = vpop.f32.mrf.mxu0
    %v2218 = vadd.f32 %v955, %v2217
    %v2219 = vpop.f32.mrf.mxu0
    %2220 = vdwg.mxu0
    %v2221 = vsel %vm1003, %v2213, -inf
    %2222 = vmax.xlane.f32.xlu0 %v2221
    %v2223 = vpop.xlane.xlu0 %2222
    %v2224 = vsel %vm1003, %v2215, -inf
    %2225 = vmax.xlane.f32.xlu0 %v2224
    %v2226 = vpop.xlane.xlu0 %2225
    %v2227 = vsel %vm1010, %v2218, -inf
    %2228 = vmax.xlane.f32.xlu0 %v2227
    %v2229 = vpop.xlane.xlu0 %2228
    %v2230 = vsub.f32 %v2213, %v2223
    %v2231 = vsub.f32 %v2215, %v2226
    %v2232 = vsub.f32 %v2218, %v2229
    %v2233 = vmul.f32 %v2230, 1.442695
    %v2234 = vpow.pop %v2233
    %v2235 = vmul.f32 %v2231, 1.442695
    %v2236 = vpow.pop %v2235
    %v2237 = vmul.f32 %v2232, 1.442695
    %v2238 = vpow.pop %v2237
    %v2239 = vsel %vm1003, %v2234, 0.0
    %2240 = vadd.xlane.f32.xlu0 %v2239
    %v2241 = vpop.xlane.xlu0 %2240
    %v2242 = vsel %vm1003, %v2236, 0.0
    %2243 = vadd.xlane.f32.xlu0 %v2242
    %v2244 = vpop.xlane.xlu0 %2243
    %v2245 = vsel %vm1010, %v2238, 0.0
    %2246 = vadd.xlane.f32.xlu0 %v2245
    %v2247 = vpop.xlane.xlu0 %2246
    %v2248 = vrcp.pop %v2241
    %v2249 = vrcp.pop %v2244
    %v2250 = vrcp.pop %v2247
    %v2251 = vmul.f32 %v2234, %v2248
    %v2252 = vmul.f32 %v2236, %v2249
    %v2253 = vmul.f32 %v2238, %v2250
    %v2254 = vpack.c.bf16 %v2252, %v2251
    %v2255 = vpack.c.bf16 %v2253, %v2253
    %2256 = vrot.lane.b32.xlu0 %v2010, 64
    %v2257 = vpop.permute.xlu0 %2256
    %2258 = vrot.lane.b32.xlu0 %v2009, 64
    %v2259 = vpop.permute.xlu0 %2258
    %v2262 = vsel %vm1003, %v2254, 0
    %v2265 = vsel %vm1003, %v2255, 0
    %v2268 = vsel %vm1055, %v2259, 0
    %2270 = vmatpush.bf16.msra.mxu0 0
    %2271 = vmatpush.bf16.msra.mxu0 0
    %2272 = vmatpush.bf16.msra.mxu0 0
    %2273 = vmatpush.bf16.msra.mxu0 0
    %2274 = vmatpush.bf16.msra.mxu0 0
    %2275 = vmatpush.bf16.msra.mxu0 0
    %2276 = vmatpush.bf16.msra.mxu0 %v2268
    %2277 = vmatpush.bf16.msra.mxu0 %v2257
    %2278 = vmatmul.bf16.gmra.mxu0 %v2262
    %v2279 = vpop.f32.mrf.mxu0
    %v2280 = vadd.f32 0.0, %v2279
    %v2281 = vpop.f32.mrf.mxu0
    %v2282 = vadd.f32 0.0, %v2281
    %2283 = vmatmul.bf16.gmra.mxu0 %v2265
    %v2284 = vpop.f32.mrf.mxu0
    %v2285 = vadd.f32 0.0, %v2284
    %v2286 = vpop.f32.mrf.mxu0
    %2287 = vdwg.mxu0
    %v2291 = vrot.slane %v2280, 6
    %v2292 = vrot.slane %v2282, 6
    %v2293 = vsel %vm2042, %v2291, %v2292
    %v2294 = vrot.slane %v2285, 6
    %v2295 = vsel %vm2042, %v2292, %v2294
    %2296 = vrot.lane.b32.xlu0 %v2291, 64
    %v2297 = vpop.permute.xlu0 %2296
    %2298 = vrot.lane.b32.xlu0 %v2293, 64
    %v2299 = vpop.permute.xlu0 %2298
    %2300 = vrot.lane.b32.xlu0 %v2295, 64
    %v2301 = vpop.permute.xlu0 %2300
    %vm2305 = vcmask 785922
    %2306 = vst.msk [vmem:[#allocation7 + $0x20] sm:$0xfc] %vm2305, %v2297
    %2307 = vst.msk [vmem:[#allocation7 + $0x30] sm:$0xff] %vm1320, %v2299
    %vm2308 = vcmask 781824
    %2309 = vst.msk [vmem:[#allocation7 + $0x40] sm:$0xf] %vm2308, %v2301
    %2310 = vrot.lane.b32.xlu0 %v1927, 32
    %v2311 = vpop.permute.xlu0 %2310
    %2312 = vrot.lane.b32.xlu0 %v1926, 32
    %v2313 = vpop.permute.xlu0 %2312
    %2314 = vrot.lane.b32.xlu0 %v1936, 32
    %v2315 = vpop.permute.xlu0 %2314
    %2316 = vrot.lane.b32.xlu0 %v1935, 32
    %v2317 = vpop.permute.xlu0 %2316
    %v2319 = vsel %vm972, %v2311, 0
    %v2322 = vsel %vm972, %v2313, 0
    %v2325 = vsel %vm972, %v2315, 0
    %v2328 = vsel %vm972, %v2317, 0
    %2330 = vmatpush.bf16.xpose.msra.mxu0 0
    %2331 = vmatpush.bf16.xpose.msra.mxu0 0
    %2332 = vmatpush.bf16.xpose.msra.mxu0 0
    %2333 = vmatpush.bf16.xpose.msra.mxu0 0
    %2334 = vmatpush.bf16.xpose.msra.mxu0 0
    %2335 = vmatpush.bf16.xpose.msra.mxu0 0
    %2336 = vmatpush.bf16.xpose.msra.mxu0 %v2328
    %2337 = vmatpush.bf16.xpose.msra.mxu0 %v2325
    %2338 = vmatmul.bf16.gmra.mxu0 %v2319
    %v2339 = vpop.f32.mrf.mxu0
    %v2340 = vadd.f32 %v953, %v2339
    %v2341 = vpop.f32.mrf.mxu0
    %v2342 = vadd.f32 %v954, %v2341
    %2343 = vmatmul.bf16.gmra.mxu0 %v2322
    %v2344 = vpop.f32.mrf.mxu0
    %v2345 = vadd.f32 %v955, %v2344
    %v2346 = vpop.f32.mrf.mxu0
    %2347 = vdwg.mxu0
    %v2348 = vsel %vm1003, %v2340, -inf
    %2349 = vmax.xlane.f32.xlu0 %v2348
    %v2350 = vpop.xlane.xlu0 %2349
    %v2351 = vsel %vm1003, %v2342, -inf
    %2352 = vmax.xlane.f32.xlu0 %v2351
    %v2353 = vpop.xlane.xlu0 %2352
    %v2354 = vsel %vm1010, %v2345, -inf
    %2355 = vmax.xlane.f32.xlu0 %v2354
    %v2356 = vpop.xlane.xlu0 %2355
    %v2357 = vsub.f32 %v2340, %v2350
    %v2358 = vsub.f32 %v2342, %v2353
    %v2359 = vsub.f32 %v2345, %v2356
    %v2360 = vmul.f32 %v2357, 1.442695
    %v2361 = vpow.pop %v2360
    %v2362 = vmul.f32 %v2358, 1.442695
    %v2363 = vpow.pop %v2362
    %v2364 = vmul.f32 %v2359, 1.442695
    %v2365 = vpow.pop %v2364
    %v2366 = vsel %vm1003, %v2361, 0.0
    %2367 = vadd.xlane.f32.xlu0 %v2366
    %v2368 = vpop.xlane.xlu0 %2367
    %v2369 = vsel %vm1003, %v2363, 0.0
    %2370 = vadd.xlane.f32.xlu0 %v2369
    %v2371 = vpop.xlane.xlu0 %2370
    %v2372 = vsel %vm1010, %v2365, 0.0
    %2373 = vadd.xlane.f32.xlu0 %v2372
    %v2374 = vpop.xlane.xlu0 %2373
    %v2375 = vrcp.pop %v2368
    %v2376 = vrcp.pop %v2371
    %v2377 = vrcp.pop %v2374
    %v2378 = vmul.f32 %v2361, %v2375
    %v2379 = vmul.f32 %v2363, %v2376
    %v2380 = vmul.f32 %v2365, %v2377
    %v2381 = vpack.c.bf16 %v2379, %v2378
    %v2382 = vpack.c.bf16 %v2380, %v2380
    %2383 = vrot.lane.b32.xlu0 %v2010, 32
    %v2384 = vpop.permute.xlu0 %2383
    %2385 = vrot.lane.b32.xlu0 %v2009, 32
    %v2386 = vpop.permute.xlu0 %2385
    %v2389 = vsel %vm1003, %v2381, 0
    %v2392 = vsel %vm1003, %v2382, 0
    %v2395 = vsel %vm1055, %v2386, 0
    %2397 = vmatpush.bf16.msra.mxu0 0
    %2398 = vmatpush.bf16.msra.mxu0 0
    %2399 = vmatpush.bf16.msra.mxu0 0
    %2400 = vmatpush.bf16.msra.mxu0 0
    %2401 = vmatpush.bf16.msra.mxu0 0
    %2402 = vmatpush.bf16.msra.mxu0 0
    %2403 = vmatpush.bf16.msra.mxu0 %v2395
    %2404 = vmatpush.bf16.msra.mxu0 %v2384
    %2405 = vmatmul.bf16.gmra.mxu0 %v2389
    %v2406 = vpop.f32.mrf.mxu0
    %v2407 = vadd.f32 0.0, %v2406
    %v2408 = vpop.f32.mrf.mxu0
    %v2409 = vadd.f32 0.0, %v2408
    %2410 = vmatmul.bf16.gmra.mxu0 %v2392
    %v2411 = vpop.f32.mrf.mxu0
    %v2412 = vadd.f32 0.0, %v2411
    %v2413 = vpop.f32.mrf.mxu0
    %2414 = vdwg.mxu0
    %v2418 = vrot.slane %v2407, 6
    %v2419 = vrot.slane %v2409, 6
    %v2420 = vsel %vm2042, %v2418, %v2419
    %v2421 = vrot.slane %v2412, 6
    %v2422 = vsel %vm2042, %v2419, %v2421
    %2423 = vrot.lane.b32.xlu0 %v2418, 96
    %v2424 = vpop.permute.xlu0 %2423
    %2425 = vrot.lane.b32.xlu0 %v2420, 96
    %v2426 = vpop.permute.xlu0 %2425
    %2427 = vrot.lane.b32.xlu0 %v2422, 96
    %v2428 = vpop.permute.xlu0 %2427
    %vm2432 = vcmask 1048322
    %2433 = vst.msk [vmem:[#allocation7 + $0x20] sm:$0xfc] %vm2432, %v2424
    %2434 = vst.msk [vmem:[#allocation7 + $0x30] sm:$0xff] %vm1442, %v2426
    %vm2435 = vcmask 1044224
    %2436 = vst.msk [vmem:[#allocation7 + $0x40] sm:$0xf] %vm2435, %v2428
    %v2437 = vunpack.c.h.b16 %v938
    %v2438 = vunpack.c.h.b16 %v941
    %v2439 = vpack.c.b16 %v2437, %v1449
    %v2440 = vpack.c.b16 %v2438, %v2438
    %v2441 = vrot.slane %v2439, 1
    %v2442 = vrot.slane %v2440, 1
    %v2443 = vsel %vm1924, %v2441, %v2442
    %v2444 = vunpack.c.h.b16 %v939
    %v2445 = vunpack.c.h.b16 %v942
    %v2446 = vpack.c.b16 %v2444, %v1454
    %v2447 = vpack.c.b16 %v2445, %v2445
    %v2448 = vrot.slane %v2446, 1
    %v2449 = vrot.slane %v2447, 1
    %v2450 = vsel %vm1924, %v2448, %v2449
    %v2452 = vsel %vm972, %v2443, 0
    %v2455 = vsel %vm972, %v2442, 0
    %v2458 = vsel %vm972, %v2450, 0
    %v2461 = vsel %vm972, %v2449, 0
    %2463 = vmatpush.bf16.xpose.msra.mxu0 0
    %2464 = vmatpush.bf16.xpose.msra.mxu0 0
    %2465 = vmatpush.bf16.xpose.msra.mxu0 0
    %2466 = vmatpush.bf16.xpose.msra.mxu0 0
    %2467 = vmatpush.bf16.xpose.msra.mxu0 0
    %2468 = vmatpush.bf16.xpose.msra.mxu0 0
    %2469 = vmatpush.bf16.xpose.msra.mxu0 %v2461
    %2470 = vmatpush.bf16.xpose.msra.mxu0 %v2458
    %2471 = vmatmul.bf16.gmra.mxu0 %v2452
    %v2472 = vpop.f32.mrf.mxu0
    %v2473 = vadd.f32 %v953, %v2472
    %v2474 = vpop.f32.mrf.mxu0
    %v2475 = vadd.f32 %v954, %v2474
    %2476 = vmatmul.bf16.gmra.mxu0 %v2455
    %v2477 = vpop.f32.mrf.mxu0
    %v2478 = vadd.f32 %v955, %v2477
    %v2479 = vpop.f32.mrf.mxu0
    %2480 = vdwg.mxu0
    %v2481 = vsel %vm1003, %v2473, -inf
    %2482 = vmax.xlane.f32.xlu0 %v2481
    %v2483 = vpop.xlane.xlu0 %2482
    %v2484 = vsel %vm1003, %v2475, -inf
    %2485 = vmax.xlane.f32.xlu0 %v2484
    %v2486 = vpop.xlane.xlu0 %2485
    %v2487 = vsel %vm1010, %v2478, -inf
    %2488 = vmax.xlane.f32.xlu0 %v2487
    %v2489 = vpop.xlane.xlu0 %2488
    %v2490 = vsub.f32 %v2473, %v2483
    %v2491 = vsub.f32 %v2475, %v2486
    %v2492 = vsub.f32 %v2478, %v2489
    %v2493 = vmul.f32 %v2490, 1.442695
    %v2494 = vpow.pop %v2493
    %v2495 = vmul.f32 %v2491, 1.442695
    %v2496 = vpow.pop %v2495
    %v2497 = vmul.f32 %v2492, 1.442695
    %v2498 = vpow.pop %v2497
    %v2499 = vsel %vm1003, %v2494, 0.0
    %2500 = vadd.xlane.f32.xlu0 %v2499
    %v2501 = vpop.xlane.xlu0 %2500
    %v2502 = vsel %vm1003, %v2496, 0.0
    %2503 = vadd.xlane.f32.xlu0 %v2502
    %v2504 = vpop.xlane.xlu0 %2503
    %v2505 = vsel %vm1010, %v2498, 0.0
    %2506 = vadd.xlane.f32.xlu0 %v2505
    %v2507 = vpop.xlane.xlu0 %2506
    %v2508 = vrcp.pop %v2501
    %v2509 = vrcp.pop %v2504
    %v2510 = vrcp.pop %v2507
    %v2511 = vmul.f32 %v2494, %v2508
    %v2512 = vmul.f32 %v2496, %v2509
    %v2513 = vmul.f32 %v2498, %v2510
    %v2514 = vpack.c.bf16 %v2512, %v2511
    %v2515 = vpack.c.bf16 %v2513, %v2513
    %v2516 = vunpack.c.h.b16 %v940
    %v2517 = vunpack.c.h.b16 %v943
    %v2518 = vpack.c.b16 %v2516, %v1524
    %v2519 = vpack.c.b16 %v2517, %v2517
    %v2520 = vrot.slane %v2518, 1
    %v2521 = vrot.slane %v2519, 1
    %v2522 = vsel %vm1924, %v2520, %v2521
    %v2525 = vsel %vm1003, %v2514, 0
    %v2528 = vsel %vm1003, %v2515, 0
    %v2531 = vsel %vm1055, %v2521, 0
    %2533 = vmatpush.bf16.msra.mxu0 0
    %2534 = vmatpush.bf16.msra.mxu0 0
    %2535 = vmatpush.bf16.msra.mxu0 0
    %2536 = vmatpush.bf16.msra.mxu0 0
    %2537 = vmatpush.bf16.msra.mxu0 0
    %2538 = vmatpush.bf16.msra.mxu0 0
    %2539 = vmatpush.bf16.msra.mxu0 %v2531
    %2540 = vmatpush.bf16.msra.mxu0 %v2522
    %2541 = vmatmul.bf16.gmra.mxu0 %v2525
    %v2542 = vpop.f32.mrf.mxu0
    %v2543 = vadd.f32 0.0, %v2542
    %v2544 = vpop.f32.mrf.mxu0
    %v2545 = vadd.f32 0.0, %v2544
    %2546 = vmatmul.bf16.gmra.mxu0 %v2528
    %v2547 = vpop.f32.mrf.mxu0
    %v2548 = vadd.f32 0.0, %v2547
    %v2549 = vpop.f32.mrf.mxu0
    %2550 = vdwg.mxu0
    %v2554 = vrot.slane %v2543, 6
    %v2555 = vrot.slane %v2545, 6
    %v2556 = vsel %vm2042, %v2554, %v2555
    %v2557 = vrot.slane %v2548, 6
    %v2558 = vsel %vm2042, %v2555, %v2557
    %2562 = vst.msk [vmem:[#allocation7 + $0x28] sm:$0xfc] %vm2051, %v2554
    %2563 = vst.msk [vmem:[#allocation7 + $0x38] sm:$0xff] %vm972, %v2556
    %2564 = vst.msk [vmem:[#allocation7 + $0x48] sm:$0xf] %vm2054, %v2558
    %2565 = vrot.lane.b32.xlu0 %v2443, 96
    %v2566 = vpop.permute.xlu0 %2565
    %2567 = vrot.lane.b32.xlu0 %v2442, 96
    %v2568 = vpop.permute.xlu0 %2567
    %2569 = vrot.lane.b32.xlu0 %v2450, 96
    %v2570 = vpop.permute.xlu0 %2569
    %2571 = vrot.lane.b32.xlu0 %v2449, 96
    %v2572 = vpop.permute.xlu0 %2571
    %v2574 = vsel %vm972, %v2566, 0
    %v2577 = vsel %vm972, %v2568, 0
    %v2580 = vsel %vm972, %v2570, 0
    %v2583 = vsel %vm972, %v2572, 0
    %2585 = vmatpush.bf16.xpose.msra.mxu0 0
    %2586 = vmatpush.bf16.xpose.msra.mxu0 0
    %2587 = vmatpush.bf16.xpose.msra.mxu0 0
    %2588 = vmatpush.bf16.xpose.msra.mxu0 0
    %2589 = vmatpush.bf16.xpose.msra.mxu0 0
    %2590 = vmatpush.bf16.xpose.msra.mxu0 0
    %2591 = vmatpush.bf16.xpose.msra.mxu0 %v2583
    %2592 = vmatpush.bf16.xpose.msra.mxu0 %v2580
    %2593 = vmatmul.bf16.gmra.mxu0 %v2574
    %v2594 = vpop.f32.mrf.mxu0
    %v2595 = vadd.f32 %v953, %v2594
    %v2596 = vpop.f32.mrf.mxu0
    %v2597 = vadd.f32 %v954, %v2596
    %2598 = vmatmul.bf16.gmra.mxu0 %v2577
    %v2599 = vpop.f32.mrf.mxu0
    %v2600 = vadd.f32 %v955, %v2599
    %v2601 = vpop.f32.mrf.mxu0
    %2602 = vdwg.mxu0
    %v2603 = vsel %vm1003, %v2595, -inf
    %2604 = vmax.xlane.f32.xlu0 %v2603
    %v2605 = vpop.xlane.xlu0 %2604
    %v2606 = vsel %vm1003, %v2597, -inf
    %2607 = vmax.xlane.f32.xlu0 %v2606
    %v2608 = vpop.xlane.xlu0 %2607
    %v2609 = vsel %vm1010, %v2600, -inf
    %2610 = vmax.xlane.f32.xlu0 %v2609
    %v2611 = vpop.xlane.xlu0 %2610
    %v2612 = vsub.f32 %v2595, %v2605
    %v2613 = vsub.f32 %v2597, %v2608
    %v2614 = vsub.f32 %v2600, %v2611
    %v2615 = vmul.f32 %v2612, 1.442695
    %v2616 = vpow.pop %v2615
    %v2617 = vmul.f32 %v2613, 1.442695
    %v2618 = vpow.pop %v2617
    %v2619 = vmul.f32 %v2614, 1.442695
    %v2620 = vpow.pop %v2619
    %v2621 = vsel %vm1003, %v2616, 0.0
    %2622 = vadd.xlane.f32.xlu0 %v2621
    %v2623 = vpop.xlane.xlu0 %2622
    %v2624 = vsel %vm1003, %v2618, 0.0
    %2625 = vadd.xlane.f32.xlu0 %v2624
    %v2626 = vpop.xlane.xlu0 %2625
    %v2627 = vsel %vm1010, %v2620, 0.0
    %2628 = vadd.xlane.f32.xlu0 %v2627
    %v2629 = vpop.xlane.xlu0 %2628
    %v2630 = vrcp.pop %v2623
    %v2631 = vrcp.pop %v2626
    %v2632 = vrcp.pop %v2629
    %v2633 = vmul.f32 %v2616, %v2630
    %v2634 = vmul.f32 %v2618, %v2631
    %v2635 = vmul.f32 %v2620, %v2632
    %v2636 = vpack.c.bf16 %v2634, %v2633
    %v2637 = vpack.c.bf16 %v2635, %v2635
    %2638 = vrot.lane.b32.xlu0 %v2522, 96
    %v2639 = vpop.permute.xlu0 %2638
    %2640 = vrot.lane.b32.xlu0 %v2521, 96
    %v2641 = vpop.permute.xlu0 %2640
    %v2644 = vsel %vm1003, %v2636, 0
    %v2647 = vsel %vm1003, %v2637, 0
    %v2650 = vsel %vm1055, %v2641, 0
    %2652 = vmatpush.bf16.msra.mxu0 0
    %2653 = vmatpush.bf16.msra.mxu0 0
    %2654 = vmatpush.bf16.msra.mxu0 0
    %2655 = vmatpush.bf16.msra.mxu0 0
    %2656 = vmatpush.bf16.msra.mxu0 0
    %2657 = vmatpush.bf16.msra.mxu0 0
    %2658 = vmatpush.bf16.msra.mxu0 %v2650
    %2659 = vmatpush.bf16.msra.mxu0 %v2639
    %2660 = vmatmul.bf16.gmra.mxu0 %v2644
    %v2661 = vpop.f32.mrf.mxu0
    %v2662 = vadd.f32 0.0, %v2661
    %v2663 = vpop.f32.mrf.mxu0
    %v2664 = vadd.f32 0.0, %v2663
    %2665 = vmatmul.bf16.gmra.mxu0 %v2647
    %v2666 = vpop.f32.mrf.mxu0
    %v2667 = vadd.f32 0.0, %v2666
    %v2668 = vpop.f32.mrf.mxu0
    %2669 = vdwg.mxu0
    %v2673 = vrot.slane %v2662, 6
    %v2674 = vrot.slane %v2664, 6
    %v2675 = vsel %vm2042, %v2673, %v2674
    %v2676 = vrot.slane %v2667, 6
    %v2677 = vsel %vm2042, %v2674, %v2676
    %2678 = vrot.lane.b32.xlu0 %v2673, 32
    %v2679 = vpop.permute.xlu0 %2678
    %2680 = vrot.lane.b32.xlu0 %v2675, 32
    %v2681 = vpop.permute.xlu0 %2680
    %2682 = vrot.lane.b32.xlu0 %v2677, 32
    %v2683 = vpop.permute.xlu0 %2682
    %2687 = vst.msk [vmem:[#allocation7 + $0x28] sm:$0xfc] %vm2178, %v2679
    %2688 = vst.msk [vmem:[#allocation7 + $0x38] sm:$0xff] %vm1198, %v2681
    %2689 = vst.msk [vmem:[#allocation7 + $0x48] sm:$0xf] %vm2181, %v2683
    %2690 = vrot.lane.b32.xlu0 %v2443, 64
    %v2691 = vpop.permute.xlu0 %2690
    %2692 = vrot.lane.b32.xlu0 %v2442, 64
    %v2693 = vpop.permute.xlu0 %2692
    %2694 = vrot.lane.b32.xlu0 %v2450, 64
    %v2695 = vpop.permute.xlu0 %2694
    %2696 = vrot.lane.b32.xlu0 %v2449, 64
    %v2697 = vpop.permute.xlu0 %2696
    %v2699 = vsel %vm972, %v2691, 0
    %v2702 = vsel %vm972, %v2693, 0
    %v2705 = vsel %vm972, %v2695, 0
    %v2708 = vsel %vm972, %v2697, 0
    %2710 = vmatpush.bf16.xpose.msra.mxu0 0
    %2711 = vmatpush.bf16.xpose.msra.mxu0 0
    %2712 = vmatpush.bf16.xpose.msra.mxu0 0
    %2713 = vmatpush.bf16.xpose.msra.mxu0 0
    %2714 = vmatpush.bf16.xpose.msra.mxu0 0
    %2715 = vmatpush.bf16.xpose.msra.mxu0 0
    %2716 = vmatpush.bf16.xpose.msra.mxu0 %v2708
    %2717 = vmatpush.bf16.xpose.msra.mxu0 %v2705
    %2718 = vmatmul.bf16.gmra.mxu0 %v2699
    %v2719 = vpop.f32.mrf.mxu0
    %v2720 = vadd.f32 %v953, %v2719
    %v2721 = vpop.f32.mrf.mxu0
    %v2722 = vadd.f32 %v954, %v2721
    %2723 = vmatmul.bf16.gmra.mxu0 %v2702
    %v2724 = vpop.f32.mrf.mxu0
    %v2725 = vadd.f32 %v955, %v2724
    %v2726 = vpop.f32.mrf.mxu0
    %2727 = vdwg.mxu0
    %v2728 = vsel %vm1003, %v2720, -inf
    %2729 = vmax.xlane.f32.xlu0 %v2728
    %v2730 = vpop.xlane.xlu0 %2729
    %v2731 = vsel %vm1003, %v2722, -inf
    %2732 = vmax.xlane.f32.xlu0 %v2731
    %v2733 = vpop.xlane.xlu0 %2732
    %v2734 = vsel %vm1010, %v2725, -inf
    %2735 = vmax.xlane.f32.xlu0 %v2734
    %v2736 = vpop.xlane.xlu0 %2735
    %v2737 = vsub.f32 %v2720, %v2730
    %v2738 = vsub.f32 %v2722, %v2733
    %v2739 = vsub.f32 %v2725, %v2736
    %v2740 = vmul.f32 %v2737, 1.442695
    %v2741 = vpow.pop %v2740
    %v2742 = vmul.f32 %v2738, 1.442695
    %v2743 = vpow.pop %v2742
    %v2744 = vmul.f32 %v2739, 1.442695
    %v2745 = vpow.pop %v2744
    %v2746 = vsel %vm1003, %v2741, 0.0
    %2747 = vadd.xlane.f32.xlu0 %v2746
    %v2748 = vpop.xlane.xlu0 %2747
    %v2749 = vsel %vm1003, %v2743, 0.0
    %2750 = vadd.xlane.f32.xlu0 %v2749
    %v2751 = vpop.xlane.xlu0 %2750
    %v2752 = vsel %vm1010, %v2745, 0.0
    %2753 = vadd.xlane.f32.xlu0 %v2752
    %v2754 = vpop.xlane.xlu0 %2753
    %v2755 = vrcp.pop %v2748
    %v2756 = vrcp.pop %v2751
    %v2757 = vrcp.pop %v2754
    %v2758 = vmul.f32 %v2741, %v2755
    %v2759 = vmul.f32 %v2743, %v2756
    %v2760 = vmul.f32 %v2745, %v2757
    %v2761 = vpack.c.bf16 %v2759, %v2758
    %v2762 = vpack.c.bf16 %v2760, %v2760
    %2763 = vrot.lane.b32.xlu0 %v2522, 64
    %v2764 = vpop.permute.xlu0 %2763
    %2765 = vrot.lane.b32.xlu0 %v2521, 64
    %v2766 = vpop.permute.xlu0 %2765
    %v2769 = vsel %vm1003, %v2761, 0
    %v2772 = vsel %vm1003, %v2762, 0
    %v2775 = vsel %vm1055, %v2766, 0
    %2777 = vmatpush.bf16.msra.mxu0 0
    %2778 = vmatpush.bf16.msra.mxu0 0
    %2779 = vmatpush.bf16.msra.mxu0 0
    %2780 = vmatpush.bf16.msra.mxu0 0
    %2781 = vmatpush.bf16.msra.mxu0 0
    %2782 = vmatpush.bf16.msra.mxu0 0
    %2783 = vmatpush.bf16.msra.mxu0 %v2775
    %2784 = vmatpush.bf16.msra.mxu0 %v2764
    %2785 = vmatmul.bf16.gmra.mxu0 %v2769
    %v2786 = vpop.f32.mrf.mxu0
    %v2787 = vadd.f32 0.0, %v2786
    %v2788 = vpop.f32.mrf.mxu0
    %v2789 = vadd.f32 0.0, %v2788
    %2790 = vmatmul.bf16.gmra.mxu0 %v2772
    %v2791 = vpop.f32.mrf.mxu0
    %v2792 = vadd.f32 0.0, %v2791
    %v2793 = vpop.f32.mrf.mxu0
    %2794 = vdwg.mxu0
    %v2798 = vrot.slane %v2787, 6
    %v2799 = vrot.slane %v2789, 6
    %v2800 = vsel %vm2042, %v2798, %v2799
    %v2801 = vrot.slane %v2792, 6
    %v2802 = vsel %vm2042, %v2799, %v2801
    %2803 = vrot.lane.b32.xlu0 %v2798, 64
    %v2804 = vpop.permute.xlu0 %2803
    %2805 = vrot.lane.b32.xlu0 %v2800, 64
    %v2806 = vpop.permute.xlu0 %2805
    %2807 = vrot.lane.b32.xlu0 %v2802, 64
    %v2808 = vpop.permute.xlu0 %2807
    %2812 = vst.msk [vmem:[#allocation7 + $0x28] sm:$0xfc] %vm2305, %v2804
    %2813 = vst.msk [vmem:[#allocation7 + $0x38] sm:$0xff] %vm1320, %v2806
    %2814 = vst.msk [vmem:[#allocation7 + $0x48] sm:$0xf] %vm2308, %v2808
    %2815 = vrot.lane.b32.xlu0 %v2443, 32
    %v2816 = vpop.permute.xlu0 %2815
    %2817 = vrot.lane.b32.xlu0 %v2442, 32
    %v2818 = vpop.permute.xlu0 %2817
    %2819 = vrot.lane.b32.xlu0 %v2450, 32
    %v2820 = vpop.permute.xlu0 %2819
    %2821 = vrot.lane.b32.xlu0 %v2449, 32
    %v2822 = vpop.permute.xlu0 %2821
    %v2824 = vsel %vm972, %v2816, 0
    %v2827 = vsel %vm972, %v2818, 0
    %v2830 = vsel %vm972, %v2820, 0
    %v2833 = vsel %vm972, %v2822, 0
    %2835 = vmatpush.bf16.xpose.msra.mxu0 0
    %2836 = vmatpush.bf16.xpose.msra.mxu0 0
    %2837 = vmatpush.bf16.xpose.msra.mxu0 0
    %2838 = vmatpush.bf16.xpose.msra.mxu0 0
    %2839 = vmatpush.bf16.xpose.msra.mxu0 0
    %2840 = vmatpush.bf16.xpose.msra.mxu0 0
    %2841 = vmatpush.bf16.xpose.msra.mxu0 %v2833
    %2842 = vmatpush.bf16.xpose.msra.mxu0 %v2830
    %2843 = vmatmul.bf16.gmra.mxu0 %v2824
    %v2844 = vpop.f32.mrf.mxu0
    %v2845 = vadd.f32 %v953, %v2844
    %v2846 = vpop.f32.mrf.mxu0
    %v2847 = vadd.f32 %v954, %v2846
    %2848 = vmatmul.bf16.gmra.mxu0 %v2827
    %v2849 = vpop.f32.mrf.mxu0
    %v2850 = vadd.f32 %v955, %v2849
    %v2851 = vpop.f32.mrf.mxu0
    %2852 = vdwg.mxu0
    %v2853 = vsel %vm1003, %v2845, -inf
    %2854 = vmax.xlane.f32.xlu0 %v2853
    %v2855 = vpop.xlane.xlu0 %2854
    %v2856 = vsel %vm1003, %v2847, -inf
    %2857 = vmax.xlane.f32.xlu0 %v2856
    %v2858 = vpop.xlane.xlu0 %2857
    %v2859 = vsel %vm1010, %v2850, -inf
    %2860 = vmax.xlane.f32.xlu0 %v2859
    %v2861 = vpop.xlane.xlu0 %2860
    %v2862 = vsub.f32 %v2845, %v2855
    %v2863 = vsub.f32 %v2847, %v2858
    %v2864 = vsub.f32 %v2850, %v2861
    %v2865 = vmul.f32 %v2862, 1.442695
    %v2866 = vpow.pop %v2865
    %v2867 = vmul.f32 %v2863, 1.442695
    %v2868 = vpow.pop %v2867
    %v2869 = vmul.f32 %v2864, 1.442695
    %v2870 = vpow.pop %v2869
    %v2871 = vsel %vm1003, %v2866, 0.0
    %2872 = vadd.xlane.f32.xlu0 %v2871
    %v2873 = vpop.xlane.xlu0 %2872
    %v2874 = vsel %vm1003, %v2868, 0.0
    %2875 = vadd.xlane.f32.xlu0 %v2874
    %v2876 = vpop.xlane.xlu0 %2875
    %v2877 = vsel %vm1010, %v2870, 0.0
    %2878 = vadd.xlane.f32.xlu0 %v2877
    %v2879 = vpop.xlane.xlu0 %2878
    %v2880 = vrcp.pop %v2873
    %v2881 = vrcp.pop %v2876
    %v2882 = vrcp.pop %v2879
    %v2883 = vmul.f32 %v2866, %v2880
    %v2884 = vmul.f32 %v2868, %v2881
    %v2885 = vmul.f32 %v2870, %v2882
    %v2886 = vpack.c.bf16 %v2884, %v2883
    %v2887 = vpack.c.bf16 %v2885, %v2885
    %2888 = vrot.lane.b32.xlu0 %v2522, 32
    %v2889 = vpop.permute.xlu0 %2888
    %2890 = vrot.lane.b32.xlu0 %v2521, 32
    %v2891 = vpop.permute.xlu0 %2890
    %v2894 = vsel %vm1003, %v2886, 0
    %v2897 = vsel %vm1003, %v2887, 0
    %v2900 = vsel %vm1055, %v2891, 0
    %2902 = vmatpush.bf16.msra.mxu0 0
    %2903 = vmatpush.bf16.msra.mxu0 0
    %2904 = vmatpush.bf16.msra.mxu0 0
    %2905 = vmatpush.bf16.msra.mxu0 0
    %2906 = vmatpush.bf16.msra.mxu0 0
    %2907 = vmatpush.bf16.msra.mxu0 0
    %2908 = vmatpush.bf16.msra.mxu0 %v2900
    %2909 = vmatpush.bf16.msra.mxu0 %v2889
    %2910 = vmatmul.bf16.gmra.mxu0 %v2894
    %v2911 = vpop.f32.mrf.mxu0
    %v2912 = vadd.f32 0.0, %v2911
    %v2913 = vpop.f32.mrf.mxu0
    %v2914 = vadd.f32 0.0, %v2913
    %2915 = vmatmul.bf16.gmra.mxu0 %v2897
    %v2916 = vpop.f32.mrf.mxu0
    %v2917 = vadd.f32 0.0, %v2916
    %v2918 = vpop.f32.mrf.mxu0
    %2919 = vdwg.mxu0
    %v2923 = vrot.slane %v2912, 6
    %v2924 = vrot.slane %v2914, 6
    %v2925 = vsel %vm2042, %v2923, %v2924
    %v2926 = vrot.slane %v2917, 6
    %v2927 = vsel %vm2042, %v2924, %v2926
    %2928 = vrot.lane.b32.xlu0 %v2923, 96
    %v2929 = vpop.permute.xlu0 %2928
    %2930 = vrot.lane.b32.xlu0 %v2925, 96
    %v2931 = vpop.permute.xlu0 %2930
    %2932 = vrot.lane.b32.xlu0 %v2927, 96
    %v2933 = vpop.permute.xlu0 %2932
    %2937 = vst.msk [vmem:[#allocation7 + $0x28] sm:$0xfc] %vm2432, %v2929
    %2938 = vst.msk [vmem:[#allocation7 + $0x38] sm:$0xff] %vm1442, %v2931
    %2939 = vst.msk [vmem:[#allocation7 + $0x48] sm:$0xf] %vm2435, %v2933
    // Predicated region
    $region18: #{tpu_custom_call.1} parent=1 // pred_check
      _
    $region19: #{tpu_custom_call.1} parent=1 // pred_check_branch
      %2941 = sbr.rel (0) target = $region21
    $region20: #{tpu_custom_call.1} parent=1 // pred_region
      %2943 = vsyncadd [#allocation4], 0
      %s2944 = sshll.u32 [#allocation7], 4
      %s2945 = int_to_ptr.vmem [resolvable:$true] %s2944
      %s2946 = sshll.u32 %s2, 4
      %s2947 = int_to_ptr.hbm [resolvable:$true] %s2946
      %2952 = dma.vmem_to_hbm [thread:$0]  %s2945, 1280, %s2947, [#allocation4], 256, 256, 16
    $region21: #{tpu_custom_call.1} parent=1 // pred_fallthru
      _
    // Predicated region
    $region22: #{tpu_custom_call.1} parent=1 // pred_check
      _
    $region23: #{tpu_custom_call.1} parent=1 // pred_check_branch
      %2954 = sbr.rel (0) target = $region25
    $region24: #{tpu_custom_call.1} parent=1 // pred_region
      %2956 = dma.done [#allocation4], 1280
    $region25: #{tpu_custom_call.1} parent=1 // pred_fallthru
      _
    %2957 = vsyncpa [#allocation3], 1
    %2958 = vsyncpa [#allocation6], 1
    %2959 = vsyncpa [#allocation4], 1

</llo_original>
